<compile_context>
chip_gen: v7x
topology: tpu7x:2x2x1
jax: 0.10.0
libtpu: 0.0.40
codegen_flags: <defaults>
</compile_context>

<pallas_src>
import jax
import jax.numpy as jnp
from jax.experimental import pallas as pl
from jax.experimental.pallas import tpu as pltpu

N_PAD = 128      # padded node count per node type (sublane/lane & MXU friendly)
F_PAD = 128      # padded feature width (lane-dense: full 128-lane vregs)
NUM_LAYERS = 5


# ----------------------------- Fused Pallas kernel ----------------------------- #

def make_fused_gnn_kernel(node_types, edge_types, out_node_type):
    """Build the fused 5-layer forward kernel for a given hetero-graph metadata."""
    nt_idx = {nt: i for i, nt in enumerate(node_types)}
    by_dst = {}
    for ei, (src, _rel, dst) in enumerate(edge_types):
        by_dst.setdefault(dst, []).append((ei, src))

    def kernel(adj_ref, x_ref, wcat_ref, bias_ref, wlin_ref, blin_ref, out_ref):
        # Load padded node features & adjacencies once; everything stays on-chip.
        xs = [x_ref[i] for i in range(len(node_types))]        # each (N_PAD, F_PAD)
        adjs = [adj_ref[e] for e in range(len(edge_types))]    # each (N_PAD, N_PAD)

        for layer in range(NUM_LAYERS):
            new_xs = list(xs)
            for dst, incoming in by_dst.items():
                di = nt_idx[dst]
                acc = None
                for (ei, src) in incoming:
                    si = nt_idx[src]
                    # mean neighbor aggregation as a dense row-normalized matmul (MXU)
                    agg = jnp.dot(adjs[ei], xs[si],
                                  preferred_element_type=jnp.float32)
                    # fused lin_l/lin_r: single MXU matmul over [agg | x_dst]
                    cat = jnp.concatenate([agg, xs[di]], axis=-1)   # (N_PAD, 2*F_PAD)
                    y = jnp.dot(cat, wcat_ref[layer, ei],
                                preferred_element_type=jnp.float32)
                    y = y + bias_ref[layer, ei]                     # (1, F_PAD) bcast
                    acc = y if acc is None else acc + y
                y = acc * (1.0 / len(incoming))      # HeteroConv aggr='mean'
                if layer < NUM_LAYERS - 1:
                    y = jnp.maximum(y, 0.0)          # fused ReLU (VPU epilogue)
                # Dropout(p=0.5) is identity in eval-mode inference.
                new_xs[di] = y
            xs = new_xs

        # Final Linear(hidden, 1) on the output node type, written as a
        # lane-dense (128, 128) slab; real logits live in column 0.
        out_ref[...] = (
            jnp.dot(xs[nt_idx[out_node_type]], wlin_ref[...],
                    preferred_element_type=jnp.float32)
            + blin_ref[...]
        )

    return kernel


def gnn_forward_fused(adj_all, x_all, wcat_all, bias_all, w_lin_pad, b_lin_pad,
                      node_types, edge_types, n_out):
    kernel = make_fused_gnn_kernel(node_types, edge_types, 'transaction')
    vmem_spec = pl.BlockSpec(memory_space=pltpu.MemorySpace.VMEM)
    out = pl.pallas_call(
        kernel,
        out_shape=jax.ShapeDtypeStruct((N_PAD, F_PAD), jnp.float32),
        in_specs=[vmem_spec] * 6,
        out_specs=vmem_spec,
    )(adj_all, x_all, wcat_all, bias_all, w_lin_pad, b_lin_pad)
    return out[:n_out, 0]                      # logits for 'transaction' nodes


# --------------------------- Packing / graph setup ----------------------------- #

def pad_to(x, shape):
    out = jnp.zeros(shape, x.dtype)
    return out.at[tuple(slice(0, s) for s in x.shape)].set(x)


def dense_mean_adj(edge_index, n_src, n_dst):
    """Row-normalized dense adjacency adj[dst, src]; rows sum to 1 (or 0)."""
    # TODO(synk): the scatter from edge_index to a dense adjacency is plain JAX
    # glue (data-dependent scatter stays outside the Pallas hot path).
    src, dst = edge_index
    adj = jnp.zeros((n_dst, n_src), jnp.float32).at[dst, src].add(1.0)
    deg = adj.sum(axis=1, keepdims=True)
    return jnp.where(deg > 0, adj / jnp.maximum(deg, 1.0), 0.0)


def init_params(key, metadata, in_dims, hidden):
    node_types, edge_types = metadata
    conv_params = []
    cur_dims = dict(in_dims)
    for _layer in range(NUM_LAYERS):
        layer_p = {}
        for et in edge_types:
            src, _rel, dst = et
            key, ka, kb = jax.random.split(key, 3)
            f_src, f_dst = cur_dims[src], cur_dims[dst]
            w_l = jax.random.normal(ka, (f_src, hidden), jnp.float32) / jnp.sqrt(f_src)
            w_r = jax.random.normal(kb, (f_dst, hidden), jnp.float32) / jnp.sqrt(f_dst)
            b_l = jnp.zeros((hidden,), jnp.float32)
            layer_p[et] = (w_l, w_r, b_l)
        conv_params.append(layer_p)
        cur_dims = {nt: hidden for nt in node_types}
    key, kw = jax.random.split(key)
    w_lin = jax.random.normal(kw, (hidden, 1), jnp.float32) / jnp.sqrt(hidden)
    b_lin = jnp.zeros((1,), jnp.float32)
    return conv_params, (w_lin, b_lin)


def pack_operands(x_dict, adj_dict, conv_params, lin_params,
                  node_types, edge_types, hidden):
    """Zero-pad and stack all operands into the 6 VMEM-resident kernel inputs."""
    x_all = jnp.stack([pad_to(x_dict[nt], (N_PAD, F_PAD)) for nt in node_types])
    adj_all = jnp.stack([pad_to(adj_dict[et], (N_PAD, N_PAD)) for et in edge_types])

    wcat_layers, bias_layers = [], []
    for li in range(NUM_LAYERS):
        w_per_et, b_per_et = [], []
        for et in edge_types:
            w_l, w_r, b_l = conv_params[li][et]
            f_src, f_dst = w_l.shape[0], w_r.shape[0]
            wcat = jnp.zeros((2 * F_PAD, F_PAD), jnp.float32)
            wcat = wcat.at[:f_src, :hidden].set(w_l)               # lin_l block
            wcat = wcat.at[F_PAD:F_PAD + f_dst, :hidden].set(w_r)  # lin_r block
            bias = jnp.zeros((1, F_PAD), jnp.float32).at[0, :hidden].set(b_l)
            w_per_et.append(wcat)
            b_per_et.append(bias)
        wcat_layers.append(jnp.stack(w_per_et))
        bias_layers.append(jnp.stack(b_per_et))
    wcat_all = jnp.stack(wcat_layers)      # (5, E, 2*F_PAD, F_PAD)
    bias_all = jnp.stack(bias_layers)      # (5, E, 1, F_PAD)

    w_lin, b_lin = lin_params
    w_lin_pad = pad_to(w_lin, (F_PAD, F_PAD))
    b_lin_pad = pad_to(b_lin.reshape(1, -1), (1, F_PAD))
    return adj_all, x_all, wcat_all, bias_all, w_lin_pad, b_lin_pad


# ------------------------------ Pure-JAX reference ----------------------------- #

def gnn_reference(x_dict, adj_dict, conv_params, lin_params, edge_types):
    xs = dict(x_dict)
    by_dst = {}
    for et in edge_types:
        by_dst.setdefault(et[2], []).append(et)
    for li in range(NUM_LAYERS):
        new = {}
        for dst, ets in by_dst.items():
            ys = []
            for et in ets:
                src = et[0]
                w_l, w_r, b_l = conv_params[li][et]
                agg = adj_dict[et] @ xs[src]
                ys.append(agg @ w_l + xs[dst] @ w_r + b_l)
            y = ys[0] if len(ys) == 1 else jnp.mean(jnp.stack(ys, 0), axis=0)
            if li < NUM_LAYERS - 1:
                y = jnp.maximum(y, 0.0)
            new[dst] = y
        xs = new
    w_lin, b_lin = lin_params
    return (xs['transaction'] @ w_lin + b_lin)[:, 0]


# ------------------------------------- Main ------------------------------------ #

if __name__ == "__main__":
    key = jax.random.PRNGKey(0)

    node_types = ['transaction', 'wallet']
    edge_types = [('wallet', 'pays', 'transaction'),
                  ('transaction', 'rev_pays', 'wallet')]
    metadata = (node_types, edge_types)

    num_nodes = {'transaction': 16, 'wallet': 16}
    in_dims = {'transaction': 16, 'wallet': 8}
    hidden_dim = 32

    key, k1, k2 = jax.random.split(key, 3)
    x_dict = {
        'transaction': jax.random.normal(
            k1, (num_nodes['transaction'], in_dims['transaction']), jnp.float32),
        'wallet': jax.random.normal(
            k2, (num_nodes['wallet'], in_dims['wallet']), jnp.float32),
    }

    # Deterministic edges (2, E) as (src_idx, dst_idx).
    E = 32
    e = jnp.arange(E)
    edge_index_dict = {
        ('wallet', 'pays', 'transaction'):
            jnp.stack([e % num_nodes['wallet'], (3 * e) % num_nodes['transaction']]),
        ('transaction', 'rev_pays', 'wallet'):
            jnp.stack([(3 * e) % num_nodes['transaction'], e % num_nodes['wallet']]),
    }

    adj_dict = {
        et: dense_mean_adj(edge_index_dict[et],
                           n_src=num_nodes[et[0]], n_dst=num_nodes[et[2]])
        for et in edge_types
    }

    conv_params, lin_params = init_params(key, metadata, in_dims, hidden_dim)

    operands = pack_operands(x_dict, adj_dict, conv_params, lin_params,
                             node_types, edge_types, hidden_dim)

    out = gnn_forward_fused(*operands, node_types=node_types,
                            edge_types=edge_types,
                            n_out=num_nodes['transaction'])
    out = jax.block_until_ready(out)
    assert out.shape == (num_nodes['transaction'],)

    # Correctness check against a pure-JAX reference of the same forward pass.
    ref = gnn_reference(x_dict, adj_dict, conv_params, lin_params, edge_types)
    err = float(jnp.max(jnp.abs(out - ref)))
    assert err < 1e-3, f"mismatch vs reference: {err}"

    print("KERNEL_OK")
</pallas_src>

<mosaic_0001>
module attributes {stable_mosaic.version = 11 : i64} {
  func.func @kernel(%arg0: memref<2x128x128xf32, #tpu.memory_space<vmem>>, %arg1: memref<2x128x128xf32, #tpu.memory_space<vmem>>, %arg2: memref<5x2x256x128xf32, #tpu.memory_space<vmem>>, %arg3: memref<5x2x1x128xf32, #tpu.memory_space<vmem>>, %arg4: memref<128x128xf32, #tpu.memory_space<vmem>>, %arg5: memref<1x128xf32, #tpu.memory_space<vmem>>, %arg6: memref<128x128xf32, #tpu.memory_space<vmem>>) attributes {dimension_semantics = [], scalar_prefetch = 0 : i64, scratch_operands = 0 : i64, tpu.core_type = #tpu.core_type<tc>} {
    %c0 = arith.constant 0 : index
    %c0_0 = arith.constant 0 : index
    %c0_1 = arith.constant 0 : index
    %0 = vector.load %arg1[%c0, %c0_0, %c0_1] : memref<2x128x128xf32, #tpu.memory_space<vmem>>, vector<1x128x128xf32>
    %1 = vector.shape_cast %0 : vector<1x128x128xf32> to vector<128x128xf32>
    %c1 = arith.constant 1 : index
    %c0_2 = arith.constant 0 : index
    %c0_3 = arith.constant 0 : index
    %2 = vector.load %arg1[%c1, %c0_2, %c0_3] : memref<2x128x128xf32, #tpu.memory_space<vmem>>, vector<1x128x128xf32>
    %3 = vector.shape_cast %2 : vector<1x128x128xf32> to vector<128x128xf32>
    %c0_4 = arith.constant 0 : index
    %c0_5 = arith.constant 0 : index
    %c0_6 = arith.constant 0 : index
    %4 = vector.load %arg0[%c0_4, %c0_5, %c0_6] : memref<2x128x128xf32, #tpu.memory_space<vmem>>, vector<1x128x128xf32>
    %5 = vector.shape_cast %4 : vector<1x128x128xf32> to vector<128x128xf32>
    %c1_7 = arith.constant 1 : index
    %c0_8 = arith.constant 0 : index
    %c0_9 = arith.constant 0 : index
    %6 = vector.load %arg0[%c1_7, %c0_8, %c0_9] : memref<2x128x128xf32, #tpu.memory_space<vmem>>, vector<1x128x128xf32>
    %7 = vector.shape_cast %6 : vector<1x128x128xf32> to vector<128x128xf32>
    %cst = arith.constant dense<0.000000e+00> : vector<128x128xf32>
    %8 = tpu.matmul %5, %3, %cst {dimension_numbers = #tpu.dot_dimension_numbers<[1], [0], [0], [1], [0, 0, 1, 1], [], []>} : vector<128x128xf32>, vector<128x128xf32>, vector<128x128xf32> -> vector<128x128xf32>
    %9 = tpu.concatenate %8, %1 in 1 : vector<128x128xf32>, vector<128x128xf32> -> vector<128x256xf32>
    %c0_10 = arith.constant 0 : index
    %c0_11 = arith.constant 0 : index
    %c0_12 = arith.constant 0 : index
    %c0_13 = arith.constant 0 : index
    %10 = vector.load %arg2[%c0_10, %c0_11, %c0_12, %c0_13] : memref<5x2x256x128xf32, #tpu.memory_space<vmem>>, vector<1x1x256x128xf32>
    %11 = vector.shape_cast %10 : vector<1x1x256x128xf32> to vector<256x128xf32>
    %cst_14 = arith.constant dense<0.000000e+00> : vector<128x128xf32>
    %12 = tpu.matmul %9, %11, %cst_14 {dimension_numbers = #tpu.dot_dimension_numbers<[1], [0], [0], [1], [0, 0, 1, 1], [], []>} : vector<128x256xf32>, vector<256x128xf32>, vector<128x128xf32> -> vector<128x128xf32>
    %c0_15 = arith.constant 0 : index
    %c0_16 = arith.constant 0 : index
    %c0_17 = arith.constant 0 : index
    %c0_18 = arith.constant 0 : index
    %13 = vector.load %arg3[%c0_15, %c0_16, %c0_17, %c0_18] : memref<5x2x1x128xf32, #tpu.memory_space<vmem>>, vector<1x1x1x128xf32>
    %14 = vector.shape_cast %13 : vector<1x1x1x128xf32> to vector<1x128xf32>
    %15 = vector.broadcast %14 : vector<1x128xf32> to vector<128x128xf32>
    %16 = arith.addf %12, %15 : vector<128x128xf32>
    %cst_19 = arith.constant 1.000000e+00 : f32
    %17 = vector.broadcast %cst_19 : f32 to vector<128x128xf32>
    %18 = arith.mulf %16, %17 : vector<128x128xf32>
    %cst_20 = arith.constant 0.000000e+00 : f32
    %19 = vector.broadcast %cst_20 : f32 to vector<128x128xf32>
    %20 = arith.maximumf %18, %19 : vector<128x128xf32>
    %cst_21 = arith.constant dense<0.000000e+00> : vector<128x128xf32>
    %21 = tpu.matmul %7, %1, %cst_21 {dimension_numbers = #tpu.dot_dimension_numbers<[1], [0], [0], [1], [0, 0, 1, 1], [], []>} : vector<128x128xf32>, vector<128x128xf32>, vector<128x128xf32> -> vector<128x128xf32>
    %22 = tpu.concatenate %21, %3 in 1 : vector<128x128xf32>, vector<128x128xf32> -> vector<128x256xf32>
    %c0_22 = arith.constant 0 : index
    %c1_23 = arith.constant 1 : index
    %c0_24 = arith.constant 0 : index
    %c0_25 = arith.constant 0 : index
    %23 = vector.load %arg2[%c0_22, %c1_23, %c0_24, %c0_25] : memref<5x2x256x128xf32, #tpu.memory_space<vmem>>, vector<1x1x256x128xf32>
    %24 = vector.shape_cast %23 : vector<1x1x256x128xf32> to vector<256x128xf32>
    %cst_26 = arith.constant dense<0.000000e+00> : vector<128x128xf32>
    %25 = tpu.matmul %22, %24, %cst_26 {dimension_numbers = #tpu.dot_dimension_numbers<[1], [0], [0], [1], [0, 0, 1, 1], [], []>} : vector<128x256xf32>, vector<256x128xf32>, vector<128x128xf32> -> vector<128x128xf32>
    %c0_27 = arith.constant 0 : index
    %c1_28 = arith.constant 1 : index
    %c0_29 = arith.constant 0 : index
    %c0_30 = arith.constant 0 : index
    %26 = vector.load %arg3[%c0_27, %c1_28, %c0_29, %c0_30] : memref<5x2x1x128xf32, #tpu.memory_space<vmem>>, vector<1x1x1x128xf32>
    %27 = vector.shape_cast %26 : vector<1x1x1x128xf32> to vector<1x128xf32>
    %28 = vector.broadcast %27 : vector<1x128xf32> to vector<128x128xf32>
    %29 = arith.addf %25, %28 : vector<128x128xf32>
    %cst_31 = arith.constant 1.000000e+00 : f32
    %30 = vector.broadcast %cst_31 : f32 to vector<128x128xf32>
    %31 = arith.mulf %29, %30 : vector<128x128xf32>
    %cst_32 = arith.constant 0.000000e+00 : f32
    %32 = vector.broadcast %cst_32 : f32 to vector<128x128xf32>
    %33 = arith.maximumf %31, %32 : vector<128x128xf32>
    %cst_33 = arith.constant dense<0.000000e+00> : vector<128x128xf32>
    %34 = tpu.matmul %5, %33, %cst_33 {dimension_numbers = #tpu.dot_dimension_numbers<[1], [0], [0], [1], [0, 0, 1, 1], [], []>} : vector<128x128xf32>, vector<128x128xf32>, vector<128x128xf32> -> vector<128x128xf32>
    %35 = tpu.concatenate %34, %20 in 1 : vector<128x128xf32>, vector<128x128xf32> -> vector<128x256xf32>
    %c1_34 = arith.constant 1 : index
    %c0_35 = arith.constant 0 : index
    %c0_36 = arith.constant 0 : index
    %c0_37 = arith.constant 0 : index
    %36 = vector.load %arg2[%c1_34, %c0_35, %c0_36, %c0_37] : memref<5x2x256x128xf32, #tpu.memory_space<vmem>>, vector<1x1x256x128xf32>
    %37 = vector.shape_cast %36 : vector<1x1x256x128xf32> to vector<256x128xf32>
    %cst_38 = arith.constant dense<0.000000e+00> : vector<128x128xf32>
    %38 = tpu.matmul %35, %37, %cst_38 {dimension_numbers = #tpu.dot_dimension_numbers<[1], [0], [0], [1], [0, 0, 1, 1], [], []>} : vector<128x256xf32>, vector<256x128xf32>, vector<128x128xf32> -> vector<128x128xf32>
    %c1_39 = arith.constant 1 : index
    %c0_40 = arith.constant 0 : index
    %c0_41 = arith.constant 0 : index
    %c0_42 = arith.constant 0 : index
    %39 = vector.load %arg3[%c1_39, %c0_40, %c0_41, %c0_42] : memref<5x2x1x128xf32, #tpu.memory_space<vmem>>, vector<1x1x1x128xf32>
    %40 = vector.shape_cast %39 : vector<1x1x1x128xf32> to vector<1x128xf32>
    %41 = vector.broadcast %40 : vector<1x128xf32> to vector<128x128xf32>
    %42 = arith.addf %38, %41 : vector<128x128xf32>
    %cst_43 = arith.constant 1.000000e+00 : f32
    %43 = vector.broadcast %cst_43 : f32 to vector<128x128xf32>
    %44 = arith.mulf %42, %43 : vector<128x128xf32>
    %cst_44 = arith.constant 0.000000e+00 : f32
    %45 = vector.broadcast %cst_44 : f32 to vector<128x128xf32>
    %46 = arith.maximumf %44, %45 : vector<128x128xf32>
    %cst_45 = arith.constant dense<0.000000e+00> : vector<128x128xf32>
    %47 = tpu.matmul %7, %20, %cst_45 {dimension_numbers = #tpu.dot_dimension_numbers<[1], [0], [0], [1], [0, 0, 1, 1], [], []>} : vector<128x128xf32>, vector<128x128xf32>, vector<128x128xf32> -> vector<128x128xf32>
    %48 = tpu.concatenate %47, %33 in 1 : vector<128x128xf32>, vector<128x128xf32> -> vector<128x256xf32>
    %c1_46 = arith.constant 1 : index
    %c1_47 = arith.constant 1 : index
    %c0_48 = arith.constant 0 : index
    %c0_49 = arith.constant 0 : index
    %49 = vector.load %arg2[%c1_46, %c1_47, %c0_48, %c0_49] : memref<5x2x256x128xf32, #tpu.memory_space<vmem>>, vector<1x1x256x128xf32>
    %50 = vector.shape_cast %49 : vector<1x1x256x128xf32> to vector<256x128xf32>
    %cst_50 = arith.constant dense<0.000000e+00> : vector<128x128xf32>
    %51 = tpu.matmul %48, %50, %cst_50 {dimension_numbers = #tpu.dot_dimension_numbers<[1], [0], [0], [1], [0, 0, 1, 1], [], []>} : vector<128x256xf32>, vector<256x128xf32>, vector<128x128xf32> -> vector<128x128xf32>
    %c1_51 = arith.constant 1 : index
    %c1_52 = arith.constant 1 : index
    %c0_53 = arith.constant 0 : index
    %c0_54 = arith.constant 0 : index
    %52 = vector.load %arg3[%c1_51, %c1_52, %c0_53, %c0_54] : memref<5x2x1x128xf32, #tpu.memory_space<vmem>>, vector<1x1x1x128xf32>
    %53 = vector.shape_cast %52 : vector<1x1x1x128xf32> to vector<1x128xf32>
    %54 = vector.broadcast %53 : vector<1x128xf32> to vector<128x128xf32>
    %55 = arith.addf %51, %54 : vector<128x128xf32>
    %cst_55 = arith.constant 1.000000e+00 : f32
    %56 = vector.broadcast %cst_55 : f32 to vector<128x128xf32>
    %57 = arith.mulf %55, %56 : vector<128x128xf32>
    %cst_56 = arith.constant 0.000000e+00 : f32
    %58 = vector.broadcast %cst_56 : f32 to vector<128x128xf32>
    %59 = arith.maximumf %57, %58 : vector<128x128xf32>
    %cst_57 = arith.constant dense<0.000000e+00> : vector<128x128xf32>
    %60 = tpu.matmul %5, %59, %cst_57 {dimension_numbers = #tpu.dot_dimension_numbers<[1], [0], [0], [1], [0, 0, 1, 1], [], []>} : vector<128x128xf32>, vector<128x128xf32>, vector<128x128xf32> -> vector<128x128xf32>
    %61 = tpu.concatenate %60, %46 in 1 : vector<128x128xf32>, vector<128x128xf32> -> vector<128x256xf32>
    %c2 = arith.constant 2 : index
    %c0_58 = arith.constant 0 : index
    %c0_59 = arith.constant 0 : index
    %c0_60 = arith.constant 0 : index
    %62 = vector.load %arg2[%c2, %c0_58, %c0_59, %c0_60] : memref<5x2x256x128xf32, #tpu.memory_space<vmem>>, vector<1x1x256x128xf32>
    %63 = vector.shape_cast %62 : vector<1x1x256x128xf32> to vector<256x128xf32>
    %cst_61 = arith.constant dense<0.000000e+00> : vector<128x128xf32>
    %64 = tpu.matmul %61, %63, %cst_61 {dimension_numbers = #tpu.dot_dimension_numbers<[1], [0], [0], [1], [0, 0, 1, 1], [], []>} : vector<128x256xf32>, vector<256x128xf32>, vector<128x128xf32> -> vector<128x128xf32>
    %c2_62 = arith.constant 2 : index
    %c0_63 = arith.constant 0 : index
    %c0_64 = arith.constant 0 : index
    %c0_65 = arith.constant 0 : index
    %65 = vector.load %arg3[%c2_62, %c0_63, %c0_64, %c0_65] : memref<5x2x1x128xf32, #tpu.memory_space<vmem>>, vector<1x1x1x128xf32>
    %66 = vector.shape_cast %65 : vector<1x1x1x128xf32> to vector<1x128xf32>
    %67 = vector.broadcast %66 : vector<1x128xf32> to vector<128x128xf32>
    %68 = arith.addf %64, %67 : vector<128x128xf32>
    %cst_66 = arith.constant 1.000000e+00 : f32
    %69 = vector.broadcast %cst_66 : f32 to vector<128x128xf32>
    %70 = arith.mulf %68, %69 : vector<128x128xf32>
    %cst_67 = arith.constant 0.000000e+00 : f32
    %71 = vector.broadcast %cst_67 : f32 to vector<128x128xf32>
    %72 = arith.maximumf %70, %71 : vector<128x128xf32>
    %cst_68 = arith.constant dense<0.000000e+00> : vector<128x128xf32>
    %73 = tpu.matmul %7, %46, %cst_68 {dimension_numbers = #tpu.dot_dimension_numbers<[1], [0], [0], [1], [0, 0, 1, 1], [], []>} : vector<128x128xf32>, vector<128x128xf32>, vector<128x128xf32> -> vector<128x128xf32>
    %74 = tpu.concatenate %73, %59 in 1 : vector<128x128xf32>, vector<128x128xf32> -> vector<128x256xf32>
    %c2_69 = arith.constant 2 : index
    %c1_70 = arith.constant 1 : index
    %c0_71 = arith.constant 0 : index
    %c0_72 = arith.constant 0 : index
    %75 = vector.load %arg2[%c2_69, %c1_70, %c0_71, %c0_72] : memref<5x2x256x128xf32, #tpu.memory_space<vmem>>, vector<1x1x256x128xf32>
    %76 = vector.shape_cast %75 : vector<1x1x256x128xf32> to vector<256x128xf32>
    %cst_73 = arith.constant dense<0.000000e+00> : vector<128x128xf32>
    %77 = tpu.matmul %74, %76, %cst_73 {dimension_numbers = #tpu.dot_dimension_numbers<[1], [0], [0], [1], [0, 0, 1, 1], [], []>} : vector<128x256xf32>, vector<256x128xf32>, vector<128x128xf32> -> vector<128x128xf32>
    %c2_74 = arith.constant 2 : index
    %c1_75 = arith.constant 1 : index
    %c0_76 = arith.constant 0 : index
    %c0_77 = arith.constant 0 : index
    %78 = vector.load %arg3[%c2_74, %c1_75, %c0_76, %c0_77] : memref<5x2x1x128xf32, #tpu.memory_space<vmem>>, vector<1x1x1x128xf32>
    %79 = vector.shape_cast %78 : vector<1x1x1x128xf32> to vector<1x128xf32>
    %80 = vector.broadcast %79 : vector<1x128xf32> to vector<128x128xf32>
    %81 = arith.addf %77, %80 : vector<128x128xf32>
    %cst_78 = arith.constant 1.000000e+00 : f32
    %82 = vector.broadcast %cst_78 : f32 to vector<128x128xf32>
    %83 = arith.mulf %81, %82 : vector<128x128xf32>
    %cst_79 = arith.constant 0.000000e+00 : f32
    %84 = vector.broadcast %cst_79 : f32 to vector<128x128xf32>
    %85 = arith.maximumf %83, %84 : vector<128x128xf32>
    %cst_80 = arith.constant dense<0.000000e+00> : vector<128x128xf32>
    %86 = tpu.matmul %5, %85, %cst_80 {dimension_numbers = #tpu.dot_dimension_numbers<[1], [0], [0], [1], [0, 0, 1, 1], [], []>} : vector<128x128xf32>, vector<128x128xf32>, vector<128x128xf32> -> vector<128x128xf32>
    %87 = tpu.concatenate %86, %72 in 1 : vector<128x128xf32>, vector<128x128xf32> -> vector<128x256xf32>
    %c3 = arith.constant 3 : index
    %c0_81 = arith.constant 0 : index
    %c0_82 = arith.constant 0 : index
    %c0_83 = arith.constant 0 : index
    %88 = vector.load %arg2[%c3, %c0_81, %c0_82, %c0_83] : memref<5x2x256x128xf32, #tpu.memory_space<vmem>>, vector<1x1x256x128xf32>
    %89 = vector.shape_cast %88 : vector<1x1x256x128xf32> to vector<256x128xf32>
    %cst_84 = arith.constant dense<0.000000e+00> : vector<128x128xf32>
    %90 = tpu.matmul %87, %89, %cst_84 {dimension_numbers = #tpu.dot_dimension_numbers<[1], [0], [0], [1], [0, 0, 1, 1], [], []>} : vector<128x256xf32>, vector<256x128xf32>, vector<128x128xf32> -> vector<128x128xf32>
    %c3_85 = arith.constant 3 : index
    %c0_86 = arith.constant 0 : index
    %c0_87 = arith.constant 0 : index
    %c0_88 = arith.constant 0 : index
    %91 = vector.load %arg3[%c3_85, %c0_86, %c0_87, %c0_88] : memref<5x2x1x128xf32, #tpu.memory_space<vmem>>, vector<1x1x1x128xf32>
    %92 = vector.shape_cast %91 : vector<1x1x1x128xf32> to vector<1x128xf32>
    %93 = vector.broadcast %92 : vector<1x128xf32> to vector<128x128xf32>
    %94 = arith.addf %90, %93 : vector<128x128xf32>
    %cst_89 = arith.constant 1.000000e+00 : f32
    %95 = vector.broadcast %cst_89 : f32 to vector<128x128xf32>
    %96 = arith.mulf %94, %95 : vector<128x128xf32>
    %cst_90 = arith.constant 0.000000e+00 : f32
    %97 = vector.broadcast %cst_90 : f32 to vector<128x128xf32>
    %98 = arith.maximumf %96, %97 : vector<128x128xf32>
    %cst_91 = arith.constant dense<0.000000e+00> : vector<128x128xf32>
    %99 = tpu.matmul %7, %72, %cst_91 {dimension_numbers = #tpu.dot_dimension_numbers<[1], [0], [0], [1], [0, 0, 1, 1], [], []>} : vector<128x128xf32>, vector<128x128xf32>, vector<128x128xf32> -> vector<128x128xf32>
    %100 = tpu.concatenate %99, %85 in 1 : vector<128x128xf32>, vector<128x128xf32> -> vector<128x256xf32>
    %c3_92 = arith.constant 3 : index
    %c1_93 = arith.constant 1 : index
    %c0_94 = arith.constant 0 : index
    %c0_95 = arith.constant 0 : index
    %101 = vector.load %arg2[%c3_92, %c1_93, %c0_94, %c0_95] : memref<5x2x256x128xf32, #tpu.memory_space<vmem>>, vector<1x1x256x128xf32>
    %102 = vector.shape_cast %101 : vector<1x1x256x128xf32> to vector<256x128xf32>
    %cst_96 = arith.constant dense<0.000000e+00> : vector<128x128xf32>
    %103 = tpu.matmul %100, %102, %cst_96 {dimension_numbers = #tpu.dot_dimension_numbers<[1], [0], [0], [1], [0, 0, 1, 1], [], []>} : vector<128x256xf32>, vector<256x128xf32>, vector<128x128xf32> -> vector<128x128xf32>
    %c3_97 = arith.constant 3 : index
    %c1_98 = arith.constant 1 : index
    %c0_99 = arith.constant 0 : index
    %c0_100 = arith.constant 0 : index
    %104 = vector.load %arg3[%c3_97, %c1_98, %c0_99, %c0_100] : memref<5x2x1x128xf32, #tpu.memory_space<vmem>>, vector<1x1x1x128xf32>
    %105 = vector.shape_cast %104 : vector<1x1x1x128xf32> to vector<1x128xf32>
    %106 = vector.broadcast %105 : vector<1x128xf32> to vector<128x128xf32>
    %107 = arith.addf %103, %106 : vector<128x128xf32>
    %cst_101 = arith.constant 1.000000e+00 : f32
    %108 = vector.broadcast %cst_101 : f32 to vector<128x128xf32>
    %109 = arith.mulf %107, %108 : vector<128x128xf32>
    %cst_102 = arith.constant 0.000000e+00 : f32
    %110 = vector.broadcast %cst_102 : f32 to vector<128x128xf32>
    %111 = arith.maximumf %109, %110 : vector<128x128xf32>
    %cst_103 = arith.constant dense<0.000000e+00> : vector<128x128xf32>
    %112 = tpu.matmul %5, %111, %cst_103 {dimension_numbers = #tpu.dot_dimension_numbers<[1], [0], [0], [1], [0, 0, 1, 1], [], []>} : vector<128x128xf32>, vector<128x128xf32>, vector<128x128xf32> -> vector<128x128xf32>
    %113 = tpu.concatenate %112, %98 in 1 : vector<128x128xf32>, vector<128x128xf32> -> vector<128x256xf32>
    %c4 = arith.constant 4 : index
    %c0_104 = arith.constant 0 : index
    %c0_105 = arith.constant 0 : index
    %c0_106 = arith.constant 0 : index
    %114 = vector.load %arg2[%c4, %c0_104, %c0_105, %c0_106] : memref<5x2x256x128xf32, #tpu.memory_space<vmem>>, vector<1x1x256x128xf32>
    %115 = vector.shape_cast %114 : vector<1x1x256x128xf32> to vector<256x128xf32>
    %cst_107 = arith.constant dense<0.000000e+00> : vector<128x128xf32>
    %116 = tpu.matmul %113, %115, %cst_107 {dimension_numbers = #tpu.dot_dimension_numbers<[1], [0], [0], [1], [0, 0, 1, 1], [], []>} : vector<128x256xf32>, vector<256x128xf32>, vector<128x128xf32> -> vector<128x128xf32>
    %c4_108 = arith.constant 4 : index
    %c0_109 = arith.constant 0 : index
    %c0_110 = arith.constant 0 : index
    %c0_111 = arith.constant 0 : index
    %117 = vector.load %arg3[%c4_108, %c0_109, %c0_110, %c0_111] : memref<5x2x1x128xf32, #tpu.memory_space<vmem>>, vector<1x1x1x128xf32>
    %118 = vector.shape_cast %117 : vector<1x1x1x128xf32> to vector<1x128xf32>
    %119 = vector.broadcast %118 : vector<1x128xf32> to vector<128x128xf32>
    %120 = arith.addf %116, %119 : vector<128x128xf32>
    %cst_112 = arith.constant 1.000000e+00 : f32
    %121 = vector.broadcast %cst_112 : f32 to vector<128x128xf32>
    %122 = arith.mulf %120, %121 : vector<128x128xf32>
    %c0_113 = arith.constant 0 : index
    %c0_114 = arith.constant 0 : index
    %123 = vector.load %arg4[%c0_113, %c0_114] : memref<128x128xf32, #tpu.memory_space<vmem>>, vector<128x128xf32>
    %cst_115 = arith.constant dense<0.000000e+00> : vector<128x128xf32>
    %124 = tpu.matmul %122, %123, %cst_115 {dimension_numbers = #tpu.dot_dimension_numbers<[1], [0], [0], [1], [0, 0, 1, 1], [], []>} : vector<128x128xf32>, vector<128x128xf32>, vector<128x128xf32> -> vector<128x128xf32>
    %c0_116 = arith.constant 0 : index
    %c0_117 = arith.constant 0 : index
    %125 = vector.load %arg5[%c0_116, %c0_117] : memref<1x128xf32, #tpu.memory_space<vmem>>, vector<1x128xf32>
    %126 = vector.broadcast %125 : vector<1x128xf32> to vector<128x128xf32>
    %127 = arith.addf %124, %126 : vector<128x128xf32>
    %c0_118 = arith.constant 0 : index
    %c0_119 = arith.constant 0 : index
    %128 = vector.load %arg6[%c0_118, %c0_119] : memref<128x128xf32, #tpu.memory_space<vmem>>, vector<128x128xf32>
    tpu.vector_store %arg6[%c0_118, %c0_119], %127 {strides = array<i32>} : memref<128x128xf32, #tpu.memory_space<vmem>>, vector<128x128xf32>,
    return
  }
}

</mosaic_0001>

<llo_original>
// kernel: tpu_custom_call.1
$region0: #{tpu_custom_call.1}
  #allocation0 [shape = 'u32[]', space=smem, size = 0x4, offset = 0x4, fixed_abs, tag = 'smem constant byte address 0x4 - core index']
  #allocation1 [shape = 'u32[144,128]{1,0:T(1,128)}', space=vmem, size = 0x12000, scoped, tag = 'internal scratch']
  %s0 = inlined_call_operand.hbm [shape: f32[2,128,128], index: 0, kind: input, shape index: {}]
  %s1 = inlined_call_operand.hbm [shape: f32[2,128,128], index: 1, kind: input, shape index: {}]
  %s2 = inlined_call_operand.hbm [shape: f32[5,2,256,128], index: 2, kind: input, shape index: {}]
  %s3 = inlined_call_operand.hbm [shape: f32[5,2,1,128], index: 3, kind: input, shape index: {}]
  %s4 = inlined_call_operand.hbm [shape: f32[128,128], index: 4, kind: input, shape index: {}]
  %s5 = inlined_call_operand.hbm [shape: f32[1,128], index: 5, kind: input, shape index: {}]
  %s6 = inlined_call_operand.hbm [shape: f32[128,128], index: 6, kind: output, shape index: {}]
  %s7 = sld [smem:[#allocation0]]
  $region58: #{tpu_custom_call.1} parent=0
    _
  %s9 = ssub.s32 1, %s7
  %s10 = scalar_select 0, %s9, %s7
  $region1: #{tpu_custom_call.1} parent=0
    #allocation2 [shape = 'u8[131072]{0}', space=vmem, size = 0x20000, scoped, tag = 'input window, operand 0, single buffered']
    #allocation3 [shape = 's32[1]{0}', space=sflag, size = 0x4, scoped, tag = 'scoped memory for tpu_custom_call.1']
    #allocation4 [shape = 's32[1]{0}', space=sflag, size = 0x4, scoped, tag = 'scoped memory for tpu_custom_call.1']
    #allocation5 [shape = 'u8[131072]{0}', space=vmem, size = 0x20000, scoped, tag = 'input window, operand 1, single buffered']
    #allocation6 [shape = 's32[1]{0}', space=sflag, size = 0x4, scoped, tag = 'scoped memory for tpu_custom_call.1']
    #allocation7 [shape = 'u8[1310720]{0}', space=vmem, size = 0x140000, scoped, tag = 'input window, operand 2, single buffered']
    #allocation8 [shape = 'u8[5120]{0}', space=vmem, size = 0x1400, scoped, tag = 'input window, operand 3, single buffered']
    #allocation9 [shape = 's32[1]{0}', space=sflag, size = 0x4, scoped, tag = 'scoped memory for tpu_custom_call.1']
    #allocation10 [shape = 'u8[65536]{0}', space=vmem, size = 0x10000, scoped, tag = 'input window, operand 4, single buffered']
    #allocation11 [shape = 'u8[512]{0}', space=vmem, size = 0x400, scoped, tag = 'input window, operand 5, single buffered']
    #allocation12 [shape = 's32[1]{0}', space=sflag, size = 0x4, scoped, tag = 'scoped memory for tpu_custom_call.1']
    #allocation13 [shape = 'u8[65536]{0}', space=vmem, size = 0x10000, scoped, tag = 'output window, operand 0, single buffered']
    %11 = vsyncpa [#allocation3], 0
    %12 = vsyncpa [#allocation6], 0
    %13 = vsyncpa [#allocation9], 0
    %14 = vsyncpa [#allocation12], 0
    %15 = vsyncpa [#allocation4], 0
    // Predicated region
    $region2: #{tpu_custom_call.1} parent=1 // pred_check
      _
    $region3: #{tpu_custom_call.1} parent=1 // pred_check_branch
      %17 = sbr.rel (0) target = $region5
    $region4: #{tpu_custom_call.1} parent=1 // pred_region
      %s19 = ssub.s32 4096, 4096
      %20 = vsyncadd [#allocation3], %s19
      %s21 = sshll.u32 [#allocation2], 4
      %s22 = int_to_ptr.vmem [resolvable:$true] %s21
      %27 = dma.hbm_to_vmem [thread:$0]  %s0, 4096, %s22, [#allocation3], 128, 128, 8
    $region5: #{tpu_custom_call.1} parent=1 // pred_fallthru
      _
    // Predicated region
    $region6: #{tpu_custom_call.1} parent=1 // pred_check
      _
    $region7: #{tpu_custom_call.1} parent=1 // pred_check_branch
      %29 = sbr.rel (0) target = $region9
    $region8: #{tpu_custom_call.1} parent=1 // pred_region
      %s31 = ssub.s32 4096, 4096
      %32 = vsyncadd [#allocation6], %s31
      %s33 = sshll.u32 [#allocation5], 4
      %s34 = int_to_ptr.vmem [resolvable:$true] %s33
      %39 = dma.hbm_to_vmem [thread:$0]  %s1, 4096, %s34, [#allocation6], 128, 128, 8
    $region9: #{tpu_custom_call.1} parent=1 // pred_fallthru
      _
    // Predicated region
    $region10: #{tpu_custom_call.1} parent=1 // pred_check
      _
    $region11: #{tpu_custom_call.1} parent=1 // pred_check_branch
      %41 = sbr.rel (0) target = $region13
    $region12: #{tpu_custom_call.1} parent=1 // pred_region
      %s43 = ssub.s32 40960, 40960
      %44 = vsyncadd [#allocation6], %s43
      %s45 = sshll.u32 [#allocation7], 4
      %s46 = int_to_ptr.vmem [resolvable:$true] %s45
      %51 = dma.hbm_to_vmem [thread:$0]  %s2, 40960, %s46, [#allocation6], 128, 128, 8
    $region13: #{tpu_custom_call.1} parent=1 // pred_fallthru
      _
    // Predicated region
    $region14: #{tpu_custom_call.1} parent=1 // pred_check
      _
    $region15: #{tpu_custom_call.1} parent=1 // pred_check_branch
      %53 = sbr.rel (0) target = $region17
    $region16: #{tpu_custom_call.1} parent=1 // pred_region
      %s55 = ssub.s32 160, 160
      %56 = vsyncadd [#allocation9], %s55
      %s57 = sshll.u32 [#allocation8], 4
      %s58 = int_to_ptr.vmem [resolvable:$true] %s57
      %63 = dma.hbm_to_vmem [thread:$0]  %s3, 160, %s58, [#allocation9], 16, 16, 1
    $region17: #{tpu_custom_call.1} parent=1 // pred_fallthru
      _
    // Predicated region
    $region18: #{tpu_custom_call.1} parent=1 // pred_check
      _
    $region19: #{tpu_custom_call.1} parent=1 // pred_check_branch
      %65 = sbr.rel (0) target = $region21
    $region20: #{tpu_custom_call.1} parent=1 // pred_region
      %s67 = ssub.s32 2048, 2048
      %68 = vsyncadd [#allocation9], %s67
      %s69 = sshll.u32 [#allocation10], 4
      %s70 = int_to_ptr.vmem [resolvable:$true] %s69
      %75 = dma.hbm_to_vmem [thread:$0]  %s4, 2048, %s70, [#allocation9], 128, 128, 8
    $region21: #{tpu_custom_call.1} parent=1 // pred_fallthru
      _
    // Predicated region
    $region22: #{tpu_custom_call.1} parent=1 // pred_check
      _
    $region23: #{tpu_custom_call.1} parent=1 // pred_check_branch
      %77 = sbr.rel (0) target = $region25
    $region24: #{tpu_custom_call.1} parent=1 // pred_region
      %s79 = ssub.s32 16, 16
      %80 = vsyncadd [#allocation12], %s79
      %s82 = sshll.u32 [#allocation11], 4
      %s83 = int_to_ptr.vmem [resolvable:$true] %s82
      %85 = dma.hbm_to_vmem [thread:$0]  %s5, 16, %s83, [#allocation12]
    $region25: #{tpu_custom_call.1} parent=1 // pred_fallthru
      _
    // Predicated region
    $region26: #{tpu_custom_call.1} parent=1 // pred_check
      _
    $region27: #{tpu_custom_call.1} parent=1 // pred_check_branch
      %87 = sbr.rel (0) target = $region29
    $region28: #{tpu_custom_call.1} parent=1 // pred_region
      %88 = dma.done [#allocation3], 4096
    $region29: #{tpu_custom_call.1} parent=1 // pred_fallthru
      _
    // Predicated region
    $region30: #{tpu_custom_call.1} parent=1 // pred_check
      _
    $region31: #{tpu_custom_call.1} parent=1 // pred_check_branch
      %90 = sbr.rel (0) target = $region33
    $region32: #{tpu_custom_call.1} parent=1 // pred_region
      %91 = dma.done [#allocation6], 4096
    $region33: #{tpu_custom_call.1} parent=1 // pred_fallthru
      _
    // Predicated region
    $region34: #{tpu_custom_call.1} parent=1 // pred_check
      _
    $region35: #{tpu_custom_call.1} parent=1 // pred_check_branch
      %93 = sbr.rel (0) target = $region37
    $region36: #{tpu_custom_call.1} parent=1 // pred_region
      %94 = dma.done [#allocation6], 40960
    $region37: #{tpu_custom_call.1} parent=1 // pred_fallthru
      _
    // Predicated region
    $region38: #{tpu_custom_call.1} parent=1 // pred_check
      _
    $region39: #{tpu_custom_call.1} parent=1 // pred_check_branch
      %96 = sbr.rel (0) target = $region41
    $region40: #{tpu_custom_call.1} parent=1 // pred_region
      %97 = dma.done [#allocation9], 160
    $region41: #{tpu_custom_call.1} parent=1 // pred_fallthru
      _
    // Predicated region
    $region42: #{tpu_custom_call.1} parent=1 // pred_check
      _
    $region43: #{tpu_custom_call.1} parent=1 // pred_check_branch
      %99 = sbr.rel (0) target = $region45
    $region44: #{tpu_custom_call.1} parent=1 // pred_region
      %100 = dma.done [#allocation9], 2048
    $region45: #{tpu_custom_call.1} parent=1 // pred_fallthru
      _
    // Predicated region
    $region46: #{tpu_custom_call.1} parent=1 // pred_check
      _
    $region47: #{tpu_custom_call.1} parent=1 // pred_check_branch
      %102 = sbr.rel (0) target = $region49
    $region48: #{tpu_custom_call.1} parent=1 // pred_region
      %103 = dma.done [#allocation12], 16
    $region49: #{tpu_custom_call.1} parent=1 // pred_fallthru
      _
    %v104 = vld [vmem:[#allocation5] sm:$0xff]
    %v105 = vld [vmem:[#allocation5 + $0x8] sm:$0xff]
    %v106 = vld [vmem:[#allocation5 + $0x10] sm:$0xff]
    %v107 = vld [vmem:[#allocation5 + $0x18] sm:$0xff]
    %v108 = vld [vmem:[#allocation5 + $0x20] sm:$0xff]
    %v109 = vld [vmem:[#allocation5 + $0x28] sm:$0xff]
    %v110 = vld [vmem:[#allocation5 + $0x30] sm:$0xff]
    %v111 = vld [vmem:[#allocation5 + $0x38] sm:$0xff]
    %v112 = vld [vmem:[#allocation5 + $0x40] sm:$0xff]
    %v113 = vld [vmem:[#allocation5 + $0x48] sm:$0xff]
    %v114 = vld [vmem:[#allocation5 + $0x50] sm:$0xff]
    %v115 = vld [vmem:[#allocation5 + $0x58] sm:$0xff]
    %v116 = vld [vmem:[#allocation5 + $0x60] sm:$0xff]
    %v117 = vld [vmem:[#allocation5 + $0x68] sm:$0xff]
    %v118 = vld [vmem:[#allocation5 + $0x70] sm:$0xff]
    %v119 = vld [vmem:[#allocation5 + $0x78] sm:$0xff]
    %s120 = scalar_lea.vmem [#allocation5], 128
    %v121 = vld [vmem:[%s120] sm:$0xff]
    %v122 = vld [vmem:[%s120 + $0x8] sm:$0xff]
    %v123 = vld [vmem:[%s120 + $0x10] sm:$0xff]
    %v124 = vld [vmem:[%s120 + $0x18] sm:$0xff]
    %v125 = vld [vmem:[%s120 + $0x20] sm:$0xff]
    %v126 = vld [vmem:[%s120 + $0x28] sm:$0xff]
    %v127 = vld [vmem:[%s120 + $0x30] sm:$0xff]
    %v128 = vld [vmem:[%s120 + $0x38] sm:$0xff]
    %v129 = vld [vmem:[%s120 + $0x40] sm:$0xff]
    %v130 = vld [vmem:[%s120 + $0x48] sm:$0xff]
    %v131 = vld [vmem:[%s120 + $0x50] sm:$0xff]
    %v132 = vld [vmem:[%s120 + $0x58] sm:$0xff]
    %v133 = vld [vmem:[%s120 + $0x60] sm:$0xff]
    %v134 = vld [vmem:[%s120 + $0x68] sm:$0xff]
    %v135 = vld [vmem:[%s120 + $0x70] sm:$0xff]
    %v136 = vld [vmem:[%s120 + $0x78] sm:$0xff]
    %v137 = vld [vmem:[#allocation2] sm:$0xff]
    %v138 = vld [vmem:[#allocation2 + $0x8] sm:$0xff]
    %v139 = vld [vmem:[#allocation2 + $0x10] sm:$0xff]
    %v140 = vld [vmem:[#allocation2 + $0x18] sm:$0xff]
    %v141 = vld [vmem:[#allocation2 + $0x20] sm:$0xff]
    %v142 = vld [vmem:[#allocation2 + $0x28] sm:$0xff]
    %v143 = vld [vmem:[#allocation2 + $0x30] sm:$0xff]
    %v144 = vld [vmem:[#allocation2 + $0x38] sm:$0xff]
    %v145 = vld [vmem:[#allocation2 + $0x40] sm:$0xff]
    %v146 = vld [vmem:[#allocation2 + $0x48] sm:$0xff]
    %v147 = vld [vmem:[#allocation2 + $0x50] sm:$0xff]
    %v148 = vld [vmem:[#allocation2 + $0x58] sm:$0xff]
    %v149 = vld [vmem:[#allocation2 + $0x60] sm:$0xff]
    %v150 = vld [vmem:[#allocation2 + $0x68] sm:$0xff]
    %v151 = vld [vmem:[#allocation2 + $0x70] sm:$0xff]
    %v152 = vld [vmem:[#allocation2 + $0x78] sm:$0xff]
    %s153 = scalar_lea.vmem [#allocation2], 128
    %v154 = vld [vmem:[%s153] sm:$0xff]
    %v155 = vld [vmem:[%s153 + $0x8] sm:$0xff]
    %v156 = vld [vmem:[%s153 + $0x10] sm:$0xff]
    %v157 = vld [vmem:[%s153 + $0x18] sm:$0xff]
    %v158 = vld [vmem:[%s153 + $0x20] sm:$0xff]
    %v159 = vld [vmem:[%s153 + $0x28] sm:$0xff]
    %v160 = vld [vmem:[%s153 + $0x30] sm:$0xff]
    %v161 = vld [vmem:[%s153 + $0x38] sm:$0xff]
    %v162 = vld [vmem:[%s153 + $0x40] sm:$0xff]
    %v163 = vld [vmem:[%s153 + $0x48] sm:$0xff]
    %v164 = vld [vmem:[%s153 + $0x50] sm:$0xff]
    %v165 = vld [vmem:[%s153 + $0x58] sm:$0xff]
    %v166 = vld [vmem:[%s153 + $0x60] sm:$0xff]
    %v167 = vld [vmem:[%s153 + $0x68] sm:$0xff]
    %v168 = vld [vmem:[%s153 + $0x70] sm:$0xff]
    %v169 = vld [vmem:[%s153 + $0x78] sm:$0xff]
    %170 = vmatprep.subr.mxu0 0.0
    %171 = vmatpush1.msra.mxu0 %v121
    %172 = vmatprep.subr.mxu0 0.0
    %173 = vmatpush1.msra.mxu0 %v122
    %174 = vmatprep.subr.mxu0 0.0
    %175 = vmatpush1.msra.mxu0 %v123
    %176 = vmatprep.subr.mxu0 0.0
    %177 = vmatpush1.msra.mxu0 %v124
    %178 = vmatprep.subr.mxu0 0.0
    %179 = vmatpush1.msra.mxu0 %v125
    %180 = vmatprep.subr.mxu0 0.0
    %181 = vmatpush1.msra.mxu0 %v126
    %182 = vmatprep.subr.mxu0 0.0
    %183 = vmatpush1.msra.mxu0 %v127
    %184 = vmatprep.subr.mxu0 0.0
    %185 = vmatpush1.msra.mxu0 %v128
    %186 = vmatprep.subr.mxu0 0.0
    %187 = vmatpush1.msra.mxu0 %v129
    %188 = vmatprep.subr.mxu0 0.0
    %189 = vmatpush1.msra.mxu0 %v130
    %190 = vmatprep.subr.mxu0 0.0
    %191 = vmatpush1.msra.mxu0 %v131
    %192 = vmatprep.subr.mxu0 0.0
    %193 = vmatpush1.msra.mxu0 %v132
    %194 = vmatprep.subr.mxu0 0.0
    %195 = vmatpush1.msra.mxu0 %v133
    %196 = vmatprep.subr.mxu0 0.0
    %197 = vmatpush1.msra.mxu0 %v134
    %198 = vmatprep.subr.mxu0 0.0
    %199 = vmatpush1.msra.mxu0 %v135
    %200 = vmatprep.subr.mxu0 0.0
    %201 = vmatpush1.msra.mxu0 %v136
    %202 = vmatprep.subr.mxu0 0.0
    %203 = vmatpush1.msra.mxu0 0.0
    %204 = vmatprep.subr.mxu0 0.0
    %205 = vmatpush1.msra.mxu0 0.0
    %206 = vmatprep.subr.mxu0 0.0
    %207 = vmatpush1.msra.mxu0 0.0
    %208 = vmatprep.subr.mxu0 0.0
    %209 = vmatpush1.msra.mxu0 0.0
    %210 = vmatprep.subr.mxu0 0.0
    %211 = vmatpush1.msra.mxu0 0.0
    %212 = vmatprep.subr.mxu0 0.0
    %213 = vmatpush1.msra.mxu0 0.0
    %214 = vmatprep.subr.mxu0 0.0
    %215 = vmatpush1.msra.mxu0 0.0
    %216 = vmatprep.subr.mxu0 0.0
    %217 = vmatpush1.msra.mxu0 0.0
    %218 = vmatprep.subr.mxu0 0.0
    %219 = vmatpush1.msra.mxu0 0.0
    %220 = vmatprep.subr.mxu0 0.0
    %221 = vmatpush1.msra.mxu0 0.0
    %222 = vmatprep.subr.mxu0 0.0
    %223 = vmatpush1.msra.mxu0 0.0
    %224 = vmatprep.subr.mxu0 0.0
    %225 = vmatpush1.msra.mxu0 0.0
    %226 = vmatprep.subr.mxu0 0.0
    %227 = vmatpush1.msra.mxu0 0.0
    %228 = vmatprep.subr.mxu0 0.0
    %229 = vmatpush1.msra.mxu0 0.0
    %230 = vmatprep.subr.mxu0 0.0
    %231 = vmatpush1.msra.mxu0 0.0
    %232 = vmatprep.subr.mxu0 0.0
    %233 = vmatpush1.msra.mxu0 0.0
    %234 = vmatprep.mubr.f32.mxu0 0.0
    %235 = vmatmul.mubr.f32.gmra.mrb[0].mxu0 %v137
    %v236 = vpop.f32.mrb[0].mxu0
    %v237 = vadd.f32 0.0, %v236
    %v238 = vpop.f32.mrb[0].mxu0
    %239 = vmatprep.mubr.f32.mxu0 0.0
    %240 = vmatmul.mubr.f32.gmra.mrb[0].mxu0 %v138
    %v241 = vpop.f32.mrb[0].mxu0
    %v242 = vadd.f32 0.0, %v241
    %v243 = vpop.f32.mrb[0].mxu0
    %244 = vmatprep.mubr.f32.mxu0 0.0
    %245 = vmatmul.mubr.f32.gmra.mrb[0].mxu0 %v139
    %v246 = vpop.f32.mrb[0].mxu0
    %v247 = vadd.f32 0.0, %v246
    %v248 = vpop.f32.mrb[0].mxu0
    %249 = vmatprep.mubr.f32.mxu0 0.0
    %250 = vmatmul.mubr.f32.gmra.mrb[0].mxu0 %v140
    %v251 = vpop.f32.mrb[0].mxu0
    %v252 = vadd.f32 0.0, %v251
    %v253 = vpop.f32.mrb[0].mxu0
    %254 = vmatprep.mubr.f32.mxu0 0.0
    %255 = vmatmul.mubr.f32.gmra.mrb[0].mxu0 %v141
    %v256 = vpop.f32.mrb[0].mxu0
    %v257 = vadd.f32 0.0, %v256
    %v258 = vpop.f32.mrb[0].mxu0
    %259 = vmatprep.mubr.f32.mxu0 0.0
    %260 = vmatmul.mubr.f32.gmra.mrb[0].mxu0 %v142
    %v261 = vpop.f32.mrb[0].mxu0
    %v262 = vadd.f32 0.0, %v261
    %v263 = vpop.f32.mrb[0].mxu0
    %264 = vmatprep.mubr.f32.mxu0 0.0
    %265 = vmatmul.mubr.f32.gmra.mrb[0].mxu0 %v143
    %v266 = vpop.f32.mrb[0].mxu0
    %v267 = vadd.f32 0.0, %v266
    %v268 = vpop.f32.mrb[0].mxu0
    %269 = vmatprep.mubr.f32.mxu0 0.0
    %270 = vmatmul.mubr.f32.gmra.mrb[0].mxu0 %v144
    %v271 = vpop.f32.mrb[0].mxu0
    %v272 = vadd.f32 0.0, %v271
    %v273 = vpop.f32.mrb[0].mxu0
    %274 = vmatprep.mubr.f32.mxu0 0.0
    %275 = vmatmul.mubr.f32.gmra.mrb[0].mxu0 %v145
    %v276 = vpop.f32.mrb[0].mxu0
    %v277 = vadd.f32 0.0, %v276
    %v278 = vpop.f32.mrb[0].mxu0
    %279 = vmatprep.mubr.f32.mxu0 0.0
    %280 = vmatmul.mubr.f32.gmra.mrb[0].mxu0 %v146
    %v281 = vpop.f32.mrb[0].mxu0
    %v282 = vadd.f32 0.0, %v281
    %v283 = vpop.f32.mrb[0].mxu0
    %284 = vmatprep.mubr.f32.mxu0 0.0
    %285 = vmatmul.mubr.f32.gmra.mrb[0].mxu0 %v147
    %v286 = vpop.f32.mrb[0].mxu0
    %v287 = vadd.f32 0.0, %v286
    %v288 = vpop.f32.mrb[0].mxu0
    %289 = vmatprep.mubr.f32.mxu0 0.0
    %290 = vmatmul.mubr.f32.gmra.mrb[0].mxu0 %v148
    %v291 = vpop.f32.mrb[0].mxu0
    %v292 = vadd.f32 0.0, %v291
    %v293 = vpop.f32.mrb[0].mxu0
    %294 = vmatprep.mubr.f32.mxu0 0.0
    %295 = vmatmul.mubr.f32.gmra.mrb[0].mxu0 %v149
    %v296 = vpop.f32.mrb[0].mxu0
    %v297 = vadd.f32 0.0, %v296
    %v298 = vpop.f32.mrb[0].mxu0
    %299 = vmatprep.mubr.f32.mxu0 0.0
    %300 = vmatmul.mubr.f32.gmra.mrb[0].mxu0 %v150
    %v301 = vpop.f32.mrb[0].mxu0
    %v302 = vadd.f32 0.0, %v301
    %v303 = vpop.f32.mrb[0].mxu0
    %304 = vmatprep.mubr.f32.mxu0 0.0
    %305 = vmatmul.mubr.f32.gmra.mrb[0].mxu0 %v151
    %v306 = vpop.f32.mrb[0].mxu0
    %v307 = vadd.f32 0.0, %v306
    %v308 = vpop.f32.mrb[0].mxu0
    %309 = vmatprep.mubr.f32.mxu0 0.0
    %310 = vmatmul.mubr.f32.gmra.mrb[0].mxu0 %v152
    %v311 = vpop.f32.mrb[0].mxu0
    %v312 = vadd.f32 0.0, %v311
    %v313 = vpop.f32.mrb[0].mxu0
    %314 = vdwg.mxu0
    %v315 = vld [vmem:[#allocation7] sm:$0xff]
    %v316 = vld [vmem:[#allocation7 + $0x8] sm:$0xff]
    %v317 = vld [vmem:[#allocation7 + $0x10] sm:$0xff]
    %v318 = vld [vmem:[#allocation7 + $0x18] sm:$0xff]
    %v319 = vld [vmem:[#allocation7 + $0x20] sm:$0xff]
    %v320 = vld [vmem:[#allocation7 + $0x28] sm:$0xff]
    %v321 = vld [vmem:[#allocation7 + $0x30] sm:$0xff]
    %v322 = vld [vmem:[#allocation7 + $0x38] sm:$0xff]
    %v323 = vld [vmem:[#allocation7 + $0x40] sm:$0xff]
    %v324 = vld [vmem:[#allocation7 + $0x48] sm:$0xff]
    %v325 = vld [vmem:[#allocation7 + $0x50] sm:$0xff]
    %v326 = vld [vmem:[#allocation7 + $0x58] sm:$0xff]
    %v327 = vld [vmem:[#allocation7 + $0x60] sm:$0xff]
    %v328 = vld [vmem:[#allocation7 + $0x68] sm:$0xff]
    %v329 = vld [vmem:[#allocation7 + $0x70] sm:$0xff]
    %v330 = vld [vmem:[#allocation7 + $0x78] sm:$0xff]
    %v331 = vld [vmem:[#allocation7 + $0x80] sm:$0xff]
    %v332 = vld [vmem:[#allocation7 + $0x88] sm:$0xff]
    %v333 = vld [vmem:[#allocation7 + $0x90] sm:$0xff]
    %v334 = vld [vmem:[#allocation7 + $0x98] sm:$0xff]
    %v335 = vld [vmem:[#allocation7 + $0xa0] sm:$0xff]
    %v336 = vld [vmem:[#allocation7 + $0xa8] sm:$0xff]
    %v337 = vld [vmem:[#allocation7 + $0xb0] sm:$0xff]
    %v338 = vld [vmem:[#allocation7 + $0xb8] sm:$0xff]
    %v339 = vld [vmem:[#allocation7 + $0xc0] sm:$0xff]
    %v340 = vld [vmem:[#allocation7 + $0xc8] sm:$0xff]
    %v341 = vld [vmem:[#allocation7 + $0xd0] sm:$0xff]
    %v342 = vld [vmem:[#allocation7 + $0xd8] sm:$0xff]
    %v343 = vld [vmem:[#allocation7 + $0xe0] sm:$0xff]
    %v344 = vld [vmem:[#allocation7 + $0xe8] sm:$0xff]
    %v345 = vld [vmem:[#allocation7 + $0xf0] sm:$0xff]
    %v346 = vld [vmem:[#allocation7 + $0xf8] sm:$0xff]
    %v347 = vld [vmem:[#allocation8] sm:$0x1]
    %v349 = vlaneseq
    %v350 = vshrl.u32 %v349, 7
    %v351 = vsub.s32 0, %v350
    %v352 = vrot.slane %v347, %v351
    %354 = vmatprep.subr.mxu0 0.0
    %355 = vmatpush1.msra.mxu0 %v315
    %356 = vmatprep.subr.mxu0 0.0
    %357 = vmatpush1.msra.mxu0 %v316
    %358 = vmatprep.subr.mxu0 0.0
    %359 = vmatpush1.msra.mxu0 %v317
    %360 = vmatprep.subr.mxu0 0.0
    %361 = vmatpush1.msra.mxu0 %v318
    %362 = vmatprep.subr.mxu0 0.0
    %363 = vmatpush1.msra.mxu0 %v319
    %364 = vmatprep.subr.mxu0 0.0
    %365 = vmatpush1.msra.mxu0 %v320
    %366 = vmatprep.subr.mxu0 0.0
    %367 = vmatpush1.msra.mxu0 %v321
    %368 = vmatprep.subr.mxu0 0.0
    %369 = vmatpush1.msra.mxu0 %v322
    %370 = vmatprep.subr.mxu0 0.0
    %371 = vmatpush1.msra.mxu0 %v323
    %372 = vmatprep.subr.mxu0 0.0
    %373 = vmatpush1.msra.mxu0 %v324
    %374 = vmatprep.subr.mxu0 0.0
    %375 = vmatpush1.msra.mxu0 %v325
    %376 = vmatprep.subr.mxu0 0.0
    %377 = vmatpush1.msra.mxu0 %v326
    %378 = vmatprep.subr.mxu0 0.0
    %379 = vmatpush1.msra.mxu0 %v327
    %380 = vmatprep.subr.mxu0 0.0
    %381 = vmatpush1.msra.mxu0 %v328
    %382 = vmatprep.subr.mxu0 0.0
    %383 = vmatpush1.msra.mxu0 %v329
    %384 = vmatprep.subr.mxu0 0.0
    %385 = vmatpush1.msra.mxu0 %v330
    %386 = vmatprep.subr.mxu0 0.0
    %387 = vmatpush1.msra.mxu0 %v331
    %388 = vmatprep.subr.mxu0 0.0
    %389 = vmatpush1.msra.mxu0 %v332
    %390 = vmatprep.subr.mxu0 0.0
    %391 = vmatpush1.msra.mxu0 %v333
    %392 = vmatprep.subr.mxu0 0.0
    %393 = vmatpush1.msra.mxu0 %v334
    %394 = vmatprep.subr.mxu0 0.0
    %395 = vmatpush1.msra.mxu0 %v335
    %396 = vmatprep.subr.mxu0 0.0
    %397 = vmatpush1.msra.mxu0 %v336
    %398 = vmatprep.subr.mxu0 0.0
    %399 = vmatpush1.msra.mxu0 %v337
    %400 = vmatprep.subr.mxu0 0.0
    %401 = vmatpush1.msra.mxu0 %v338
    %402 = vmatprep.subr.mxu0 0.0
    %403 = vmatpush1.msra.mxu0 %v339
    %404 = vmatprep.subr.mxu0 0.0
    %405 = vmatpush1.msra.mxu0 %v340
    %406 = vmatprep.subr.mxu0 0.0
    %407 = vmatpush1.msra.mxu0 %v341
    %408 = vmatprep.subr.mxu0 0.0
    %409 = vmatpush1.msra.mxu0 %v342
    %410 = vmatprep.subr.mxu0 0.0
    %411 = vmatpush1.msra.mxu0 %v343
    %412 = vmatprep.subr.mxu0 0.0
    %413 = vmatpush1.msra.mxu0 %v344
    %414 = vmatprep.subr.mxu0 0.0
    %415 = vmatpush1.msra.mxu0 %v345
    %416 = vmatprep.subr.mxu0 0.0
    %417 = vmatpush1.msra.mxu0 %v346
    %418 = vmatprep.mubr.f32.mxu0 %v104
    %419 = vmatmul.mubr.f32.gmra.mrb[0].mxu0 %v237
    %v420 = vpop.f32.mrb[0].mxu0
    %v421 = vadd.f32 %v352, %v420
    %v422 = vpop.f32.mrb[0].mxu0
    %423 = vmatprep.mubr.f32.mxu0 %v105
    %424 = vmatmul.mubr.f32.gmra.mrb[0].mxu0 %v242
    %v425 = vpop.f32.mrb[0].mxu0
    %v426 = vadd.f32 %v352, %v425
    %v427 = vpop.f32.mrb[0].mxu0
    %428 = vmatprep.mubr.f32.mxu0 %v106
    %429 = vmatmul.mubr.f32.gmra.mrb[0].mxu0 %v247
    %v430 = vpop.f32.mrb[0].mxu0
    %v431 = vadd.f32 %v352, %v430
    %v432 = vpop.f32.mrb[0].mxu0
    %433 = vmatprep.mubr.f32.mxu0 %v107
    %434 = vmatmul.mubr.f32.gmra.mrb[0].mxu0 %v252
    %v435 = vpop.f32.mrb[0].mxu0
    %v436 = vadd.f32 %v352, %v435
    %v437 = vpop.f32.mrb[0].mxu0
    %438 = vmatprep.mubr.f32.mxu0 %v108
    %439 = vmatmul.mubr.f32.gmra.mrb[0].mxu0 %v257
    %v440 = vpop.f32.mrb[0].mxu0
    %v441 = vadd.f32 %v352, %v440
    %v442 = vpop.f32.mrb[0].mxu0
    %443 = vmatprep.mubr.f32.mxu0 %v109
    %444 = vmatmul.mubr.f32.gmra.mrb[0].mxu0 %v262
    %v445 = vpop.f32.mrb[0].mxu0
    %v446 = vadd.f32 %v352, %v445
    %v447 = vpop.f32.mrb[0].mxu0
    %448 = vmatprep.mubr.f32.mxu0 %v110
    %449 = vmatmul.mubr.f32.gmra.mrb[0].mxu0 %v267
    %v450 = vpop.f32.mrb[0].mxu0
    %v451 = vadd.f32 %v352, %v450
    %v452 = vpop.f32.mrb[0].mxu0
    %453 = vmatprep.mubr.f32.mxu0 %v111
    %454 = vmatmul.mubr.f32.gmra.mrb[0].mxu0 %v272
    %v455 = vpop.f32.mrb[0].mxu0
    %v456 = vadd.f32 %v352, %v455
    %v457 = vpop.f32.mrb[0].mxu0
    %458 = vmatprep.mubr.f32.mxu0 %v112
    %459 = vmatmul.mubr.f32.gmra.mrb[0].mxu0 %v277
    %v460 = vpop.f32.mrb[0].mxu0
    %v461 = vadd.f32 %v352, %v460
    %v462 = vpop.f32.mrb[0].mxu0
    %463 = vmatprep.mubr.f32.mxu0 %v113
    %464 = vmatmul.mubr.f32.gmra.mrb[0].mxu0 %v282
    %v465 = vpop.f32.mrb[0].mxu0
    %v466 = vadd.f32 %v352, %v465
    %v467 = vpop.f32.mrb[0].mxu0
    %468 = vmatprep.mubr.f32.mxu0 %v114
    %469 = vmatmul.mubr.f32.gmra.mrb[0].mxu0 %v287
    %v470 = vpop.f32.mrb[0].mxu0
    %v471 = vadd.f32 %v352, %v470
    %v472 = vpop.f32.mrb[0].mxu0
    %473 = vmatprep.mubr.f32.mxu0 %v115
    %474 = vmatmul.mubr.f32.gmra.mrb[0].mxu0 %v292
    %v475 = vpop.f32.mrb[0].mxu0
    %v476 = vadd.f32 %v352, %v475
    %v477 = vpop.f32.mrb[0].mxu0
    %478 = vmatprep.mubr.f32.mxu0 %v116
    %479 = vmatmul.mubr.f32.gmra.mrb[0].mxu0 %v297
    %v480 = vpop.f32.mrb[0].mxu0
    %v481 = vadd.f32 %v352, %v480
    %v482 = vpop.f32.mrb[0].mxu0
    %483 = vmatprep.mubr.f32.mxu0 %v117
    %484 = vmatmul.mubr.f32.gmra.mrb[0].mxu0 %v302
    %v485 = vpop.f32.mrb[0].mxu0
    %v486 = vadd.f32 %v352, %v485
    %v487 = vpop.f32.mrb[0].mxu0
    %488 = vmatprep.mubr.f32.mxu0 %v118
    %489 = vmatmul.mubr.f32.gmra.mrb[0].mxu0 %v307
    %v490 = vpop.f32.mrb[0].mxu0
    %v491 = vadd.f32 %v352, %v490
    %v492 = vpop.f32.mrb[0].mxu0
    %493 = vmatprep.mubr.f32.mxu0 %v119
    %494 = vmatmul.mubr.f32.gmra.mrb[0].mxu0 %v312
    %v495 = vpop.f32.mrb[0].mxu0
    %v496 = vadd.f32 %v352, %v495
    %v497 = vpop.f32.mrb[0].mxu0
    %498 = vdwg.mxu0
    %v499 = vmax.f32 %v421, 0.0
    %v500 = vmax.f32 %v426, 0.0
    %v501 = vmax.f32 %v431, 0.0
    %v502 = vmax.f32 %v436, 0.0
    %v503 = vmax.f32 %v441, 0.0
    %v504 = vmax.f32 %v446, 0.0
    %v505 = vmax.f32 %v451, 0.0
    %v506 = vmax.f32 %v456, 0.0
    %v507 = vmax.f32 %v461, 0.0
    %v508 = vmax.f32 %v466, 0.0
    %v509 = vmax.f32 %v471, 0.0
    %v510 = vmax.f32 %v476, 0.0
    %v511 = vmax.f32 %v481, 0.0
    %v512 = vmax.f32 %v486, 0.0
    %v513 = vmax.f32 %v491, 0.0
    %v514 = vmax.f32 %v496, 0.0
    %515 = vmatprep.subr.mxu0 0.0
    %516 = vmatpush1.msra.mxu0 %v104
    %517 = vmatprep.subr.mxu0 0.0
    %518 = vmatpush1.msra.mxu0 %v105
    %519 = vmatprep.subr.mxu0 0.0
    %520 = vmatpush1.msra.mxu0 %v106
    %521 = vmatprep.subr.mxu0 0.0
    %522 = vmatpush1.msra.mxu0 %v107
    %523 = vmatprep.subr.mxu0 0.0
    %524 = vmatpush1.msra.mxu0 %v108
    %525 = vmatprep.subr.mxu0 0.0
    %526 = vmatpush1.msra.mxu0 %v109
    %527 = vmatprep.subr.mxu0 0.0
    %528 = vmatpush1.msra.mxu0 %v110
    %529 = vmatprep.subr.mxu0 0.0
    %530 = vmatpush1.msra.mxu0 %v111
    %531 = vmatprep.subr.mxu0 0.0
    %532 = vmatpush1.msra.mxu0 %v112
    %533 = vmatprep.subr.mxu0 0.0
    %534 = vmatpush1.msra.mxu0 %v113
    %535 = vmatprep.subr.mxu0 0.0
    %536 = vmatpush1.msra.mxu0 %v114
    %537 = vmatprep.subr.mxu0 0.0
    %538 = vmatpush1.msra.mxu0 %v115
    %539 = vmatprep.subr.mxu0 0.0
    %540 = vmatpush1.msra.mxu0 %v116
    %541 = vmatprep.subr.mxu0 0.0
    %542 = vmatpush1.msra.mxu0 %v117
    %543 = vmatprep.subr.mxu0 0.0
    %544 = vmatpush1.msra.mxu0 %v118
    %545 = vmatprep.subr.mxu0 0.0
    %546 = vmatpush1.msra.mxu0 %v119
    %547 = vmatprep.subr.mxu0 0.0
    %548 = vmatpush1.msra.mxu0 0.0
    %549 = vmatprep.subr.mxu0 0.0
    %550 = vmatpush1.msra.mxu0 0.0
    %551 = vmatprep.subr.mxu0 0.0
    %552 = vmatpush1.msra.mxu0 0.0
    %553 = vmatprep.subr.mxu0 0.0
    %554 = vmatpush1.msra.mxu0 0.0
    %555 = vmatprep.subr.mxu0 0.0
    %556 = vmatpush1.msra.mxu0 0.0
    %557 = vmatprep.subr.mxu0 0.0
    %558 = vmatpush1.msra.mxu0 0.0
    %559 = vmatprep.subr.mxu0 0.0
    %560 = vmatpush1.msra.mxu0 0.0
    %561 = vmatprep.subr.mxu0 0.0
    %562 = vmatpush1.msra.mxu0 0.0
    %563 = vmatprep.subr.mxu0 0.0
    %564 = vmatpush1.msra.mxu0 0.0
    %565 = vmatprep.subr.mxu0 0.0
    %566 = vmatpush1.msra.mxu0 0.0
    %567 = vmatprep.subr.mxu0 0.0
    %568 = vmatpush1.msra.mxu0 0.0
    %569 = vmatprep.subr.mxu0 0.0
    %570 = vmatpush1.msra.mxu0 0.0
    %571 = vmatprep.subr.mxu0 0.0
    %572 = vmatpush1.msra.mxu0 0.0
    %573 = vmatprep.subr.mxu0 0.0
    %574 = vmatpush1.msra.mxu0 0.0
    %575 = vmatprep.subr.mxu0 0.0
    %576 = vmatpush1.msra.mxu0 0.0
    %577 = vmatprep.subr.mxu0 0.0
    %578 = vmatpush1.msra.mxu0 0.0
    %579 = vmatprep.mubr.f32.mxu0 0.0
    %580 = vmatmul.mubr.f32.gmra.mrb[0].mxu0 %v154
    %v581 = vpop.f32.mrb[0].mxu0
    %v582 = vadd.f32 0.0, %v581
    %v583 = vpop.f32.mrb[0].mxu0
    %584 = vmatprep.mubr.f32.mxu0 0.0
    %585 = vmatmul.mubr.f32.gmra.mrb[0].mxu0 %v155
    %v586 = vpop.f32.mrb[0].mxu0
    %v587 = vadd.f32 0.0, %v586
    %v588 = vpop.f32.mrb[0].mxu0
    %589 = vmatprep.mubr.f32.mxu0 0.0
    %590 = vmatmul.mubr.f32.gmra.mrb[0].mxu0 %v156
    %v591 = vpop.f32.mrb[0].mxu0
    %v592 = vadd.f32 0.0, %v591
    %v593 = vpop.f32.mrb[0].mxu0
    %594 = vmatprep.mubr.f32.mxu0 0.0
    %595 = vmatmul.mubr.f32.gmra.mrb[0].mxu0 %v157
    %v596 = vpop.f32.mrb[0].mxu0
    %v597 = vadd.f32 0.0, %v596
    %v598 = vpop.f32.mrb[0].mxu0
    %599 = vmatprep.mubr.f32.mxu0 0.0
    %600 = vmatmul.mubr.f32.gmra.mrb[0].mxu0 %v158
    %v601 = vpop.f32.mrb[0].mxu0
    %v602 = vadd.f32 0.0, %v601
    %v603 = vpop.f32.mrb[0].mxu0
    %604 = vmatprep.mubr.f32.mxu0 0.0
    %605 = vmatmul.mubr.f32.gmra.mrb[0].mxu0 %v159
    %v606 = vpop.f32.mrb[0].mxu0
    %v607 = vadd.f32 0.0, %v606
    %v608 = vpop.f32.mrb[0].mxu0
    %609 = vmatprep.mubr.f32.mxu0 0.0
    %610 = vmatmul.mubr.f32.gmra.mrb[0].mxu0 %v160
    %v611 = vpop.f32.mrb[0].mxu0
    %v612 = vadd.f32 0.0, %v611
    %v613 = vpop.f32.mrb[0].mxu0
    %614 = vmatprep.mubr.f32.mxu0 0.0
    %615 = vmatmul.mubr.f32.gmra.mrb[0].mxu0 %v161
    %v616 = vpop.f32.mrb[0].mxu0
    %v617 = vadd.f32 0.0, %v616
    %v618 = vpop.f32.mrb[0].mxu0
    %619 = vmatprep.mubr.f32.mxu0 0.0
    %620 = vmatmul.mubr.f32.gmra.mrb[0].mxu0 %v162
    %v621 = vpop.f32.mrb[0].mxu0
    %v622 = vadd.f32 0.0, %v621
    %v623 = vpop.f32.mrb[0].mxu0
    %624 = vmatprep.mubr.f32.mxu0 0.0
    %625 = vmatmul.mubr.f32.gmra.mrb[0].mxu0 %v163
    %v626 = vpop.f32.mrb[0].mxu0
    %v627 = vadd.f32 0.0, %v626
    %v628 = vpop.f32.mrb[0].mxu0
    %629 = vmatprep.mubr.f32.mxu0 0.0
    %630 = vmatmul.mubr.f32.gmra.mrb[0].mxu0 %v164
    %v631 = vpop.f32.mrb[0].mxu0
    %v632 = vadd.f32 0.0, %v631
    %v633 = vpop.f32.mrb[0].mxu0
    %634 = vmatprep.mubr.f32.mxu0 0.0
    %635 = vmatmul.mubr.f32.gmra.mrb[0].mxu0 %v165
    %v636 = vpop.f32.mrb[0].mxu0
    %v637 = vadd.f32 0.0, %v636
    %v638 = vpop.f32.mrb[0].mxu0
    %639 = vmatprep.mubr.f32.mxu0 0.0
    %640 = vmatmul.mubr.f32.gmra.mrb[0].mxu0 %v166
    %v641 = vpop.f32.mrb[0].mxu0
    %v642 = vadd.f32 0.0, %v641
    %v643 = vpop.f32.mrb[0].mxu0
    %644 = vmatprep.mubr.f32.mxu0 0.0
    %645 = vmatmul.mubr.f32.gmra.mrb[0].mxu0 %v167
    %v646 = vpop.f32.mrb[0].mxu0
    %v647 = vadd.f32 0.0, %v646
    %v648 = vpop.f32.mrb[0].mxu0
    %649 = vmatprep.mubr.f32.mxu0 0.0
    %650 = vmatmul.mubr.f32.gmra.mrb[0].mxu0 %v168
    %v651 = vpop.f32.mrb[0].mxu0
    %v652 = vadd.f32 0.0, %v651
    %v653 = vpop.f32.mrb[0].mxu0
    %654 = vmatprep.mubr.f32.mxu0 0.0
    %655 = vmatmul.mubr.f32.gmra.mrb[0].mxu0 %v169
    %v656 = vpop.f32.mrb[0].mxu0
    %v657 = vadd.f32 0.0, %v656
    %v658 = vpop.f32.mrb[0].mxu0
    %659 = vdwg.mxu0
    %s660 = scalar_lea.vmem [#allocation7], 256
    %v661 = vld [vmem:[%s660] sm:$0xff]
    %v662 = vld [vmem:[%s660 + $0x8] sm:$0xff]
    %v663 = vld [vmem:[%s660 + $0x10] sm:$0xff]
    %v664 = vld [vmem:[%s660 + $0x18] sm:$0xff]
    %v665 = vld [vmem:[%s660 + $0x20] sm:$0xff]
    %v666 = vld [vmem:[%s660 + $0x28] sm:$0xff]
    %v667 = vld [vmem:[%s660 + $0x30] sm:$0xff]
    %v668 = vld [vmem:[%s660 + $0x38] sm:$0xff]
    %v669 = vld [vmem:[%s660 + $0x40] sm:$0xff]
    %v670 = vld [vmem:[%s660 + $0x48] sm:$0xff]
    %v671 = vld [vmem:[%s660 + $0x50] sm:$0xff]
    %v672 = vld [vmem:[%s660 + $0x58] sm:$0xff]
    %v673 = vld [vmem:[%s660 + $0x60] sm:$0xff]
    %v674 = vld [vmem:[%s660 + $0x68] sm:$0xff]
    %v675 = vld [vmem:[%s660 + $0x70] sm:$0xff]
    %v676 = vld [vmem:[%s660 + $0x78] sm:$0xff]
    %v677 = vld [vmem:[%s660 + $0x80] sm:$0xff]
    %v678 = vld [vmem:[%s660 + $0x88] sm:$0xff]
    %v679 = vld [vmem:[%s660 + $0x90] sm:$0xff]
    %v680 = vld [vmem:[%s660 + $0x98] sm:$0xff]
    %v681 = vld [vmem:[%s660 + $0xa0] sm:$0xff]
    %v682 = vld [vmem:[%s660 + $0xa8] sm:$0xff]
    %v683 = vld [vmem:[%s660 + $0xb0] sm:$0xff]
    %v684 = vld [vmem:[%s660 + $0xb8] sm:$0xff]
    %v685 = vld [vmem:[%s660 + $0xc0] sm:$0xff]
    %v686 = vld [vmem:[%s660 + $0xc8] sm:$0xff]
    %v687 = vld [vmem:[%s660 + $0xd0] sm:$0xff]
    %v688 = vld [vmem:[%s660 + $0xd8] sm:$0xff]
    %v689 = vld [vmem:[%s660 + $0xe0] sm:$0xff]
    %v690 = vld [vmem:[%s660 + $0xe8] sm:$0xff]
    %v691 = vld [vmem:[%s660 + $0xf0] sm:$0xff]
    %v692 = vld [vmem:[%s660 + $0xf8] sm:$0xff]
    %s693 = scalar_lea.vmem [#allocation8], 1
    %v694 = vld [vmem:[%s693] sm:$0x1]
    %v696 = vlaneseq
    %v697 = vshrl.u32 %v696, 7
    %v698 = vsub.s32 0, %v697
    %v699 = vrot.slane %v694, %v698
    %701 = vmatprep.subr.mxu0 0.0
    %702 = vmatpush1.msra.mxu0 %v661
    %703 = vmatprep.subr.mxu0 0.0
    %704 = vmatpush1.msra.mxu0 %v662
    %705 = vmatprep.subr.mxu0 0.0
    %706 = vmatpush1.msra.mxu0 %v663
    %707 = vmatprep.subr.mxu0 0.0
    %708 = vmatpush1.msra.mxu0 %v664
    %709 = vmatprep.subr.mxu0 0.0
    %710 = vmatpush1.msra.mxu0 %v665
    %711 = vmatprep.subr.mxu0 0.0
    %712 = vmatpush1.msra.mxu0 %v666
    %713 = vmatprep.subr.mxu0 0.0
    %714 = vmatpush1.msra.mxu0 %v667
    %715 = vmatprep.subr.mxu0 0.0
    %716 = vmatpush1.msra.mxu0 %v668
    %717 = vmatprep.subr.mxu0 0.0
    %718 = vmatpush1.msra.mxu0 %v669
    %719 = vmatprep.subr.mxu0 0.0
    %720 = vmatpush1.msra.mxu0 %v670
    %721 = vmatprep.subr.mxu0 0.0
    %722 = vmatpush1.msra.mxu0 %v671
    %723 = vmatprep.subr.mxu0 0.0
    %724 = vmatpush1.msra.mxu0 %v672
    %725 = vmatprep.subr.mxu0 0.0
    %726 = vmatpush1.msra.mxu0 %v673
    %727 = vmatprep.subr.mxu0 0.0
    %728 = vmatpush1.msra.mxu0 %v674
    %729 = vmatprep.subr.mxu0 0.0
    %730 = vmatpush1.msra.mxu0 %v675
    %731 = vmatprep.subr.mxu0 0.0
    %732 = vmatpush1.msra.mxu0 %v676
    %733 = vmatprep.subr.mxu0 0.0
    %734 = vmatpush1.msra.mxu0 %v677
    %735 = vmatprep.subr.mxu0 0.0
    %736 = vmatpush1.msra.mxu0 %v678
    %737 = vmatprep.subr.mxu0 0.0
    %738 = vmatpush1.msra.mxu0 %v679
    %739 = vmatprep.subr.mxu0 0.0
    %740 = vmatpush1.msra.mxu0 %v680
    %741 = vmatprep.subr.mxu0 0.0
    %742 = vmatpush1.msra.mxu0 %v681
    %743 = vmatprep.subr.mxu0 0.0
    %744 = vmatpush1.msra.mxu0 %v682
    %745 = vmatprep.subr.mxu0 0.0
    %746 = vmatpush1.msra.mxu0 %v683
    %747 = vmatprep.subr.mxu0 0.0
    %748 = vmatpush1.msra.mxu0 %v684
    %749 = vmatprep.subr.mxu0 0.0
    %750 = vmatpush1.msra.mxu0 %v685
    %751 = vmatprep.subr.mxu0 0.0
    %752 = vmatpush1.msra.mxu0 %v686
    %753 = vmatprep.subr.mxu0 0.0
    %754 = vmatpush1.msra.mxu0 %v687
    %755 = vmatprep.subr.mxu0 0.0
    %756 = vmatpush1.msra.mxu0 %v688
    %757 = vmatprep.subr.mxu0 0.0
    %758 = vmatpush1.msra.mxu0 %v689
    %759 = vmatprep.subr.mxu0 0.0
    %760 = vmatpush1.msra.mxu0 %v690
    %761 = vmatprep.subr.mxu0 0.0
    %762 = vmatpush1.msra.mxu0 %v691
    %763 = vmatprep.subr.mxu0 0.0
    %764 = vmatpush1.msra.mxu0 %v692
    %765 = vmatprep.mubr.f32.mxu0 %v121
    %766 = vmatmul.mubr.f32.gmra.mrb[0].mxu0 %v582
    %v767 = vpop.f32.mrb[0].mxu0
    %v768 = vadd.f32 %v699, %v767
    %v769 = vpop.f32.mrb[0].mxu0
    %770 = vmatprep.mubr.f32.mxu0 %v122
    %771 = vmatmul.mubr.f32.gmra.mrb[0].mxu0 %v587
    %v772 = vpop.f32.mrb[0].mxu0
    %v773 = vadd.f32 %v699, %v772
    %v774 = vpop.f32.mrb[0].mxu0
    %775 = vmatprep.mubr.f32.mxu0 %v123
    %776 = vmatmul.mubr.f32.gmra.mrb[0].mxu0 %v592
    %v777 = vpop.f32.mrb[0].mxu0
    %v778 = vadd.f32 %v699, %v777
    %v779 = vpop.f32.mrb[0].mxu0
    %780 = vmatprep.mubr.f32.mxu0 %v124
    %781 = vmatmul.mubr.f32.gmra.mrb[0].mxu0 %v597
    %v782 = vpop.f32.mrb[0].mxu0
    %v783 = vadd.f32 %v699, %v782
    %v784 = vpop.f32.mrb[0].mxu0
    %785 = vmatprep.mubr.f32.mxu0 %v125
    %786 = vmatmul.mubr.f32.gmra.mrb[0].mxu0 %v602
    %v787 = vpop.f32.mrb[0].mxu0
    %v788 = vadd.f32 %v699, %v787
    %v789 = vpop.f32.mrb[0].mxu0
    %790 = vmatprep.mubr.f32.mxu0 %v126
    %791 = vmatmul.mubr.f32.gmra.mrb[0].mxu0 %v607
    %v792 = vpop.f32.mrb[0].mxu0
    %v793 = vadd.f32 %v699, %v792
    %v794 = vpop.f32.mrb[0].mxu0
    %795 = vmatprep.mubr.f32.mxu0 %v127
    %796 = vmatmul.mubr.f32.gmra.mrb[0].mxu0 %v612
    %v797 = vpop.f32.mrb[0].mxu0
    %v798 = vadd.f32 %v699, %v797
    %v799 = vpop.f32.mrb[0].mxu0
    %800 = vmatprep.mubr.f32.mxu0 %v128
    %801 = vmatmul.mubr.f32.gmra.mrb[0].mxu0 %v617
    %v802 = vpop.f32.mrb[0].mxu0
    %v803 = vadd.f32 %v699, %v802
    %v804 = vpop.f32.mrb[0].mxu0
    %805 = vmatprep.mubr.f32.mxu0 %v129
    %806 = vmatmul.mubr.f32.gmra.mrb[0].mxu0 %v622
    %v807 = vpop.f32.mrb[0].mxu0
    %v808 = vadd.f32 %v699, %v807
    %v809 = vpop.f32.mrb[0].mxu0
    %810 = vmatprep.mubr.f32.mxu0 %v130
    %811 = vmatmul.mubr.f32.gmra.mrb[0].mxu0 %v627
    %v812 = vpop.f32.mrb[0].mxu0
    %v813 = vadd.f32 %v699, %v812
    %v814 = vpop.f32.mrb[0].mxu0
    %815 = vmatprep.mubr.f32.mxu0 %v131
    %816 = vmatmul.mubr.f32.gmra.mrb[0].mxu0 %v632
    %v817 = vpop.f32.mrb[0].mxu0
    %v818 = vadd.f32 %v699, %v817
    %v819 = vpop.f32.mrb[0].mxu0
    %820 = vmatprep.mubr.f32.mxu0 %v132
    %821 = vmatmul.mubr.f32.gmra.mrb[0].mxu0 %v637
    %v822 = vpop.f32.mrb[0].mxu0
    %v823 = vadd.f32 %v699, %v822
    %v824 = vpop.f32.mrb[0].mxu0
    %825 = vmatprep.mubr.f32.mxu0 %v133
    %826 = vmatmul.mubr.f32.gmra.mrb[0].mxu0 %v642
    %v827 = vpop.f32.mrb[0].mxu0
    %v828 = vadd.f32 %v699, %v827
    %v829 = vpop.f32.mrb[0].mxu0
    %830 = vmatprep.mubr.f32.mxu0 %v134
    %831 = vmatmul.mubr.f32.gmra.mrb[0].mxu0 %v647
    %v832 = vpop.f32.mrb[0].mxu0
    %v833 = vadd.f32 %v699, %v832
    %v834 = vpop.f32.mrb[0].mxu0
    %835 = vmatprep.mubr.f32.mxu0 %v135
    %836 = vmatmul.mubr.f32.gmra.mrb[0].mxu0 %v652
    %v837 = vpop.f32.mrb[0].mxu0
    %v838 = vadd.f32 %v699, %v837
    %v839 = vpop.f32.mrb[0].mxu0
    %840 = vmatprep.mubr.f32.mxu0 %v136
    %841 = vmatmul.mubr.f32.gmra.mrb[0].mxu0 %v657
    %v842 = vpop.f32.mrb[0].mxu0
    %v843 = vadd.f32 %v699, %v842
    %v844 = vpop.f32.mrb[0].mxu0
    %845 = vdwg.mxu0
    %v846 = vmax.f32 %v768, 0.0
    %v847 = vmax.f32 %v773, 0.0
    %v848 = vmax.f32 %v778, 0.0
    %v849 = vmax.f32 %v783, 0.0
    %v850 = vmax.f32 %v788, 0.0
    %v851 = vmax.f32 %v793, 0.0
    %v852 = vmax.f32 %v798, 0.0
    %v853 = vmax.f32 %v803, 0.0
    %v854 = vmax.f32 %v808, 0.0
    %v855 = vmax.f32 %v813, 0.0
    %v856 = vmax.f32 %v818, 0.0
    %v857 = vmax.f32 %v823, 0.0
    %v858 = vmax.f32 %v828, 0.0
    %v859 = vmax.f32 %v833, 0.0
    %v860 = vmax.f32 %v838, 0.0
    %v861 = vmax.f32 %v843, 0.0
    %862 = vmatprep.subr.mxu0 0.0
    %863 = vmatpush1.msra.mxu0 %v846
    %864 = vmatprep.subr.mxu0 0.0
    %865 = vmatpush1.msra.mxu0 %v847
    %866 = vmatprep.subr.mxu0 0.0
    %867 = vmatpush1.msra.mxu0 %v848
    %868 = vmatprep.subr.mxu0 0.0
    %869 = vmatpush1.msra.mxu0 %v849
    %870 = vmatprep.subr.mxu0 0.0
    %871 = vmatpush1.msra.mxu0 %v850
    %872 = vmatprep.subr.mxu0 0.0
    %873 = vmatpush1.msra.mxu0 %v851
    %874 = vmatprep.subr.mxu0 0.0
    %875 = vmatpush1.msra.mxu0 %v852
    %876 = vmatprep.subr.mxu0 0.0
    %877 = vmatpush1.msra.mxu0 %v853
    %878 = vmatprep.subr.mxu0 0.0
    %879 = vmatpush1.msra.mxu0 %v854
    %880 = vmatprep.subr.mxu0 0.0
    %881 = vmatpush1.msra.mxu0 %v855
    %882 = vmatprep.subr.mxu0 0.0
    %883 = vmatpush1.msra.mxu0 %v856
    %884 = vmatprep.subr.mxu0 0.0
    %885 = vmatpush1.msra.mxu0 %v857
    %886 = vmatprep.subr.mxu0 0.0
    %887 = vmatpush1.msra.mxu0 %v858
    %888 = vmatprep.subr.mxu0 0.0
    %889 = vmatpush1.msra.mxu0 %v859
    %890 = vmatprep.subr.mxu0 0.0
    %891 = vmatpush1.msra.mxu0 %v860
    %892 = vmatprep.subr.mxu0 0.0
    %893 = vmatpush1.msra.mxu0 %v861
    %894 = vmatprep.subr.mxu0 0.0
    %895 = vmatpush1.msra.mxu0 0.0
    %896 = vmatprep.subr.mxu0 0.0
    %897 = vmatpush1.msra.mxu0 0.0
    %898 = vmatprep.subr.mxu0 0.0
    %899 = vmatpush1.msra.mxu0 0.0
    %900 = vmatprep.subr.mxu0 0.0
    %901 = vmatpush1.msra.mxu0 0.0
    %902 = vmatprep.subr.mxu0 0.0
    %903 = vmatpush1.msra.mxu0 0.0
    %904 = vmatprep.subr.mxu0 0.0
    %905 = vmatpush1.msra.mxu0 0.0
    %906 = vmatprep.subr.mxu0 0.0
    %907 = vmatpush1.msra.mxu0 0.0
    %908 = vmatprep.subr.mxu0 0.0
    %909 = vmatpush1.msra.mxu0 0.0
    %910 = vmatprep.subr.mxu0 0.0
    %911 = vmatpush1.msra.mxu0 0.0
    %912 = vmatprep.subr.mxu0 0.0
    %913 = vmatpush1.msra.mxu0 0.0
    %914 = vmatprep.subr.mxu0 0.0
    %915 = vmatpush1.msra.mxu0 0.0
    %916 = vmatprep.subr.mxu0 0.0
    %917 = vmatpush1.msra.mxu0 0.0
    %918 = vmatprep.subr.mxu0 0.0
    %919 = vmatpush1.msra.mxu0 0.0
    %920 = vmatprep.subr.mxu0 0.0
    %921 = vmatpush1.msra.mxu0 0.0
    %922 = vmatprep.subr.mxu0 0.0
    %923 = vmatpush1.msra.mxu0 0.0
    %924 = vmatprep.subr.mxu0 0.0
    %925 = vmatpush1.msra.mxu0 0.0
    %926 = vmatprep.mubr.f32.mxu0 0.0
    %927 = vmatmul.mubr.f32.gmra.mrb[0].mxu0 %v137
    %v928 = vpop.f32.mrb[0].mxu0
    %v929 = vadd.f32 0.0, %v928
    %v930 = vpop.f32.mrb[0].mxu0
    %931 = vmatprep.mubr.f32.mxu0 0.0
    %932 = vmatmul.mubr.f32.gmra.mrb[0].mxu0 %v138
    %v933 = vpop.f32.mrb[0].mxu0
    %v934 = vadd.f32 0.0, %v933
    %v935 = vpop.f32.mrb[0].mxu0
    %936 = vmatprep.mubr.f32.mxu0 0.0
    %937 = vmatmul.mubr.f32.gmra.mrb[0].mxu0 %v139
    %v938 = vpop.f32.mrb[0].mxu0
    %v939 = vadd.f32 0.0, %v938
    %v940 = vpop.f32.mrb[0].mxu0
    %941 = vmatprep.mubr.f32.mxu0 0.0
    %942 = vmatmul.mubr.f32.gmra.mrb[0].mxu0 %v140
    %v943 = vpop.f32.mrb[0].mxu0
    %v944 = vadd.f32 0.0, %v943
    %v945 = vpop.f32.mrb[0].mxu0
    %946 = vmatprep.mubr.f32.mxu0 0.0
    %947 = vmatmul.mubr.f32.gmra.mrb[0].mxu0 %v141
    %v948 = vpop.f32.mrb[0].mxu0
    %v949 = vadd.f32 0.0, %v948
    %v950 = vpop.f32.mrb[0].mxu0
    %951 = vmatprep.mubr.f32.mxu0 0.0
    %952 = vmatmul.mubr.f32.gmra.mrb[0].mxu0 %v142
    %v953 = vpop.f32.mrb[0].mxu0
    %v954 = vadd.f32 0.0, %v953
    %v955 = vpop.f32.mrb[0].mxu0
    %956 = vmatprep.mubr.f32.mxu0 0.0
    %957 = vmatmul.mubr.f32.gmra.mrb[0].mxu0 %v143
    %v958 = vpop.f32.mrb[0].mxu0
    %v959 = vadd.f32 0.0, %v958
    %v960 = vpop.f32.mrb[0].mxu0
    %961 = vmatprep.mubr.f32.mxu0 0.0
    %962 = vmatmul.mubr.f32.gmra.mrb[0].mxu0 %v144
    %v963 = vpop.f32.mrb[0].mxu0
    %v964 = vadd.f32 0.0, %v963
    %v965 = vpop.f32.mrb[0].mxu0
    %966 = vmatprep.mubr.f32.mxu0 0.0
    %967 = vmatmul.mubr.f32.gmra.mrb[0].mxu0 %v145
    %v968 = vpop.f32.mrb[0].mxu0
    %v969 = vadd.f32 0.0, %v968
    %v970 = vpop.f32.mrb[0].mxu0
    %971 = vmatprep.mubr.f32.mxu0 0.0
    %972 = vmatmul.mubr.f32.gmra.mrb[0].mxu0 %v146
    %v973 = vpop.f32.mrb[0].mxu0
    %v974 = vadd.f32 0.0, %v973
    %v975 = vpop.f32.mrb[0].mxu0
    %976 = vmatprep.mubr.f32.mxu0 0.0
    %977 = vmatmul.mubr.f32.gmra.mrb[0].mxu0 %v147
    %v978 = vpop.f32.mrb[0].mxu0
    %v979 = vadd.f32 0.0, %v978
    %v980 = vpop.f32.mrb[0].mxu0
    %981 = vmatprep.mubr.f32.mxu0 0.0
    %982 = vmatmul.mubr.f32.gmra.mrb[0].mxu0 %v148
    %v983 = vpop.f32.mrb[0].mxu0
    %v984 = vadd.f32 0.0, %v983
    %v985 = vpop.f32.mrb[0].mxu0
    %986 = vmatprep.mubr.f32.mxu0 0.0
    %987 = vmatmul.mubr.f32.gmra.mrb[0].mxu0 %v149
    %v988 = vpop.f32.mrb[0].mxu0
    %v989 = vadd.f32 0.0, %v988
    %v990 = vpop.f32.mrb[0].mxu0
    %991 = vmatprep.mubr.f32.mxu0 0.0
    %992 = vmatmul.mubr.f32.gmra.mrb[0].mxu0 %v150
    %v993 = vpop.f32.mrb[0].mxu0
    %v994 = vadd.f32 0.0, %v993
    %v995 = vpop.f32.mrb[0].mxu0
    %996 = vmatprep.mubr.f32.mxu0 0.0
    %997 = vmatmul.mubr.f32.gmra.mrb[0].mxu0 %v151
    %v998 = vpop.f32.mrb[0].mxu0
    %v999 = vadd.f32 0.0, %v998
    %v1000 = vpop.f32.mrb[0].mxu0
    %1001 = vmatprep.mubr.f32.mxu0 0.0
    %1002 = vmatmul.mubr.f32.gmra.mrb[0].mxu0 %v152
    %v1003 = vpop.f32.mrb[0].mxu0
    %v1004 = vadd.f32 0.0, %v1003
    %v1005 = vpop.f32.mrb[0].mxu0
    %1006 = vdwg.mxu0
    %s1007 = scalar_lea.vmem [#allocation7], 512
    %v1008 = vld [vmem:[%s1007] sm:$0xff]
    %v1009 = vld [vmem:[%s1007 + $0x8] sm:$0xff]
    %v1010 = vld [vmem:[%s1007 + $0x10] sm:$0xff]
    %v1011 = vld [vmem:[%s1007 + $0x18] sm:$0xff]
    %v1012 = vld [vmem:[%s1007 + $0x20] sm:$0xff]
    %v1013 = vld [vmem:[%s1007 + $0x28] sm:$0xff]
    %v1014 = vld [vmem:[%s1007 + $0x30] sm:$0xff]
    %v1015 = vld [vmem:[%s1007 + $0x38] sm:$0xff]
    %v1016 = vld [vmem:[%s1007 + $0x40] sm:$0xff]
    %v1017 = vld [vmem:[%s1007 + $0x48] sm:$0xff]
    %v1018 = vld [vmem:[%s1007 + $0x50] sm:$0xff]
    %v1019 = vld [vmem:[%s1007 + $0x58] sm:$0xff]
    %v1020 = vld [vmem:[%s1007 + $0x60] sm:$0xff]
    %v1021 = vld [vmem:[%s1007 + $0x68] sm:$0xff]
    %v1022 = vld [vmem:[%s1007 + $0x70] sm:$0xff]
    %v1023 = vld [vmem:[%s1007 + $0x78] sm:$0xff]
    %v1024 = vld [vmem:[%s1007 + $0x80] sm:$0xff]
    %v1025 = vld [vmem:[%s1007 + $0x88] sm:$0xff]
    %v1026 = vld [vmem:[%s1007 + $0x90] sm:$0xff]
    %v1027 = vld [vmem:[%s1007 + $0x98] sm:$0xff]
    %v1028 = vld [vmem:[%s1007 + $0xa0] sm:$0xff]
    %v1029 = vld [vmem:[%s1007 + $0xa8] sm:$0xff]
    %v1030 = vld [vmem:[%s1007 + $0xb0] sm:$0xff]
    %v1031 = vld [vmem:[%s1007 + $0xb8] sm:$0xff]
    %v1032 = vld [vmem:[%s1007 + $0xc0] sm:$0xff]
    %v1033 = vld [vmem:[%s1007 + $0xc8] sm:$0xff]
    %v1034 = vld [vmem:[%s1007 + $0xd0] sm:$0xff]
    %v1035 = vld [vmem:[%s1007 + $0xd8] sm:$0xff]
    %v1036 = vld [vmem:[%s1007 + $0xe0] sm:$0xff]
    %v1037 = vld [vmem:[%s1007 + $0xe8] sm:$0xff]
    %v1038 = vld [vmem:[%s1007 + $0xf0] sm:$0xff]
    %v1039 = vld [vmem:[%s1007 + $0xf8] sm:$0xff]
    %s1040 = scalar_lea.vmem [#allocation8], 2
    %v1041 = vld [vmem:[%s1040] sm:$0x1]
    %v1043 = vlaneseq
    %v1044 = vshrl.u32 %v1043, 7
    %v1045 = vsub.s32 0, %v1044
    %v1046 = vrot.slane %v1041, %v1045
    %1048 = vmatprep.subr.mxu0 0.0
    %1049 = vmatpush1.msra.mxu0 %v1008
    %1050 = vmatprep.subr.mxu0 0.0
    %1051 = vmatpush1.msra.mxu0 %v1009
    %1052 = vmatprep.subr.mxu0 0.0
    %1053 = vmatpush1.msra.mxu0 %v1010
    %1054 = vmatprep.subr.mxu0 0.0
    %1055 = vmatpush1.msra.mxu0 %v1011
    %1056 = vmatprep.subr.mxu0 0.0
    %1057 = vmatpush1.msra.mxu0 %v1012
    %1058 = vmatprep.subr.mxu0 0.0
    %1059 = vmatpush1.msra.mxu0 %v1013
    %1060 = vmatprep.subr.mxu0 0.0
    %1061 = vmatpush1.msra.mxu0 %v1014
    %1062 = vmatprep.subr.mxu0 0.0
    %1063 = vmatpush1.msra.mxu0 %v1015
    %1064 = vmatprep.subr.mxu0 0.0
    %1065 = vmatpush1.msra.mxu0 %v1016
    %1066 = vmatprep.subr.mxu0 0.0
    %1067 = vmatpush1.msra.mxu0 %v1017
    %1068 = vmatprep.subr.mxu0 0.0
    %1069 = vmatpush1.msra.mxu0 %v1018
    %1070 = vmatprep.subr.mxu0 0.0
    %1071 = vmatpush1.msra.mxu0 %v1019
    %1072 = vmatprep.subr.mxu0 0.0
    %1073 = vmatpush1.msra.mxu0 %v1020
    %1074 = vmatprep.subr.mxu0 0.0
    %1075 = vmatpush1.msra.mxu0 %v1021
    %1076 = vmatprep.subr.mxu0 0.0
    %1077 = vmatpush1.msra.mxu0 %v1022
    %1078 = vmatprep.subr.mxu0 0.0
    %1079 = vmatpush1.msra.mxu0 %v1023
    %1080 = vmatprep.subr.mxu0 0.0
    %1081 = vmatpush1.msra.mxu0 %v1024
    %1082 = vmatprep.subr.mxu0 0.0
    %1083 = vmatpush1.msra.mxu0 %v1025
    %1084 = vmatprep.subr.mxu0 0.0
    %1085 = vmatpush1.msra.mxu0 %v1026
    %1086 = vmatprep.subr.mxu0 0.0
    %1087 = vmatpush1.msra.mxu0 %v1027
    %1088 = vmatprep.subr.mxu0 0.0
    %1089 = vmatpush1.msra.mxu0 %v1028
    %1090 = vmatprep.subr.mxu0 0.0
    %1091 = vmatpush1.msra.mxu0 %v1029
    %1092 = vmatprep.subr.mxu0 0.0
    %1093 = vmatpush1.msra.mxu0 %v1030
    %1094 = vmatprep.subr.mxu0 0.0
    %1095 = vmatpush1.msra.mxu0 %v1031
    %1096 = vmatprep.subr.mxu0 0.0
    %1097 = vmatpush1.msra.mxu0 %v1032
    %1098 = vmatprep.subr.mxu0 0.0
    %1099 = vmatpush1.msra.mxu0 %v1033
    %1100 = vmatprep.subr.mxu0 0.0
    %1101 = vmatpush1.msra.mxu0 %v1034
    %1102 = vmatprep.subr.mxu0 0.0
    %1103 = vmatpush1.msra.mxu0 %v1035
    %1104 = vmatprep.subr.mxu0 0.0
    %1105 = vmatpush1.msra.mxu0 %v1036
    %1106 = vmatprep.subr.mxu0 0.0
    %1107 = vmatpush1.msra.mxu0 %v1037
    %1108 = vmatprep.subr.mxu0 0.0
    %1109 = vmatpush1.msra.mxu0 %v1038
    %1110 = vmatprep.subr.mxu0 0.0
    %1111 = vmatpush1.msra.mxu0 %v1039
    %1112 = vmatprep.mubr.f32.mxu0 %v499
    %1113 = vmatmul.mubr.f32.gmra.mrb[0].mxu0 %v929
    %v1114 = vpop.f32.mrb[0].mxu0
    %v1115 = vadd.f32 %v1046, %v1114
    %v1116 = vpop.f32.mrb[0].mxu0
    %1117 = vmatprep.mubr.f32.mxu0 %v500
    %1118 = vmatmul.mubr.f32.gmra.mrb[0].mxu0 %v934
    %v1119 = vpop.f32.mrb[0].mxu0
    %v1120 = vadd.f32 %v1046, %v1119
    %v1121 = vpop.f32.mrb[0].mxu0
    %1122 = vmatprep.mubr.f32.mxu0 %v501
    %1123 = vmatmul.mubr.f32.gmra.mrb[0].mxu0 %v939
    %v1124 = vpop.f32.mrb[0].mxu0
    %v1125 = vadd.f32 %v1046, %v1124
    %v1126 = vpop.f32.mrb[0].mxu0
    %1127 = vmatprep.mubr.f32.mxu0 %v502
    %1128 = vmatmul.mubr.f32.gmra.mrb[0].mxu0 %v944
    %v1129 = vpop.f32.mrb[0].mxu0
    %v1130 = vadd.f32 %v1046, %v1129
    %v1131 = vpop.f32.mrb[0].mxu0
    %1132 = vmatprep.mubr.f32.mxu0 %v503
    %1133 = vmatmul.mubr.f32.gmra.mrb[0].mxu0 %v949
    %v1134 = vpop.f32.mrb[0].mxu0
    %v1135 = vadd.f32 %v1046, %v1134
    %v1136 = vpop.f32.mrb[0].mxu0
    %1137 = vmatprep.mubr.f32.mxu0 %v504
    %1138 = vmatmul.mubr.f32.gmra.mrb[0].mxu0 %v954
    %v1139 = vpop.f32.mrb[0].mxu0
    %v1140 = vadd.f32 %v1046, %v1139
    %v1141 = vpop.f32.mrb[0].mxu0
    %1142 = vmatprep.mubr.f32.mxu0 %v505
    %1143 = vmatmul.mubr.f32.gmra.mrb[0].mxu0 %v959
    %v1144 = vpop.f32.mrb[0].mxu0
    %v1145 = vadd.f32 %v1046, %v1144
    %v1146 = vpop.f32.mrb[0].mxu0
    %1147 = vmatprep.mubr.f32.mxu0 %v506
    %1148 = vmatmul.mubr.f32.gmra.mrb[0].mxu0 %v964
    %v1149 = vpop.f32.mrb[0].mxu0
    %v1150 = vadd.f32 %v1046, %v1149
    %v1151 = vpop.f32.mrb[0].mxu0
    %1152 = vmatprep.mubr.f32.mxu0 %v507
    %1153 = vmatmul.mubr.f32.gmra.mrb[0].mxu0 %v969
    %v1154 = vpop.f32.mrb[0].mxu0
    %v1155 = vadd.f32 %v1046, %v1154
    %v1156 = vpop.f32.mrb[0].mxu0
    %1157 = vmatprep.mubr.f32.mxu0 %v508
    %1158 = vmatmul.mubr.f32.gmra.mrb[0].mxu0 %v974
    %v1159 = vpop.f32.mrb[0].mxu0
    %v1160 = vadd.f32 %v1046, %v1159
    %v1161 = vpop.f32.mrb[0].mxu0
    %1162 = vmatprep.mubr.f32.mxu0 %v509
    %1163 = vmatmul.mubr.f32.gmra.mrb[0].mxu0 %v979
    %v1164 = vpop.f32.mrb[0].mxu0
    %v1165 = vadd.f32 %v1046, %v1164
    %v1166 = vpop.f32.mrb[0].mxu0
    %1167 = vmatprep.mubr.f32.mxu0 %v510
    %1168 = vmatmul.mubr.f32.gmra.mrb[0].mxu0 %v984
    %v1169 = vpop.f32.mrb[0].mxu0
    %v1170 = vadd.f32 %v1046, %v1169
    %v1171 = vpop.f32.mrb[0].mxu0
    %1172 = vmatprep.mubr.f32.mxu0 %v511
    %1173 = vmatmul.mubr.f32.gmra.mrb[0].mxu0 %v989
    %v1174 = vpop.f32.mrb[0].mxu0
    %v1175 = vadd.f32 %v1046, %v1174
    %v1176 = vpop.f32.mrb[0].mxu0
    %1177 = vmatprep.mubr.f32.mxu0 %v512
    %1178 = vmatmul.mubr.f32.gmra.mrb[0].mxu0 %v994
    %v1179 = vpop.f32.mrb[0].mxu0
    %v1180 = vadd.f32 %v1046, %v1179
    %v1181 = vpop.f32.mrb[0].mxu0
    %1182 = vmatprep.mubr.f32.mxu0 %v513
    %1183 = vmatmul.mubr.f32.gmra.mrb[0].mxu0 %v999
    %v1184 = vpop.f32.mrb[0].mxu0
    %v1185 = vadd.f32 %v1046, %v1184
    %v1186 = vpop.f32.mrb[0].mxu0
    %1187 = vmatprep.mubr.f32.mxu0 %v514
    %1188 = vmatmul.mubr.f32.gmra.mrb[0].mxu0 %v1004
    %v1189 = vpop.f32.mrb[0].mxu0
    %v1190 = vadd.f32 %v1046, %v1189
    %v1191 = vpop.f32.mrb[0].mxu0
    %1192 = vdwg.mxu0
    %v1193 = vmax.f32 %v1115, 0.0
    %v1194 = vmax.f32 %v1120, 0.0
    %v1195 = vmax.f32 %v1125, 0.0
    %v1196 = vmax.f32 %v1130, 0.0
    %v1197 = vmax.f32 %v1135, 0.0
    %v1198 = vmax.f32 %v1140, 0.0
    %v1199 = vmax.f32 %v1145, 0.0
    %v1200 = vmax.f32 %v1150, 0.0
    %v1201 = vmax.f32 %v1155, 0.0
    %v1202 = vmax.f32 %v1160, 0.0
    %v1203 = vmax.f32 %v1165, 0.0
    %v1204 = vmax.f32 %v1170, 0.0
    %v1205 = vmax.f32 %v1175, 0.0
    %v1206 = vmax.f32 %v1180, 0.0
    %v1207 = vmax.f32 %v1185, 0.0
    %v1208 = vmax.f32 %v1190, 0.0
    %1209 = vmatprep.subr.mxu0 0.0
    %1210 = vmatpush1.msra.mxu0 %v499
    %1211 = vmatprep.subr.mxu0 0.0
    %1212 = vmatpush1.msra.mxu0 %v500
    %1213 = vmatprep.subr.mxu0 0.0
    %1214 = vmatpush1.msra.mxu0 %v501
    %1215 = vmatprep.subr.mxu0 0.0
    %1216 = vmatpush1.msra.mxu0 %v502
    %1217 = vmatprep.subr.mxu0 0.0
    %1218 = vmatpush1.msra.mxu0 %v503
    %1219 = vmatprep.subr.mxu0 0.0
    %1220 = vmatpush1.msra.mxu0 %v504
    %1221 = vmatprep.subr.mxu0 0.0
    %1222 = vmatpush1.msra.mxu0 %v505
    %1223 = vmatprep.subr.mxu0 0.0
    %1224 = vmatpush1.msra.mxu0 %v506
    %1225 = vmatprep.subr.mxu0 0.0
    %1226 = vmatpush1.msra.mxu0 %v507
    %1227 = vmatprep.subr.mxu0 0.0
    %1228 = vmatpush1.msra.mxu0 %v508
    %1229 = vmatprep.subr.mxu0 0.0
    %1230 = vmatpush1.msra.mxu0 %v509
    %1231 = vmatprep.subr.mxu0 0.0
    %1232 = vmatpush1.msra.mxu0 %v510
    %1233 = vmatprep.subr.mxu0 0.0
    %1234 = vmatpush1.msra.mxu0 %v511
    %1235 = vmatprep.subr.mxu0 0.0
    %1236 = vmatpush1.msra.mxu0 %v512
    %1237 = vmatprep.subr.mxu0 0.0
    %1238 = vmatpush1.msra.mxu0 %v513
    %1239 = vmatprep.subr.mxu0 0.0
    %1240 = vmatpush1.msra.mxu0 %v514
    %1241 = vmatprep.subr.mxu0 0.0
    %1242 = vmatpush1.msra.mxu0 0.0
    %1243 = vmatprep.subr.mxu0 0.0
    %1244 = vmatpush1.msra.mxu0 0.0
    %1245 = vmatprep.subr.mxu0 0.0
    %1246 = vmatpush1.msra.mxu0 0.0
    %1247 = vmatprep.subr.mxu0 0.0
    %1248 = vmatpush1.msra.mxu0 0.0
    %1249 = vmatprep.subr.mxu0 0.0
    %1250 = vmatpush1.msra.mxu0 0.0
    %1251 = vmatprep.subr.mxu0 0.0
    %1252 = vmatpush1.msra.mxu0 0.0
    %1253 = vmatprep.subr.mxu0 0.0
    %1254 = vmatpush1.msra.mxu0 0.0
    %1255 = vmatprep.subr.mxu0 0.0
    %1256 = vmatpush1.msra.mxu0 0.0
    %1257 = vmatprep.subr.mxu0 0.0
    %1258 = vmatpush1.msra.mxu0 0.0
    %1259 = vmatprep.subr.mxu0 0.0
    %1260 = vmatpush1.msra.mxu0 0.0
    %1261 = vmatprep.subr.mxu0 0.0
    %1262 = vmatpush1.msra.mxu0 0.0
    %1263 = vmatprep.subr.mxu0 0.0
    %1264 = vmatpush1.msra.mxu0 0.0
    %1265 = vmatprep.subr.mxu0 0.0
    %1266 = vmatpush1.msra.mxu0 0.0
    %1267 = vmatprep.subr.mxu0 0.0
    %1268 = vmatpush1.msra.mxu0 0.0
    %1269 = vmatprep.subr.mxu0 0.0
    %1270 = vmatpush1.msra.mxu0 0.0
    %1271 = vmatprep.subr.mxu0 0.0
    %1272 = vmatpush1.msra.mxu0 0.0
    %1273 = vmatprep.mubr.f32.mxu0 0.0
    %1274 = vmatmul.mubr.f32.gmra.mrb[0].mxu0 %v154
    %v1275 = vpop.f32.mrb[0].mxu0
    %v1276 = vadd.f32 0.0, %v1275
    %v1277 = vpop.f32.mrb[0].mxu0
    %1278 = vmatprep.mubr.f32.mxu0 0.0
    %1279 = vmatmul.mubr.f32.gmra.mrb[0].mxu0 %v155
    %v1280 = vpop.f32.mrb[0].mxu0
    %v1281 = vadd.f32 0.0, %v1280
    %v1282 = vpop.f32.mrb[0].mxu0
    %1283 = vmatprep.mubr.f32.mxu0 0.0
    %1284 = vmatmul.mubr.f32.gmra.mrb[0].mxu0 %v156
    %v1285 = vpop.f32.mrb[0].mxu0
    %v1286 = vadd.f32 0.0, %v1285
    %v1287 = vpop.f32.mrb[0].mxu0
    %1288 = vmatprep.mubr.f32.mxu0 0.0
    %1289 = vmatmul.mubr.f32.gmra.mrb[0].mxu0 %v157
    %v1290 = vpop.f32.mrb[0].mxu0
    %v1291 = vadd.f32 0.0, %v1290
    %v1292 = vpop.f32.mrb[0].mxu0
    %1293 = vmatprep.mubr.f32.mxu0 0.0
    %1294 = vmatmul.mubr.f32.gmra.mrb[0].mxu0 %v158
    %v1295 = vpop.f32.mrb[0].mxu0
    %v1296 = vadd.f32 0.0, %v1295
    %v1297 = vpop.f32.mrb[0].mxu0
    %1298 = vmatprep.mubr.f32.mxu0 0.0
    %1299 = vmatmul.mubr.f32.gmra.mrb[0].mxu0 %v159
    %v1300 = vpop.f32.mrb[0].mxu0
    %v1301 = vadd.f32 0.0, %v1300
    %v1302 = vpop.f32.mrb[0].mxu0
    %1303 = vmatprep.mubr.f32.mxu0 0.0
    %1304 = vmatmul.mubr.f32.gmra.mrb[0].mxu0 %v160
    %v1305 = vpop.f32.mrb[0].mxu0
    %v1306 = vadd.f32 0.0, %v1305
    %v1307 = vpop.f32.mrb[0].mxu0
    %1308 = vmatprep.mubr.f32.mxu0 0.0
    %1309 = vmatmul.mubr.f32.gmra.mrb[0].mxu0 %v161
    %v1310 = vpop.f32.mrb[0].mxu0
    %v1311 = vadd.f32 0.0, %v1310
    %v1312 = vpop.f32.mrb[0].mxu0
    %1313 = vmatprep.mubr.f32.mxu0 0.0
    %1314 = vmatmul.mubr.f32.gmra.mrb[0].mxu0 %v162
    %v1315 = vpop.f32.mrb[0].mxu0
    %v1316 = vadd.f32 0.0, %v1315
    %v1317 = vpop.f32.mrb[0].mxu0
    %1318 = vmatprep.mubr.f32.mxu0 0.0
    %1319 = vmatmul.mubr.f32.gmra.mrb[0].mxu0 %v163
    %v1320 = vpop.f32.mrb[0].mxu0
    %v1321 = vadd.f32 0.0, %v1320
    %v1322 = vpop.f32.mrb[0].mxu0
    %1323 = vmatprep.mubr.f32.mxu0 0.0
    %1324 = vmatmul.mubr.f32.gmra.mrb[0].mxu0 %v164
    %v1325 = vpop.f32.mrb[0].mxu0
    %v1326 = vadd.f32 0.0, %v1325
    %v1327 = vpop.f32.mrb[0].mxu0
    %1328 = vmatprep.mubr.f32.mxu0 0.0
    %1329 = vmatmul.mubr.f32.gmra.mrb[0].mxu0 %v165
    %v1330 = vpop.f32.mrb[0].mxu0
    %v1331 = vadd.f32 0.0, %v1330
    %v1332 = vpop.f32.mrb[0].mxu0
    %1333 = vmatprep.mubr.f32.mxu0 0.0
    %1334 = vmatmul.mubr.f32.gmra.mrb[0].mxu0 %v166
    %v1335 = vpop.f32.mrb[0].mxu0
    %v1336 = vadd.f32 0.0, %v1335
    %v1337 = vpop.f32.mrb[0].mxu0
    %1338 = vmatprep.mubr.f32.mxu0 0.0
    %1339 = vmatmul.mubr.f32.gmra.mrb[0].mxu0 %v167
    %v1340 = vpop.f32.mrb[0].mxu0
    %v1341 = vadd.f32 0.0, %v1340
    %v1342 = vpop.f32.mrb[0].mxu0
    %1343 = vmatprep.mubr.f32.mxu0 0.0
    %1344 = vmatmul.mubr.f32.gmra.mrb[0].mxu0 %v168
    %v1345 = vpop.f32.mrb[0].mxu0
    %v1346 = vadd.f32 0.0, %v1345
    %v1347 = vpop.f32.mrb[0].mxu0
    %1348 = vmatprep.mubr.f32.mxu0 0.0
    %1349 = vmatmul.mubr.f32.gmra.mrb[0].mxu0 %v169
    %v1350 = vpop.f32.mrb[0].mxu0
    %v1351 = vadd.f32 0.0, %v1350
    %v1352 = vpop.f32.mrb[0].mxu0
    %1353 = vdwg.mxu0
    %s1354 = scalar_lea.vmem [#allocation7], 768
    %v1355 = vld [vmem:[%s1354] sm:$0xff]
    %v1356 = vld [vmem:[%s1354 + $0x8] sm:$0xff]
    %v1357 = vld [vmem:[%s1354 + $0x10] sm:$0xff]
    %v1358 = vld [vmem:[%s1354 + $0x18] sm:$0xff]
    %v1359 = vld [vmem:[%s1354 + $0x20] sm:$0xff]
    %v1360 = vld [vmem:[%s1354 + $0x28] sm:$0xff]
    %v1361 = vld [vmem:[%s1354 + $0x30] sm:$0xff]
    %v1362 = vld [vmem:[%s1354 + $0x38] sm:$0xff]
    %v1363 = vld [vmem:[%s1354 + $0x40] sm:$0xff]
    %v1364 = vld [vmem:[%s1354 + $0x48] sm:$0xff]
    %v1365 = vld [vmem:[%s1354 + $0x50] sm:$0xff]
    %v1366 = vld [vmem:[%s1354 + $0x58] sm:$0xff]
    %v1367 = vld [vmem:[%s1354 + $0x60] sm:$0xff]
    %v1368 = vld [vmem:[%s1354 + $0x68] sm:$0xff]
    %v1369 = vld [vmem:[%s1354 + $0x70] sm:$0xff]
    %v1370 = vld [vmem:[%s1354 + $0x78] sm:$0xff]
    %v1371 = vld [vmem:[%s1354 + $0x80] sm:$0xff]
    %v1372 = vld [vmem:[%s1354 + $0x88] sm:$0xff]
    %v1373 = vld [vmem:[%s1354 + $0x90] sm:$0xff]
    %v1374 = vld [vmem:[%s1354 + $0x98] sm:$0xff]
    %v1375 = vld [vmem:[%s1354 + $0xa0] sm:$0xff]
    %v1376 = vld [vmem:[%s1354 + $0xa8] sm:$0xff]
    %v1377 = vld [vmem:[%s1354 + $0xb0] sm:$0xff]
    %v1378 = vld [vmem:[%s1354 + $0xb8] sm:$0xff]
    %v1379 = vld [vmem:[%s1354 + $0xc0] sm:$0xff]
    %v1380 = vld [vmem:[%s1354 + $0xc8] sm:$0xff]
    %v1381 = vld [vmem:[%s1354 + $0xd0] sm:$0xff]
    %v1382 = vld [vmem:[%s1354 + $0xd8] sm:$0xff]
    %v1383 = vld [vmem:[%s1354 + $0xe0] sm:$0xff]
    %v1384 = vld [vmem:[%s1354 + $0xe8] sm:$0xff]
    %v1385 = vld [vmem:[%s1354 + $0xf0] sm:$0xff]
    %v1386 = vld [vmem:[%s1354 + $0xf8] sm:$0xff]
    %s1387 = scalar_lea.vmem [#allocation8], 3
    %v1388 = vld [vmem:[%s1387] sm:$0x1]
    %v1390 = vlaneseq
    %v1391 = vshrl.u32 %v1390, 7
    %v1392 = vsub.s32 0, %v1391
    %v1393 = vrot.slane %v1388, %v1392
    %1395 = vmatprep.subr.mxu0 0.0
    %1396 = vmatpush1.msra.mxu0 %v1355
    %1397 = vmatprep.subr.mxu0 0.0
    %1398 = vmatpush1.msra.mxu0 %v1356
    %1399 = vmatprep.subr.mxu0 0.0
    %1400 = vmatpush1.msra.mxu0 %v1357
    %1401 = vmatprep.subr.mxu0 0.0
    %1402 = vmatpush1.msra.mxu0 %v1358
    %1403 = vmatprep.subr.mxu0 0.0
    %1404 = vmatpush1.msra.mxu0 %v1359
    %1405 = vmatprep.subr.mxu0 0.0
    %1406 = vmatpush1.msra.mxu0 %v1360
    %1407 = vmatprep.subr.mxu0 0.0
    %1408 = vmatpush1.msra.mxu0 %v1361
    %1409 = vmatprep.subr.mxu0 0.0
    %1410 = vmatpush1.msra.mxu0 %v1362
    %1411 = vmatprep.subr.mxu0 0.0
    %1412 = vmatpush1.msra.mxu0 %v1363
    %1413 = vmatprep.subr.mxu0 0.0
    %1414 = vmatpush1.msra.mxu0 %v1364
    %1415 = vmatprep.subr.mxu0 0.0
    %1416 = vmatpush1.msra.mxu0 %v1365
    %1417 = vmatprep.subr.mxu0 0.0
    %1418 = vmatpush1.msra.mxu0 %v1366
    %1419 = vmatprep.subr.mxu0 0.0
    %1420 = vmatpush1.msra.mxu0 %v1367
    %1421 = vmatprep.subr.mxu0 0.0
    %1422 = vmatpush1.msra.mxu0 %v1368
    %1423 = vmatprep.subr.mxu0 0.0
    %1424 = vmatpush1.msra.mxu0 %v1369
    %1425 = vmatprep.subr.mxu0 0.0
    %1426 = vmatpush1.msra.mxu0 %v1370
    %1427 = vmatprep.subr.mxu0 0.0
    %1428 = vmatpush1.msra.mxu0 %v1371
    %1429 = vmatprep.subr.mxu0 0.0
    %1430 = vmatpush1.msra.mxu0 %v1372
    %1431 = vmatprep.subr.mxu0 0.0
    %1432 = vmatpush1.msra.mxu0 %v1373
    %1433 = vmatprep.subr.mxu0 0.0
    %1434 = vmatpush1.msra.mxu0 %v1374
    %1435 = vmatprep.subr.mxu0 0.0
    %1436 = vmatpush1.msra.mxu0 %v1375
    %1437 = vmatprep.subr.mxu0 0.0
    %1438 = vmatpush1.msra.mxu0 %v1376
    %1439 = vmatprep.subr.mxu0 0.0
    %1440 = vmatpush1.msra.mxu0 %v1377
    %1441 = vmatprep.subr.mxu0 0.0
    %1442 = vmatpush1.msra.mxu0 %v1378
    %1443 = vmatprep.subr.mxu0 0.0
    %1444 = vmatpush1.msra.mxu0 %v1379
    %1445 = vmatprep.subr.mxu0 0.0
    %1446 = vmatpush1.msra.mxu0 %v1380
    %1447 = vmatprep.subr.mxu0 0.0
    %1448 = vmatpush1.msra.mxu0 %v1381
    %1449 = vmatprep.subr.mxu0 0.0
    %1450 = vmatpush1.msra.mxu0 %v1382
    %1451 = vmatprep.subr.mxu0 0.0
    %1452 = vmatpush1.msra.mxu0 %v1383
    %1453 = vmatprep.subr.mxu0 0.0
    %1454 = vmatpush1.msra.mxu0 %v1384
    %1455 = vmatprep.subr.mxu0 0.0
    %1456 = vmatpush1.msra.mxu0 %v1385
    %1457 = vmatprep.subr.mxu0 0.0
    %1458 = vmatpush1.msra.mxu0 %v1386
    %1459 = vmatprep.mubr.f32.mxu0 %v846
    %1460 = vmatmul.mubr.f32.gmra.mrb[0].mxu0 %v1276
    %v1461 = vpop.f32.mrb[0].mxu0
    %v1462 = vadd.f32 %v1393, %v1461
    %v1463 = vpop.f32.mrb[0].mxu0
    %1464 = vmatprep.mubr.f32.mxu0 %v847
    %1465 = vmatmul.mubr.f32.gmra.mrb[0].mxu0 %v1281
    %v1466 = vpop.f32.mrb[0].mxu0
    %v1467 = vadd.f32 %v1393, %v1466
    %v1468 = vpop.f32.mrb[0].mxu0
    %1469 = vmatprep.mubr.f32.mxu0 %v848
    %1470 = vmatmul.mubr.f32.gmra.mrb[0].mxu0 %v1286
    %v1471 = vpop.f32.mrb[0].mxu0
    %v1472 = vadd.f32 %v1393, %v1471
    %v1473 = vpop.f32.mrb[0].mxu0
    %1474 = vmatprep.mubr.f32.mxu0 %v849
    %1475 = vmatmul.mubr.f32.gmra.mrb[0].mxu0 %v1291
    %v1476 = vpop.f32.mrb[0].mxu0
    %v1477 = vadd.f32 %v1393, %v1476
    %v1478 = vpop.f32.mrb[0].mxu0
    %1479 = vmatprep.mubr.f32.mxu0 %v850
    %1480 = vmatmul.mubr.f32.gmra.mrb[0].mxu0 %v1296
    %v1481 = vpop.f32.mrb[0].mxu0
    %v1482 = vadd.f32 %v1393, %v1481
    %v1483 = vpop.f32.mrb[0].mxu0
    %1484 = vmatprep.mubr.f32.mxu0 %v851
    %1485 = vmatmul.mubr.f32.gmra.mrb[0].mxu0 %v1301
    %v1486 = vpop.f32.mrb[0].mxu0
    %v1487 = vadd.f32 %v1393, %v1486
    %v1488 = vpop.f32.mrb[0].mxu0
    %1489 = vmatprep.mubr.f32.mxu0 %v852
    %1490 = vmatmul.mubr.f32.gmra.mrb[0].mxu0 %v1306
    %v1491 = vpop.f32.mrb[0].mxu0
    %v1492 = vadd.f32 %v1393, %v1491
    %v1493 = vpop.f32.mrb[0].mxu0
    %1494 = vmatprep.mubr.f32.mxu0 %v853
    %1495 = vmatmul.mubr.f32.gmra.mrb[0].mxu0 %v1311
    %v1496 = vpop.f32.mrb[0].mxu0
    %v1497 = vadd.f32 %v1393, %v1496
    %v1498 = vpop.f32.mrb[0].mxu0
    %1499 = vmatprep.mubr.f32.mxu0 %v854
    %1500 = vmatmul.mubr.f32.gmra.mrb[0].mxu0 %v1316
    %v1501 = vpop.f32.mrb[0].mxu0
    %v1502 = vadd.f32 %v1393, %v1501
    %v1503 = vpop.f32.mrb[0].mxu0
    %1504 = vmatprep.mubr.f32.mxu0 %v855
    %1505 = vmatmul.mubr.f32.gmra.mrb[0].mxu0 %v1321
    %v1506 = vpop.f32.mrb[0].mxu0
    %v1507 = vadd.f32 %v1393, %v1506
    %v1508 = vpop.f32.mrb[0].mxu0
    %1509 = vmatprep.mubr.f32.mxu0 %v856
    %1510 = vmatmul.mubr.f32.gmra.mrb[0].mxu0 %v1326
    %v1511 = vpop.f32.mrb[0].mxu0
    %v1512 = vadd.f32 %v1393, %v1511
    %v1513 = vpop.f32.mrb[0].mxu0
    %1514 = vmatprep.mubr.f32.mxu0 %v857
    %1515 = vmatmul.mubr.f32.gmra.mrb[0].mxu0 %v1331
    %v1516 = vpop.f32.mrb[0].mxu0
    %v1517 = vadd.f32 %v1393, %v1516
    %v1518 = vpop.f32.mrb[0].mxu0
    %1519 = vmatprep.mubr.f32.mxu0 %v858
    %1520 = vmatmul.mubr.f32.gmra.mrb[0].mxu0 %v1336
    %v1521 = vpop.f32.mrb[0].mxu0
    %v1522 = vadd.f32 %v1393, %v1521
    %v1523 = vpop.f32.mrb[0].mxu0
    %1524 = vmatprep.mubr.f32.mxu0 %v859
    %1525 = vmatmul.mubr.f32.gmra.mrb[0].mxu0 %v1341
    %v1526 = vpop.f32.mrb[0].mxu0
    %v1527 = vadd.f32 %v1393, %v1526
    %v1528 = vpop.f32.mrb[0].mxu0
    %1529 = vmatprep.mubr.f32.mxu0 %v860
    %1530 = vmatmul.mubr.f32.gmra.mrb[0].mxu0 %v1346
    %v1531 = vpop.f32.mrb[0].mxu0
    %v1532 = vadd.f32 %v1393, %v1531
    %v1533 = vpop.f32.mrb[0].mxu0
    %1534 = vmatprep.mubr.f32.mxu0 %v861
    %1535 = vmatmul.mubr.f32.gmra.mrb[0].mxu0 %v1351
    %v1536 = vpop.f32.mrb[0].mxu0
    %v1537 = vadd.f32 %v1393, %v1536
    %v1538 = vpop.f32.mrb[0].mxu0
    %1539 = vdwg.mxu0
    %v1540 = vmax.f32 %v1462, 0.0
    %v1541 = vmax.f32 %v1467, 0.0
    %v1542 = vmax.f32 %v1472, 0.0
    %v1543 = vmax.f32 %v1477, 0.0
    %v1544 = vmax.f32 %v1482, 0.0
    %v1545 = vmax.f32 %v1487, 0.0
    %v1546 = vmax.f32 %v1492, 0.0
    %v1547 = vmax.f32 %v1497, 0.0
    %v1548 = vmax.f32 %v1502, 0.0
    %v1549 = vmax.f32 %v1507, 0.0
    %v1550 = vmax.f32 %v1512, 0.0
    %v1551 = vmax.f32 %v1517, 0.0
    %v1552 = vmax.f32 %v1522, 0.0
    %v1553 = vmax.f32 %v1527, 0.0
    %v1554 = vmax.f32 %v1532, 0.0
    %v1555 = vmax.f32 %v1537, 0.0
    %1556 = vmatprep.subr.mxu0 0.0
    %1557 = vmatpush1.msra.mxu0 %v1540
    %1558 = vmatprep.subr.mxu0 0.0
    %1559 = vmatpush1.msra.mxu0 %v1541
    %1560 = vmatprep.subr.mxu0 0.0
    %1561 = vmatpush1.msra.mxu0 %v1542
    %1562 = vmatprep.subr.mxu0 0.0
    %1563 = vmatpush1.msra.mxu0 %v1543
    %1564 = vmatprep.subr.mxu0 0.0
    %1565 = vmatpush1.msra.mxu0 %v1544
    %1566 = vmatprep.subr.mxu0 0.0
    %1567 = vmatpush1.msra.mxu0 %v1545
    %1568 = vmatprep.subr.mxu0 0.0
    %1569 = vmatpush1.msra.mxu0 %v1546
    %1570 = vmatprep.subr.mxu0 0.0
    %1571 = vmatpush1.msra.mxu0 %v1547
    %1572 = vmatprep.subr.mxu0 0.0
    %1573 = vmatpush1.msra.mxu0 %v1548
    %1574 = vmatprep.subr.mxu0 0.0
    %1575 = vmatpush1.msra.mxu0 %v1549
    %1576 = vmatprep.subr.mxu0 0.0
    %1577 = vmatpush1.msra.mxu0 %v1550
    %1578 = vmatprep.subr.mxu0 0.0
    %1579 = vmatpush1.msra.mxu0 %v1551
    %1580 = vmatprep.subr.mxu0 0.0
    %1581 = vmatpush1.msra.mxu0 %v1552
    %1582 = vmatprep.subr.mxu0 0.0
    %1583 = vmatpush1.msra.mxu0 %v1553
    %1584 = vmatprep.subr.mxu0 0.0
    %1585 = vmatpush1.msra.mxu0 %v1554
    %1586 = vmatprep.subr.mxu0 0.0
    %1587 = vmatpush1.msra.mxu0 %v1555
    %1588 = vmatprep.subr.mxu0 0.0
    %1589 = vmatpush1.msra.mxu0 0.0
    %1590 = vmatprep.subr.mxu0 0.0
    %1591 = vmatpush1.msra.mxu0 0.0
    %1592 = vmatprep.subr.mxu0 0.0
    %1593 = vmatpush1.msra.mxu0 0.0
    %1594 = vmatprep.subr.mxu0 0.0
    %1595 = vmatpush1.msra.mxu0 0.0
    %1596 = vmatprep.subr.mxu0 0.0
    %1597 = vmatpush1.msra.mxu0 0.0
    %1598 = vmatprep.subr.mxu0 0.0
    %1599 = vmatpush1.msra.mxu0 0.0
    %1600 = vmatprep.subr.mxu0 0.0
    %1601 = vmatpush1.msra.mxu0 0.0
    %1602 = vmatprep.subr.mxu0 0.0
    %1603 = vmatpush1.msra.mxu0 0.0
    %1604 = vmatprep.subr.mxu0 0.0
    %1605 = vmatpush1.msra.mxu0 0.0
    %1606 = vmatprep.subr.mxu0 0.0
    %1607 = vmatpush1.msra.mxu0 0.0
    %1608 = vmatprep.subr.mxu0 0.0
    %1609 = vmatpush1.msra.mxu0 0.0
    %1610 = vmatprep.subr.mxu0 0.0
    %1611 = vmatpush1.msra.mxu0 0.0
    %1612 = vmatprep.subr.mxu0 0.0
    %1613 = vmatpush1.msra.mxu0 0.0
    %1614 = vmatprep.subr.mxu0 0.0
    %1615 = vmatpush1.msra.mxu0 0.0
    %1616 = vmatprep.subr.mxu0 0.0
    %1617 = vmatpush1.msra.mxu0 0.0
    %1618 = vmatprep.subr.mxu0 0.0
    %1619 = vmatpush1.msra.mxu0 0.0
    %1620 = vmatprep.mubr.f32.mxu0 0.0
    %1621 = vmatmul.mubr.f32.gmra.mrb[0].mxu0 %v137
    %v1622 = vpop.f32.mrb[0].mxu0
    %v1623 = vadd.f32 0.0, %v1622
    %v1624 = vpop.f32.mrb[0].mxu0
    %1625 = vmatprep.mubr.f32.mxu0 0.0
    %1626 = vmatmul.mubr.f32.gmra.mrb[0].mxu0 %v138
    %v1627 = vpop.f32.mrb[0].mxu0
    %v1628 = vadd.f32 0.0, %v1627
    %v1629 = vpop.f32.mrb[0].mxu0
    %1630 = vmatprep.mubr.f32.mxu0 0.0
    %1631 = vmatmul.mubr.f32.gmra.mrb[0].mxu0 %v139
    %v1632 = vpop.f32.mrb[0].mxu0
    %v1633 = vadd.f32 0.0, %v1632
    %v1634 = vpop.f32.mrb[0].mxu0
    %1635 = vmatprep.mubr.f32.mxu0 0.0
    %1636 = vmatmul.mubr.f32.gmra.mrb[0].mxu0 %v140
    %v1637 = vpop.f32.mrb[0].mxu0
    %v1638 = vadd.f32 0.0, %v1637
    %v1639 = vpop.f32.mrb[0].mxu0
    %1640 = vmatprep.mubr.f32.mxu0 0.0
    %1641 = vmatmul.mubr.f32.gmra.mrb[0].mxu0 %v141
    %v1642 = vpop.f32.mrb[0].mxu0
    %v1643 = vadd.f32 0.0, %v1642
    %v1644 = vpop.f32.mrb[0].mxu0
    %1645 = vmatprep.mubr.f32.mxu0 0.0
    %1646 = vmatmul.mubr.f32.gmra.mrb[0].mxu0 %v142
    %v1647 = vpop.f32.mrb[0].mxu0
    %v1648 = vadd.f32 0.0, %v1647
    %v1649 = vpop.f32.mrb[0].mxu0
    %1650 = vmatprep.mubr.f32.mxu0 0.0
    %1651 = vmatmul.mubr.f32.gmra.mrb[0].mxu0 %v143
    %v1652 = vpop.f32.mrb[0].mxu0
    %v1653 = vadd.f32 0.0, %v1652
    %v1654 = vpop.f32.mrb[0].mxu0
    %1655 = vmatprep.mubr.f32.mxu0 0.0
    %1656 = vmatmul.mubr.f32.gmra.mrb[0].mxu0 %v144
    %v1657 = vpop.f32.mrb[0].mxu0
    %v1658 = vadd.f32 0.0, %v1657
    %v1659 = vpop.f32.mrb[0].mxu0
    %1660 = vmatprep.mubr.f32.mxu0 0.0
    %1661 = vmatmul.mubr.f32.gmra.mrb[0].mxu0 %v145
    %v1662 = vpop.f32.mrb[0].mxu0
    %v1663 = vadd.f32 0.0, %v1662
    %v1664 = vpop.f32.mrb[0].mxu0
    %1665 = vmatprep.mubr.f32.mxu0 0.0
    %1666 = vmatmul.mubr.f32.gmra.mrb[0].mxu0 %v146
    %v1667 = vpop.f32.mrb[0].mxu0
    %v1668 = vadd.f32 0.0, %v1667
    %v1669 = vpop.f32.mrb[0].mxu0
    %1670 = vmatprep.mubr.f32.mxu0 0.0
    %1671 = vmatmul.mubr.f32.gmra.mrb[0].mxu0 %v147
    %v1672 = vpop.f32.mrb[0].mxu0
    %v1673 = vadd.f32 0.0, %v1672
    %v1674 = vpop.f32.mrb[0].mxu0
    %1675 = vmatprep.mubr.f32.mxu0 0.0
    %1676 = vmatmul.mubr.f32.gmra.mrb[0].mxu0 %v148
    %v1677 = vpop.f32.mrb[0].mxu0
    %v1678 = vadd.f32 0.0, %v1677
    %v1679 = vpop.f32.mrb[0].mxu0
    %1680 = vmatprep.mubr.f32.mxu0 0.0
    %1681 = vmatmul.mubr.f32.gmra.mrb[0].mxu0 %v149
    %v1682 = vpop.f32.mrb[0].mxu0
    %v1683 = vadd.f32 0.0, %v1682
    %v1684 = vpop.f32.mrb[0].mxu0
    %1685 = vmatprep.mubr.f32.mxu0 0.0
    %1686 = vmatmul.mubr.f32.gmra.mrb[0].mxu0 %v150
    %v1687 = vpop.f32.mrb[0].mxu0
    %v1688 = vadd.f32 0.0, %v1687
    %v1689 = vpop.f32.mrb[0].mxu0
    %1690 = vmatprep.mubr.f32.mxu0 0.0
    %1691 = vmatmul.mubr.f32.gmra.mrb[0].mxu0 %v151
    %v1692 = vpop.f32.mrb[0].mxu0
    %v1693 = vadd.f32 0.0, %v1692
    %v1694 = vpop.f32.mrb[0].mxu0
    %1695 = vmatprep.mubr.f32.mxu0 0.0
    %1696 = vmatmul.mubr.f32.gmra.mrb[0].mxu0 %v152
    %v1697 = vpop.f32.mrb[0].mxu0
    %v1698 = vadd.f32 0.0, %v1697
    %v1699 = vpop.f32.mrb[0].mxu0
    %1700 = vdwg.mxu0
    %s1701 = scalar_lea.vmem [#allocation7], 1024
    %v1702 = vld [vmem:[%s1701] sm:$0xff]
    %v1703 = vld [vmem:[%s1701 + $0x8] sm:$0xff]
    %v1704 = vld [vmem:[%s1701 + $0x10] sm:$0xff]
    %v1705 = vld [vmem:[%s1701 + $0x18] sm:$0xff]
    %v1706 = vld [vmem:[%s1701 + $0x20] sm:$0xff]
    %v1707 = vld [vmem:[%s1701 + $0x28] sm:$0xff]
    %v1708 = vld [vmem:[%s1701 + $0x30] sm:$0xff]
    %v1709 = vld [vmem:[%s1701 + $0x38] sm:$0xff]
    %v1710 = vld [vmem:[%s1701 + $0x40] sm:$0xff]
    %v1711 = vld [vmem:[%s1701 + $0x48] sm:$0xff]
    %v1712 = vld [vmem:[%s1701 + $0x50] sm:$0xff]
    %v1713 = vld [vmem:[%s1701 + $0x58] sm:$0xff]
    %v1714 = vld [vmem:[%s1701 + $0x60] sm:$0xff]
    %v1715 = vld [vmem:[%s1701 + $0x68] sm:$0xff]
    %v1716 = vld [vmem:[%s1701 + $0x70] sm:$0xff]
    %v1717 = vld [vmem:[%s1701 + $0x78] sm:$0xff]
    %v1718 = vld [vmem:[%s1701 + $0x80] sm:$0xff]
    %v1719 = vld [vmem:[%s1701 + $0x88] sm:$0xff]
    %v1720 = vld [vmem:[%s1701 + $0x90] sm:$0xff]
    %v1721 = vld [vmem:[%s1701 + $0x98] sm:$0xff]
    %v1722 = vld [vmem:[%s1701 + $0xa0] sm:$0xff]
    %v1723 = vld [vmem:[%s1701 + $0xa8] sm:$0xff]
    %v1724 = vld [vmem:[%s1701 + $0xb0] sm:$0xff]
    %v1725 = vld [vmem:[%s1701 + $0xb8] sm:$0xff]
    %v1726 = vld [vmem:[%s1701 + $0xc0] sm:$0xff]
    %v1727 = vld [vmem:[%s1701 + $0xc8] sm:$0xff]
    %v1728 = vld [vmem:[%s1701 + $0xd0] sm:$0xff]
    %v1729 = vld [vmem:[%s1701 + $0xd8] sm:$0xff]
    %v1730 = vld [vmem:[%s1701 + $0xe0] sm:$0xff]
    %v1731 = vld [vmem:[%s1701 + $0xe8] sm:$0xff]
    %v1732 = vld [vmem:[%s1701 + $0xf0] sm:$0xff]
    %v1733 = vld [vmem:[%s1701 + $0xf8] sm:$0xff]
    %s1734 = scalar_lea.vmem [#allocation8], 4
    %v1735 = vld [vmem:[%s1734] sm:$0x1]
    %v1737 = vlaneseq
    %v1738 = vshrl.u32 %v1737, 7
    %v1739 = vsub.s32 0, %v1738
    %v1740 = vrot.slane %v1735, %v1739
    %1742 = vmatprep.subr.mxu0 0.0
    %1743 = vmatpush1.msra.mxu0 %v1702
    %1744 = vmatprep.subr.mxu0 0.0
    %1745 = vmatpush1.msra.mxu0 %v1703
    %1746 = vmatprep.subr.mxu0 0.0
    %1747 = vmatpush1.msra.mxu0 %v1704
    %1748 = vmatprep.subr.mxu0 0.0
    %1749 = vmatpush1.msra.mxu0 %v1705
    %1750 = vmatprep.subr.mxu0 0.0
    %1751 = vmatpush1.msra.mxu0 %v1706
    %1752 = vmatprep.subr.mxu0 0.0
    %1753 = vmatpush1.msra.mxu0 %v1707
    %1754 = vmatprep.subr.mxu0 0.0
    %1755 = vmatpush1.msra.mxu0 %v1708
    %1756 = vmatprep.subr.mxu0 0.0
    %1757 = vmatpush1.msra.mxu0 %v1709
    %1758 = vmatprep.subr.mxu0 0.0
    %1759 = vmatpush1.msra.mxu0 %v1710
    %1760 = vmatprep.subr.mxu0 0.0
    %1761 = vmatpush1.msra.mxu0 %v1711
    %1762 = vmatprep.subr.mxu0 0.0
    %1763 = vmatpush1.msra.mxu0 %v1712
    %1764 = vmatprep.subr.mxu0 0.0
    %1765 = vmatpush1.msra.mxu0 %v1713
    %1766 = vmatprep.subr.mxu0 0.0
    %1767 = vmatpush1.msra.mxu0 %v1714
    %1768 = vmatprep.subr.mxu0 0.0
    %1769 = vmatpush1.msra.mxu0 %v1715
    %1770 = vmatprep.subr.mxu0 0.0
    %1771 = vmatpush1.msra.mxu0 %v1716
    %1772 = vmatprep.subr.mxu0 0.0
    %1773 = vmatpush1.msra.mxu0 %v1717
    %1774 = vmatprep.subr.mxu0 0.0
    %1775 = vmatpush1.msra.mxu0 %v1718
    %1776 = vmatprep.subr.mxu0 0.0
    %1777 = vmatpush1.msra.mxu0 %v1719
    %1778 = vmatprep.subr.mxu0 0.0
    %1779 = vmatpush1.msra.mxu0 %v1720
    %1780 = vmatprep.subr.mxu0 0.0
    %1781 = vmatpush1.msra.mxu0 %v1721
    %1782 = vmatprep.subr.mxu0 0.0
    %1783 = vmatpush1.msra.mxu0 %v1722
    %1784 = vmatprep.subr.mxu0 0.0
    %1785 = vmatpush1.msra.mxu0 %v1723
    %1786 = vmatprep.subr.mxu0 0.0
    %1787 = vmatpush1.msra.mxu0 %v1724
    %1788 = vmatprep.subr.mxu0 0.0
    %1789 = vmatpush1.msra.mxu0 %v1725
    %1790 = vmatprep.subr.mxu0 0.0
    %1791 = vmatpush1.msra.mxu0 %v1726
    %1792 = vmatprep.subr.mxu0 0.0
    %1793 = vmatpush1.msra.mxu0 %v1727
    %1794 = vmatprep.subr.mxu0 0.0
    %1795 = vmatpush1.msra.mxu0 %v1728
    %1796 = vmatprep.subr.mxu0 0.0
    %1797 = vmatpush1.msra.mxu0 %v1729
    %1798 = vmatprep.subr.mxu0 0.0
    %1799 = vmatpush1.msra.mxu0 %v1730
    %1800 = vmatprep.subr.mxu0 0.0
    %1801 = vmatpush1.msra.mxu0 %v1731
    %1802 = vmatprep.subr.mxu0 0.0
    %1803 = vmatpush1.msra.mxu0 %v1732
    %1804 = vmatprep.subr.mxu0 0.0
    %1805 = vmatpush1.msra.mxu0 %v1733
    %1806 = vmatprep.mubr.f32.mxu0 %v1193
    %1807 = vmatmul.mubr.f32.gmra.mrb[0].mxu0 %v1623
    %v1808 = vpop.f32.mrb[0].mxu0
    %v1809 = vadd.f32 %v1740, %v1808
    %v1810 = vpop.f32.mrb[0].mxu0
    %1811 = vmatprep.mubr.f32.mxu0 %v1194
    %1812 = vmatmul.mubr.f32.gmra.mrb[0].mxu0 %v1628
    %v1813 = vpop.f32.mrb[0].mxu0
    %v1814 = vadd.f32 %v1740, %v1813
    %v1815 = vpop.f32.mrb[0].mxu0
    %1816 = vmatprep.mubr.f32.mxu0 %v1195
    %1817 = vmatmul.mubr.f32.gmra.mrb[0].mxu0 %v1633
    %v1818 = vpop.f32.mrb[0].mxu0
    %v1819 = vadd.f32 %v1740, %v1818
    %v1820 = vpop.f32.mrb[0].mxu0
    %1821 = vmatprep.mubr.f32.mxu0 %v1196
    %1822 = vmatmul.mubr.f32.gmra.mrb[0].mxu0 %v1638
    %v1823 = vpop.f32.mrb[0].mxu0
    %v1824 = vadd.f32 %v1740, %v1823
    %v1825 = vpop.f32.mrb[0].mxu0
    %1826 = vmatprep.mubr.f32.mxu0 %v1197
    %1827 = vmatmul.mubr.f32.gmra.mrb[0].mxu0 %v1643
    %v1828 = vpop.f32.mrb[0].mxu0
    %v1829 = vadd.f32 %v1740, %v1828
    %v1830 = vpop.f32.mrb[0].mxu0
    %1831 = vmatprep.mubr.f32.mxu0 %v1198
    %1832 = vmatmul.mubr.f32.gmra.mrb[0].mxu0 %v1648
    %v1833 = vpop.f32.mrb[0].mxu0
    %v1834 = vadd.f32 %v1740, %v1833
    %v1835 = vpop.f32.mrb[0].mxu0
    %1836 = vmatprep.mubr.f32.mxu0 %v1199
    %1837 = vmatmul.mubr.f32.gmra.mrb[0].mxu0 %v1653
    %v1838 = vpop.f32.mrb[0].mxu0
    %v1839 = vadd.f32 %v1740, %v1838
    %v1840 = vpop.f32.mrb[0].mxu0
    %1841 = vmatprep.mubr.f32.mxu0 %v1200
    %1842 = vmatmul.mubr.f32.gmra.mrb[0].mxu0 %v1658
    %v1843 = vpop.f32.mrb[0].mxu0
    %v1844 = vadd.f32 %v1740, %v1843
    %v1845 = vpop.f32.mrb[0].mxu0
    %1846 = vmatprep.mubr.f32.mxu0 %v1201
    %1847 = vmatmul.mubr.f32.gmra.mrb[0].mxu0 %v1663
    %v1848 = vpop.f32.mrb[0].mxu0
    %v1849 = vadd.f32 %v1740, %v1848
    %v1850 = vpop.f32.mrb[0].mxu0
    %1851 = vmatprep.mubr.f32.mxu0 %v1202
    %1852 = vmatmul.mubr.f32.gmra.mrb[0].mxu0 %v1668
    %v1853 = vpop.f32.mrb[0].mxu0
    %v1854 = vadd.f32 %v1740, %v1853
    %v1855 = vpop.f32.mrb[0].mxu0
    %1856 = vmatprep.mubr.f32.mxu0 %v1203
    %1857 = vmatmul.mubr.f32.gmra.mrb[0].mxu0 %v1673
    %v1858 = vpop.f32.mrb[0].mxu0
    %v1859 = vadd.f32 %v1740, %v1858
    %v1860 = vpop.f32.mrb[0].mxu0
    %1861 = vmatprep.mubr.f32.mxu0 %v1204
    %1862 = vmatmul.mubr.f32.gmra.mrb[0].mxu0 %v1678
    %v1863 = vpop.f32.mrb[0].mxu0
    %v1864 = vadd.f32 %v1740, %v1863
    %v1865 = vpop.f32.mrb[0].mxu0
    %1866 = vmatprep.mubr.f32.mxu0 %v1205
    %1867 = vmatmul.mubr.f32.gmra.mrb[0].mxu0 %v1683
    %v1868 = vpop.f32.mrb[0].mxu0
    %v1869 = vadd.f32 %v1740, %v1868
    %v1870 = vpop.f32.mrb[0].mxu0
    %1871 = vmatprep.mubr.f32.mxu0 %v1206
    %1872 = vmatmul.mubr.f32.gmra.mrb[0].mxu0 %v1688
    %v1873 = vpop.f32.mrb[0].mxu0
    %v1874 = vadd.f32 %v1740, %v1873
    %v1875 = vpop.f32.mrb[0].mxu0
    %1876 = vmatprep.mubr.f32.mxu0 %v1207
    %1877 = vmatmul.mubr.f32.gmra.mrb[0].mxu0 %v1693
    %v1878 = vpop.f32.mrb[0].mxu0
    %v1879 = vadd.f32 %v1740, %v1878
    %v1880 = vpop.f32.mrb[0].mxu0
    %1881 = vmatprep.mubr.f32.mxu0 %v1208
    %1882 = vmatmul.mubr.f32.gmra.mrb[0].mxu0 %v1698
    %v1883 = vpop.f32.mrb[0].mxu0
    %v1884 = vadd.f32 %v1740, %v1883
    %v1885 = vpop.f32.mrb[0].mxu0
    %1886 = vdwg.mxu0
    %v1887 = vmax.f32 %v1809, 0.0
    %v1888 = vmax.f32 %v1814, 0.0
    %v1889 = vmax.f32 %v1819, 0.0
    %v1890 = vmax.f32 %v1824, 0.0
    %v1891 = vmax.f32 %v1829, 0.0
    %v1892 = vmax.f32 %v1834, 0.0
    %v1893 = vmax.f32 %v1839, 0.0
    %v1894 = vmax.f32 %v1844, 0.0
    %v1895 = vmax.f32 %v1849, 0.0
    %v1896 = vmax.f32 %v1854, 0.0
    %v1897 = vmax.f32 %v1859, 0.0
    %v1898 = vmax.f32 %v1864, 0.0
    %v1899 = vmax.f32 %v1869, 0.0
    %v1900 = vmax.f32 %v1874, 0.0
    %v1901 = vmax.f32 %v1879, 0.0
    %v1902 = vmax.f32 %v1884, 0.0
    %1903 = vmatprep.subr.mxu0 0.0
    %1904 = vmatpush1.msra.mxu0 %v1193
    %1905 = vmatprep.subr.mxu0 0.0
    %1906 = vmatpush1.msra.mxu0 %v1194
    %1907 = vmatprep.subr.mxu0 0.0
    %1908 = vmatpush1.msra.mxu0 %v1195
    %1909 = vmatprep.subr.mxu0 0.0
    %1910 = vmatpush1.msra.mxu0 %v1196
    %1911 = vmatprep.subr.mxu0 0.0
    %1912 = vmatpush1.msra.mxu0 %v1197
    %1913 = vmatprep.subr.mxu0 0.0
    %1914 = vmatpush1.msra.mxu0 %v1198
    %1915 = vmatprep.subr.mxu0 0.0
    %1916 = vmatpush1.msra.mxu0 %v1199
    %1917 = vmatprep.subr.mxu0 0.0
    %1918 = vmatpush1.msra.mxu0 %v1200
    %1919 = vmatprep.subr.mxu0 0.0
    %1920 = vmatpush1.msra.mxu0 %v1201
    %1921 = vmatprep.subr.mxu0 0.0
    %1922 = vmatpush1.msra.mxu0 %v1202
    %1923 = vmatprep.subr.mxu0 0.0
    %1924 = vmatpush1.msra.mxu0 %v1203
    %1925 = vmatprep.subr.mxu0 0.0
    %1926 = vmatpush1.msra.mxu0 %v1204
    %1927 = vmatprep.subr.mxu0 0.0
    %1928 = vmatpush1.msra.mxu0 %v1205
    %1929 = vmatprep.subr.mxu0 0.0
    %1930 = vmatpush1.msra.mxu0 %v1206
    %1931 = vmatprep.subr.mxu0 0.0
    %1932 = vmatpush1.msra.mxu0 %v1207
    %1933 = vmatprep.subr.mxu0 0.0
    %1934 = vmatpush1.msra.mxu0 %v1208
    %1935 = vmatprep.subr.mxu0 0.0
    %1936 = vmatpush1.msra.mxu0 0.0
    %1937 = vmatprep.subr.mxu0 0.0
    %1938 = vmatpush1.msra.mxu0 0.0
    %1939 = vmatprep.subr.mxu0 0.0
    %1940 = vmatpush1.msra.mxu0 0.0
    %1941 = vmatprep.subr.mxu0 0.0
    %1942 = vmatpush1.msra.mxu0 0.0
    %1943 = vmatprep.subr.mxu0 0.0
    %1944 = vmatpush1.msra.mxu0 0.0
    %1945 = vmatprep.subr.mxu0 0.0
    %1946 = vmatpush1.msra.mxu0 0.0
    %1947 = vmatprep.subr.mxu0 0.0
    %1948 = vmatpush1.msra.mxu0 0.0
    %1949 = vmatprep.subr.mxu0 0.0
    %1950 = vmatpush1.msra.mxu0 0.0
    %1951 = vmatprep.subr.mxu0 0.0
    %1952 = vmatpush1.msra.mxu0 0.0
    %1953 = vmatprep.subr.mxu0 0.0
    %1954 = vmatpush1.msra.mxu0 0.0
    %1955 = vmatprep.subr.mxu0 0.0
    %1956 = vmatpush1.msra.mxu0 0.0
    %1957 = vmatprep.subr.mxu0 0.0
    %1958 = vmatpush1.msra.mxu0 0.0
    %1959 = vmatprep.subr.mxu0 0.0
    %1960 = vmatpush1.msra.mxu0 0.0
    %1961 = vmatprep.subr.mxu0 0.0
    %1962 = vmatpush1.msra.mxu0 0.0
    %1963 = vmatprep.subr.mxu0 0.0
    %1964 = vmatpush1.msra.mxu0 0.0
    %1965 = vmatprep.subr.mxu0 0.0
    %1966 = vmatpush1.msra.mxu0 0.0
    %1967 = vmatprep.mubr.f32.mxu0 0.0
    %1968 = vmatmul.mubr.f32.gmra.mrb[0].mxu0 %v154
    %v1969 = vpop.f32.mrb[0].mxu0
    %v1970 = vadd.f32 0.0, %v1969
    %v1971 = vpop.f32.mrb[0].mxu0
    %1972 = vmatprep.mubr.f32.mxu0 0.0
    %1973 = vmatmul.mubr.f32.gmra.mrb[0].mxu0 %v155
    %v1974 = vpop.f32.mrb[0].mxu0
    %v1975 = vadd.f32 0.0, %v1974
    %v1976 = vpop.f32.mrb[0].mxu0
    %1977 = vmatprep.mubr.f32.mxu0 0.0
    %1978 = vmatmul.mubr.f32.gmra.mrb[0].mxu0 %v156
    %v1979 = vpop.f32.mrb[0].mxu0
    %v1980 = vadd.f32 0.0, %v1979
    %v1981 = vpop.f32.mrb[0].mxu0
    %1982 = vmatprep.mubr.f32.mxu0 0.0
    %1983 = vmatmul.mubr.f32.gmra.mrb[0].mxu0 %v157
    %v1984 = vpop.f32.mrb[0].mxu0
    %v1985 = vadd.f32 0.0, %v1984
    %v1986 = vpop.f32.mrb[0].mxu0
    %1987 = vmatprep.mubr.f32.mxu0 0.0
    %1988 = vmatmul.mubr.f32.gmra.mrb[0].mxu0 %v158
    %v1989 = vpop.f32.mrb[0].mxu0
    %v1990 = vadd.f32 0.0, %v1989
    %v1991 = vpop.f32.mrb[0].mxu0
    %1992 = vmatprep.mubr.f32.mxu0 0.0
    %1993 = vmatmul.mubr.f32.gmra.mrb[0].mxu0 %v159
    %v1994 = vpop.f32.mrb[0].mxu0
    %v1995 = vadd.f32 0.0, %v1994
    %v1996 = vpop.f32.mrb[0].mxu0
    %1997 = vmatprep.mubr.f32.mxu0 0.0
    %1998 = vmatmul.mubr.f32.gmra.mrb[0].mxu0 %v160
    %v1999 = vpop.f32.mrb[0].mxu0
    %v2000 = vadd.f32 0.0, %v1999
    %v2001 = vpop.f32.mrb[0].mxu0
    %2002 = vmatprep.mubr.f32.mxu0 0.0
    %2003 = vmatmul.mubr.f32.gmra.mrb[0].mxu0 %v161
    %v2004 = vpop.f32.mrb[0].mxu0
    %v2005 = vadd.f32 0.0, %v2004
    %v2006 = vpop.f32.mrb[0].mxu0
    %2007 = vmatprep.mubr.f32.mxu0 0.0
    %2008 = vmatmul.mubr.f32.gmra.mrb[0].mxu0 %v162
    %v2009 = vpop.f32.mrb[0].mxu0
    %v2010 = vadd.f32 0.0, %v2009
    %v2011 = vpop.f32.mrb[0].mxu0
    %2012 = vmatprep.mubr.f32.mxu0 0.0
    %2013 = vmatmul.mubr.f32.gmra.mrb[0].mxu0 %v163
    %v2014 = vpop.f32.mrb[0].mxu0
    %v2015 = vadd.f32 0.0, %v2014
    %v2016 = vpop.f32.mrb[0].mxu0
    %2017 = vmatprep.mubr.f32.mxu0 0.0
    %2018 = vmatmul.mubr.f32.gmra.mrb[0].mxu0 %v164
    %v2019 = vpop.f32.mrb[0].mxu0
    %v2020 = vadd.f32 0.0, %v2019
    %v2021 = vpop.f32.mrb[0].mxu0
    %2022 = vmatprep.mubr.f32.mxu0 0.0
    %2023 = vmatmul.mubr.f32.gmra.mrb[0].mxu0 %v165
    %v2024 = vpop.f32.mrb[0].mxu0
    %v2025 = vadd.f32 0.0, %v2024
    %v2026 = vpop.f32.mrb[0].mxu0
    %2027 = vmatprep.mubr.f32.mxu0 0.0
    %2028 = vmatmul.mubr.f32.gmra.mrb[0].mxu0 %v166
    %v2029 = vpop.f32.mrb[0].mxu0
    %v2030 = vadd.f32 0.0, %v2029
    %v2031 = vpop.f32.mrb[0].mxu0
    %2032 = vmatprep.mubr.f32.mxu0 0.0
    %2033 = vmatmul.mubr.f32.gmra.mrb[0].mxu0 %v167
    %v2034 = vpop.f32.mrb[0].mxu0
    %v2035 = vadd.f32 0.0, %v2034
    %v2036 = vpop.f32.mrb[0].mxu0
    %2037 = vmatprep.mubr.f32.mxu0 0.0
    %2038 = vmatmul.mubr.f32.gmra.mrb[0].mxu0 %v168
    %v2039 = vpop.f32.mrb[0].mxu0
    %v2040 = vadd.f32 0.0, %v2039
    %v2041 = vpop.f32.mrb[0].mxu0
    %2042 = vmatprep.mubr.f32.mxu0 0.0
    %2043 = vmatmul.mubr.f32.gmra.mrb[0].mxu0 %v169
    %v2044 = vpop.f32.mrb[0].mxu0
    %v2045 = vadd.f32 0.0, %v2044
    %v2046 = vpop.f32.mrb[0].mxu0
    %2047 = vdwg.mxu0
    %s2048 = scalar_lea.vmem [#allocation7], 1280
    %v2049 = vld [vmem:[%s2048] sm:$0xff]
    %v2050 = vld [vmem:[%s2048 + $0x8] sm:$0xff]
    %v2051 = vld [vmem:[%s2048 + $0x10] sm:$0xff]
    %v2052 = vld [vmem:[%s2048 + $0x18] sm:$0xff]
    %v2053 = vld [vmem:[%s2048 + $0x20] sm:$0xff]
    %v2054 = vld [vmem:[%s2048 + $0x28] sm:$0xff]
    %v2055 = vld [vmem:[%s2048 + $0x30] sm:$0xff]
    %v2056 = vld [vmem:[%s2048 + $0x38] sm:$0xff]
    %v2057 = vld [vmem:[%s2048 + $0x40] sm:$0xff]
    %v2058 = vld [vmem:[%s2048 + $0x48] sm:$0xff]
    %v2059 = vld [vmem:[%s2048 + $0x50] sm:$0xff]
    %v2060 = vld [vmem:[%s2048 + $0x58] sm:$0xff]
    %v2061 = vld [vmem:[%s2048 + $0x60] sm:$0xff]
    %v2062 = vld [vmem:[%s2048 + $0x68] sm:$0xff]
    %v2063 = vld [vmem:[%s2048 + $0x70] sm:$0xff]
    %v2064 = vld [vmem:[%s2048 + $0x78] sm:$0xff]
    %v2065 = vld [vmem:[%s2048 + $0x80] sm:$0xff]
    %v2066 = vld [vmem:[%s2048 + $0x88] sm:$0xff]
    %v2067 = vld [vmem:[%s2048 + $0x90] sm:$0xff]
    %v2068 = vld [vmem:[%s2048 + $0x98] sm:$0xff]
    %v2069 = vld [vmem:[%s2048 + $0xa0] sm:$0xff]
    %v2070 = vld [vmem:[%s2048 + $0xa8] sm:$0xff]
    %v2071 = vld [vmem:[%s2048 + $0xb0] sm:$0xff]
    %v2072 = vld [vmem:[%s2048 + $0xb8] sm:$0xff]
    %v2073 = vld [vmem:[%s2048 + $0xc0] sm:$0xff]
    %v2074 = vld [vmem:[%s2048 + $0xc8] sm:$0xff]
    %v2075 = vld [vmem:[%s2048 + $0xd0] sm:$0xff]
    %v2076 = vld [vmem:[%s2048 + $0xd8] sm:$0xff]
    %v2077 = vld [vmem:[%s2048 + $0xe0] sm:$0xff]
    %v2078 = vld [vmem:[%s2048 + $0xe8] sm:$0xff]
    %v2079 = vld [vmem:[%s2048 + $0xf0] sm:$0xff]
    %v2080 = vld [vmem:[%s2048 + $0xf8] sm:$0xff]
    %s2081 = scalar_lea.vmem [#allocation8], 5
    %v2082 = vld [vmem:[%s2081] sm:$0x1]
    %v2084 = vlaneseq
    %v2085 = vshrl.u32 %v2084, 7
    %v2086 = vsub.s32 0, %v2085
    %v2087 = vrot.slane %v2082, %v2086
    %2089 = vmatprep.subr.mxu0 0.0
    %2090 = vmatpush1.msra.mxu0 %v2049
    %2091 = vmatprep.subr.mxu0 0.0
    %2092 = vmatpush1.msra.mxu0 %v2050
    %2093 = vmatprep.subr.mxu0 0.0
    %2094 = vmatpush1.msra.mxu0 %v2051
    %2095 = vmatprep.subr.mxu0 0.0
    %2096 = vmatpush1.msra.mxu0 %v2052
    %2097 = vmatprep.subr.mxu0 0.0
    %2098 = vmatpush1.msra.mxu0 %v2053
    %2099 = vmatprep.subr.mxu0 0.0
    %2100 = vmatpush1.msra.mxu0 %v2054
    %2101 = vmatprep.subr.mxu0 0.0
    %2102 = vmatpush1.msra.mxu0 %v2055
    %2103 = vmatprep.subr.mxu0 0.0
    %2104 = vmatpush1.msra.mxu0 %v2056
    %2105 = vmatprep.subr.mxu0 0.0
    %2106 = vmatpush1.msra.mxu0 %v2057
    %2107 = vmatprep.subr.mxu0 0.0
    %2108 = vmatpush1.msra.mxu0 %v2058
    %2109 = vmatprep.subr.mxu0 0.0
    %2110 = vmatpush1.msra.mxu0 %v2059
    %2111 = vmatprep.subr.mxu0 0.0
    %2112 = vmatpush1.msra.mxu0 %v2060
    %2113 = vmatprep.subr.mxu0 0.0
    %2114 = vmatpush1.msra.mxu0 %v2061
    %2115 = vmatprep.subr.mxu0 0.0
    %2116 = vmatpush1.msra.mxu0 %v2062
    %2117 = vmatprep.subr.mxu0 0.0
    %2118 = vmatpush1.msra.mxu0 %v2063
    %2119 = vmatprep.subr.mxu0 0.0
    %2120 = vmatpush1.msra.mxu0 %v2064
    %2121 = vmatprep.subr.mxu0 0.0
    %2122 = vmatpush1.msra.mxu0 %v2065
    %2123 = vmatprep.subr.mxu0 0.0
    %2124 = vmatpush1.msra.mxu0 %v2066
    %2125 = vmatprep.subr.mxu0 0.0
    %2126 = vmatpush1.msra.mxu0 %v2067
    %2127 = vmatprep.subr.mxu0 0.0
    %2128 = vmatpush1.msra.mxu0 %v2068
    %2129 = vmatprep.subr.mxu0 0.0
    %2130 = vmatpush1.msra.mxu0 %v2069
    %2131 = vmatprep.subr.mxu0 0.0
    %2132 = vmatpush1.msra.mxu0 %v2070
    %2133 = vmatprep.subr.mxu0 0.0
    %2134 = vmatpush1.msra.mxu0 %v2071
    %2135 = vmatprep.subr.mxu0 0.0
    %2136 = vmatpush1.msra.mxu0 %v2072
    %2137 = vmatprep.subr.mxu0 0.0
    %2138 = vmatpush1.msra.mxu0 %v2073
    %2139 = vmatprep.subr.mxu0 0.0
    %2140 = vmatpush1.msra.mxu0 %v2074
    %2141 = vmatprep.subr.mxu0 0.0
    %2142 = vmatpush1.msra.mxu0 %v2075
    %2143 = vmatprep.subr.mxu0 0.0
    %2144 = vmatpush1.msra.mxu0 %v2076
    %2145 = vmatprep.subr.mxu0 0.0
    %2146 = vmatpush1.msra.mxu0 %v2077
    %2147 = vmatprep.subr.mxu0 0.0
    %2148 = vmatpush1.msra.mxu0 %v2078
    %2149 = vmatprep.subr.mxu0 0.0
    %2150 = vmatpush1.msra.mxu0 %v2079
    %2151 = vmatprep.subr.mxu0 0.0
    %2152 = vmatpush1.msra.mxu0 %v2080
    %2153 = vmatprep.mubr.f32.mxu0 %v1540
    %2154 = vmatmul.mubr.f32.gmra.mrb[0].mxu0 %v1970
    %v2155 = vpop.f32.mrb[0].mxu0
    %v2156 = vadd.f32 %v2087, %v2155
    %v2157 = vpop.f32.mrb[0].mxu0
    %2158 = vmatprep.mubr.f32.mxu0 %v1541
    %2159 = vmatmul.mubr.f32.gmra.mrb[0].mxu0 %v1975
    %v2160 = vpop.f32.mrb[0].mxu0
    %v2161 = vadd.f32 %v2087, %v2160
    %v2162 = vpop.f32.mrb[0].mxu0
    %2163 = vmatprep.mubr.f32.mxu0 %v1542
    %2164 = vmatmul.mubr.f32.gmra.mrb[0].mxu0 %v1980
    %v2165 = vpop.f32.mrb[0].mxu0
    %v2166 = vadd.f32 %v2087, %v2165
    %v2167 = vpop.f32.mrb[0].mxu0
    %2168 = vmatprep.mubr.f32.mxu0 %v1543
    %2169 = vmatmul.mubr.f32.gmra.mrb[0].mxu0 %v1985
    %v2170 = vpop.f32.mrb[0].mxu0
    %v2171 = vadd.f32 %v2087, %v2170
    %v2172 = vpop.f32.mrb[0].mxu0
    %2173 = vmatprep.mubr.f32.mxu0 %v1544
    %2174 = vmatmul.mubr.f32.gmra.mrb[0].mxu0 %v1990
    %v2175 = vpop.f32.mrb[0].mxu0
    %v2176 = vadd.f32 %v2087, %v2175
    %v2177 = vpop.f32.mrb[0].mxu0
    %2178 = vmatprep.mubr.f32.mxu0 %v1545
    %2179 = vmatmul.mubr.f32.gmra.mrb[0].mxu0 %v1995
    %v2180 = vpop.f32.mrb[0].mxu0
    %v2181 = vadd.f32 %v2087, %v2180
    %v2182 = vpop.f32.mrb[0].mxu0
    %2183 = vmatprep.mubr.f32.mxu0 %v1546
    %2184 = vmatmul.mubr.f32.gmra.mrb[0].mxu0 %v2000
    %v2185 = vpop.f32.mrb[0].mxu0
    %v2186 = vadd.f32 %v2087, %v2185
    %v2187 = vpop.f32.mrb[0].mxu0
    %2188 = vmatprep.mubr.f32.mxu0 %v1547
    %2189 = vmatmul.mubr.f32.gmra.mrb[0].mxu0 %v2005
    %v2190 = vpop.f32.mrb[0].mxu0
    %v2191 = vadd.f32 %v2087, %v2190
    %v2192 = vpop.f32.mrb[0].mxu0
    %2193 = vmatprep.mubr.f32.mxu0 %v1548
    %2194 = vmatmul.mubr.f32.gmra.mrb[0].mxu0 %v2010
    %v2195 = vpop.f32.mrb[0].mxu0
    %v2196 = vadd.f32 %v2087, %v2195
    %v2197 = vpop.f32.mrb[0].mxu0
    %2198 = vmatprep.mubr.f32.mxu0 %v1549
    %2199 = vmatmul.mubr.f32.gmra.mrb[0].mxu0 %v2015
    %v2200 = vpop.f32.mrb[0].mxu0
    %v2201 = vadd.f32 %v2087, %v2200
    %v2202 = vpop.f32.mrb[0].mxu0
    %2203 = vmatprep.mubr.f32.mxu0 %v1550
    %2204 = vmatmul.mubr.f32.gmra.mrb[0].mxu0 %v2020
    %v2205 = vpop.f32.mrb[0].mxu0
    %v2206 = vadd.f32 %v2087, %v2205
    %v2207 = vpop.f32.mrb[0].mxu0
    %2208 = vmatprep.mubr.f32.mxu0 %v1551
    %2209 = vmatmul.mubr.f32.gmra.mrb[0].mxu0 %v2025
    %v2210 = vpop.f32.mrb[0].mxu0
    %v2211 = vadd.f32 %v2087, %v2210
    %v2212 = vpop.f32.mrb[0].mxu0
    %2213 = vmatprep.mubr.f32.mxu0 %v1552
    %2214 = vmatmul.mubr.f32.gmra.mrb[0].mxu0 %v2030
    %v2215 = vpop.f32.mrb[0].mxu0
    %v2216 = vadd.f32 %v2087, %v2215
    %v2217 = vpop.f32.mrb[0].mxu0
    %2218 = vmatprep.mubr.f32.mxu0 %v1553
    %2219 = vmatmul.mubr.f32.gmra.mrb[0].mxu0 %v2035
    %v2220 = vpop.f32.mrb[0].mxu0
    %v2221 = vadd.f32 %v2087, %v2220
    %v2222 = vpop.f32.mrb[0].mxu0
    %2223 = vmatprep.mubr.f32.mxu0 %v1554
    %2224 = vmatmul.mubr.f32.gmra.mrb[0].mxu0 %v2040
    %v2225 = vpop.f32.mrb[0].mxu0
    %v2226 = vadd.f32 %v2087, %v2225
    %v2227 = vpop.f32.mrb[0].mxu0
    %2228 = vmatprep.mubr.f32.mxu0 %v1555
    %2229 = vmatmul.mubr.f32.gmra.mrb[0].mxu0 %v2045
    %v2230 = vpop.f32.mrb[0].mxu0
    %v2231 = vadd.f32 %v2087, %v2230
    %v2232 = vpop.f32.mrb[0].mxu0
    %2233 = vdwg.mxu0
    %v2234 = vmax.f32 %v2156, 0.0
    %v2235 = vmax.f32 %v2161, 0.0
    %v2236 = vmax.f32 %v2166, 0.0
    %v2237 = vmax.f32 %v2171, 0.0
    %v2238 = vmax.f32 %v2176, 0.0
    %v2239 = vmax.f32 %v2181, 0.0
    %v2240 = vmax.f32 %v2186, 0.0
    %v2241 = vmax.f32 %v2191, 0.0
    %v2242 = vmax.f32 %v2196, 0.0
    %v2243 = vmax.f32 %v2201, 0.0
    %v2244 = vmax.f32 %v2206, 0.0
    %v2245 = vmax.f32 %v2211, 0.0
    %v2246 = vmax.f32 %v2216, 0.0
    %v2247 = vmax.f32 %v2221, 0.0
    %v2248 = vmax.f32 %v2226, 0.0
    %v2249 = vmax.f32 %v2231, 0.0
    %2250 = vmatprep.subr.mxu0 0.0
    %2251 = vmatpush1.msra.mxu0 %v2234
    %2252 = vmatprep.subr.mxu0 0.0
    %2253 = vmatpush1.msra.mxu0 %v2235
    %2254 = vmatprep.subr.mxu0 0.0
    %2255 = vmatpush1.msra.mxu0 %v2236
    %2256 = vmatprep.subr.mxu0 0.0
    %2257 = vmatpush1.msra.mxu0 %v2237
    %2258 = vmatprep.subr.mxu0 0.0
    %2259 = vmatpush1.msra.mxu0 %v2238
    %2260 = vmatprep.subr.mxu0 0.0
    %2261 = vmatpush1.msra.mxu0 %v2239
    %2262 = vmatprep.subr.mxu0 0.0
    %2263 = vmatpush1.msra.mxu0 %v2240
    %2264 = vmatprep.subr.mxu0 0.0
    %2265 = vmatpush1.msra.mxu0 %v2241
    %2266 = vmatprep.subr.mxu0 0.0
    %2267 = vmatpush1.msra.mxu0 %v2242
    %2268 = vmatprep.subr.mxu0 0.0
    %2269 = vmatpush1.msra.mxu0 %v2243
    %2270 = vmatprep.subr.mxu0 0.0
    %2271 = vmatpush1.msra.mxu0 %v2244
    %2272 = vmatprep.subr.mxu0 0.0
    %2273 = vmatpush1.msra.mxu0 %v2245
    %2274 = vmatprep.subr.mxu0 0.0
    %2275 = vmatpush1.msra.mxu0 %v2246
    %2276 = vmatprep.subr.mxu0 0.0
    %2277 = vmatpush1.msra.mxu0 %v2247
    %2278 = vmatprep.subr.mxu0 0.0
    %2279 = vmatpush1.msra.mxu0 %v2248
    %2280 = vmatprep.subr.mxu0 0.0
    %2281 = vmatpush1.msra.mxu0 %v2249
    %2282 = vmatprep.subr.mxu0 0.0
    %2283 = vmatpush1.msra.mxu0 0.0
    %2284 = vmatprep.subr.mxu0 0.0
    %2285 = vmatpush1.msra.mxu0 0.0
    %2286 = vmatprep.subr.mxu0 0.0
    %2287 = vmatpush1.msra.mxu0 0.0
    %2288 = vmatprep.subr.mxu0 0.0
    %2289 = vmatpush1.msra.mxu0 0.0
    %2290 = vmatprep.subr.mxu0 0.0
    %2291 = vmatpush1.msra.mxu0 0.0
    %2292 = vmatprep.subr.mxu0 0.0
    %2293 = vmatpush1.msra.mxu0 0.0
    %2294 = vmatprep.subr.mxu0 0.0
    %2295 = vmatpush1.msra.mxu0 0.0
    %2296 = vmatprep.subr.mxu0 0.0
    %2297 = vmatpush1.msra.mxu0 0.0
    %2298 = vmatprep.subr.mxu0 0.0
    %2299 = vmatpush1.msra.mxu0 0.0
    %2300 = vmatprep.subr.mxu0 0.0
    %2301 = vmatpush1.msra.mxu0 0.0
    %2302 = vmatprep.subr.mxu0 0.0
    %2303 = vmatpush1.msra.mxu0 0.0
    %2304 = vmatprep.subr.mxu0 0.0
    %2305 = vmatpush1.msra.mxu0 0.0
    %2306 = vmatprep.subr.mxu0 0.0
    %2307 = vmatpush1.msra.mxu0 0.0
    %2308 = vmatprep.subr.mxu0 0.0
    %2309 = vmatpush1.msra.mxu0 0.0
    %2310 = vmatprep.subr.mxu0 0.0
    %2311 = vmatpush1.msra.mxu0 0.0
    %2312 = vmatprep.subr.mxu0 0.0
    %2313 = vmatpush1.msra.mxu0 0.0
    %2314 = vmatprep.mubr.f32.mxu0 0.0
    %2315 = vmatmul.mubr.f32.gmra.mrb[0].mxu0 %v137
    %v2316 = vpop.f32.mrb[0].mxu0
    %v2317 = vadd.f32 0.0, %v2316
    %v2318 = vpop.f32.mrb[0].mxu0
    %2319 = vmatprep.mubr.f32.mxu0 0.0
    %2320 = vmatmul.mubr.f32.gmra.mrb[0].mxu0 %v138
    %v2321 = vpop.f32.mrb[0].mxu0
    %v2322 = vadd.f32 0.0, %v2321
    %v2323 = vpop.f32.mrb[0].mxu0
    %2324 = vmatprep.mubr.f32.mxu0 0.0
    %2325 = vmatmul.mubr.f32.gmra.mrb[0].mxu0 %v139
    %v2326 = vpop.f32.mrb[0].mxu0
    %v2327 = vadd.f32 0.0, %v2326
    %v2328 = vpop.f32.mrb[0].mxu0
    %2329 = vmatprep.mubr.f32.mxu0 0.0
    %2330 = vmatmul.mubr.f32.gmra.mrb[0].mxu0 %v140
    %v2331 = vpop.f32.mrb[0].mxu0
    %v2332 = vadd.f32 0.0, %v2331
    %v2333 = vpop.f32.mrb[0].mxu0
    %2334 = vmatprep.mubr.f32.mxu0 0.0
    %2335 = vmatmul.mubr.f32.gmra.mrb[0].mxu0 %v141
    %v2336 = vpop.f32.mrb[0].mxu0
    %v2337 = vadd.f32 0.0, %v2336
    %v2338 = vpop.f32.mrb[0].mxu0
    %2339 = vmatprep.mubr.f32.mxu0 0.0
    %2340 = vmatmul.mubr.f32.gmra.mrb[0].mxu0 %v142
    %v2341 = vpop.f32.mrb[0].mxu0
    %v2342 = vadd.f32 0.0, %v2341
    %v2343 = vpop.f32.mrb[0].mxu0
    %2344 = vmatprep.mubr.f32.mxu0 0.0
    %2345 = vmatmul.mubr.f32.gmra.mrb[0].mxu0 %v143
    %v2346 = vpop.f32.mrb[0].mxu0
    %v2347 = vadd.f32 0.0, %v2346
    %v2348 = vpop.f32.mrb[0].mxu0
    %2349 = vmatprep.mubr.f32.mxu0 0.0
    %2350 = vmatmul.mubr.f32.gmra.mrb[0].mxu0 %v144
    %v2351 = vpop.f32.mrb[0].mxu0
    %v2352 = vadd.f32 0.0, %v2351
    %v2353 = vpop.f32.mrb[0].mxu0
    %2354 = vmatprep.mubr.f32.mxu0 0.0
    %2355 = vmatmul.mubr.f32.gmra.mrb[0].mxu0 %v145
    %v2356 = vpop.f32.mrb[0].mxu0
    %v2357 = vadd.f32 0.0, %v2356
    %v2358 = vpop.f32.mrb[0].mxu0
    %2359 = vmatprep.mubr.f32.mxu0 0.0
    %2360 = vmatmul.mubr.f32.gmra.mrb[0].mxu0 %v146
    %v2361 = vpop.f32.mrb[0].mxu0
    %v2362 = vadd.f32 0.0, %v2361
    %v2363 = vpop.f32.mrb[0].mxu0
    %2364 = vmatprep.mubr.f32.mxu0 0.0
    %2365 = vmatmul.mubr.f32.gmra.mrb[0].mxu0 %v147
    %v2366 = vpop.f32.mrb[0].mxu0
    %v2367 = vadd.f32 0.0, %v2366
    %v2368 = vpop.f32.mrb[0].mxu0
    %2369 = vmatprep.mubr.f32.mxu0 0.0
    %2370 = vmatmul.mubr.f32.gmra.mrb[0].mxu0 %v148
    %v2371 = vpop.f32.mrb[0].mxu0
    %v2372 = vadd.f32 0.0, %v2371
    %v2373 = vpop.f32.mrb[0].mxu0
    %2374 = vmatprep.mubr.f32.mxu0 0.0
    %2375 = vmatmul.mubr.f32.gmra.mrb[0].mxu0 %v149
    %v2376 = vpop.f32.mrb[0].mxu0
    %v2377 = vadd.f32 0.0, %v2376
    %v2378 = vpop.f32.mrb[0].mxu0
    %2379 = vmatprep.mubr.f32.mxu0 0.0
    %2380 = vmatmul.mubr.f32.gmra.mrb[0].mxu0 %v150
    %v2381 = vpop.f32.mrb[0].mxu0
    %v2382 = vadd.f32 0.0, %v2381
    %v2383 = vpop.f32.mrb[0].mxu0
    %2384 = vmatprep.mubr.f32.mxu0 0.0
    %2385 = vmatmul.mubr.f32.gmra.mrb[0].mxu0 %v151
    %v2386 = vpop.f32.mrb[0].mxu0
    %v2387 = vadd.f32 0.0, %v2386
    %v2388 = vpop.f32.mrb[0].mxu0
    %2389 = vmatprep.mubr.f32.mxu0 0.0
    %2390 = vmatmul.mubr.f32.gmra.mrb[0].mxu0 %v152
    %v2391 = vpop.f32.mrb[0].mxu0
    %v2392 = vadd.f32 0.0, %v2391
    %v2393 = vpop.f32.mrb[0].mxu0
    %2394 = vdwg.mxu0
    %s2395 = scalar_lea.vmem [#allocation7], 1536
    %v2396 = vld [vmem:[%s2395] sm:$0xff]
    %v2397 = vld [vmem:[%s2395 + $0x8] sm:$0xff]
    %v2398 = vld [vmem:[%s2395 + $0x10] sm:$0xff]
    %v2399 = vld [vmem:[%s2395 + $0x18] sm:$0xff]
    %v2400 = vld [vmem:[%s2395 + $0x20] sm:$0xff]
    %v2401 = vld [vmem:[%s2395 + $0x28] sm:$0xff]
    %v2402 = vld [vmem:[%s2395 + $0x30] sm:$0xff]
    %v2403 = vld [vmem:[%s2395 + $0x38] sm:$0xff]
    %v2404 = vld [vmem:[%s2395 + $0x40] sm:$0xff]
    %v2405 = vld [vmem:[%s2395 + $0x48] sm:$0xff]
    %v2406 = vld [vmem:[%s2395 + $0x50] sm:$0xff]
    %v2407 = vld [vmem:[%s2395 + $0x58] sm:$0xff]
    %v2408 = vld [vmem:[%s2395 + $0x60] sm:$0xff]
    %v2409 = vld [vmem:[%s2395 + $0x68] sm:$0xff]
    %v2410 = vld [vmem:[%s2395 + $0x70] sm:$0xff]
    %v2411 = vld [vmem:[%s2395 + $0x78] sm:$0xff]
    %v2412 = vld [vmem:[%s2395 + $0x80] sm:$0xff]
    %v2413 = vld [vmem:[%s2395 + $0x88] sm:$0xff]
    %v2414 = vld [vmem:[%s2395 + $0x90] sm:$0xff]
    %v2415 = vld [vmem:[%s2395 + $0x98] sm:$0xff]
    %v2416 = vld [vmem:[%s2395 + $0xa0] sm:$0xff]
    %v2417 = vld [vmem:[%s2395 + $0xa8] sm:$0xff]
    %v2418 = vld [vmem:[%s2395 + $0xb0] sm:$0xff]
    %v2419 = vld [vmem:[%s2395 + $0xb8] sm:$0xff]
    %v2420 = vld [vmem:[%s2395 + $0xc0] sm:$0xff]
    %v2421 = vld [vmem:[%s2395 + $0xc8] sm:$0xff]
    %v2422 = vld [vmem:[%s2395 + $0xd0] sm:$0xff]
    %v2423 = vld [vmem:[%s2395 + $0xd8] sm:$0xff]
    %v2424 = vld [vmem:[%s2395 + $0xe0] sm:$0xff]
    %v2425 = vld [vmem:[%s2395 + $0xe8] sm:$0xff]
    %v2426 = vld [vmem:[%s2395 + $0xf0] sm:$0xff]
    %v2427 = vld [vmem:[%s2395 + $0xf8] sm:$0xff]
    %s2428 = scalar_lea.vmem [#allocation8], 6
    %v2429 = vld [vmem:[%s2428] sm:$0x1]
    %v2431 = vlaneseq
    %v2432 = vshrl.u32 %v2431, 7
    %v2433 = vsub.s32 0, %v2432
    %v2434 = vrot.slane %v2429, %v2433
    %2436 = vmatprep.subr.mxu0 0.0
    %2437 = vmatpush1.msra.mxu0 %v2396
    %2438 = vmatprep.subr.mxu0 0.0
    %2439 = vmatpush1.msra.mxu0 %v2397
    %2440 = vmatprep.subr.mxu0 0.0
    %2441 = vmatpush1.msra.mxu0 %v2398
    %2442 = vmatprep.subr.mxu0 0.0
    %2443 = vmatpush1.msra.mxu0 %v2399
    %2444 = vmatprep.subr.mxu0 0.0
    %2445 = vmatpush1.msra.mxu0 %v2400
    %2446 = vmatprep.subr.mxu0 0.0
    %2447 = vmatpush1.msra.mxu0 %v2401
    %2448 = vmatprep.subr.mxu0 0.0
    %2449 = vmatpush1.msra.mxu0 %v2402
    %2450 = vmatprep.subr.mxu0 0.0
    %2451 = vmatpush1.msra.mxu0 %v2403
    %2452 = vmatprep.subr.mxu0 0.0
    %2453 = vmatpush1.msra.mxu0 %v2404
    %2454 = vmatprep.subr.mxu0 0.0
    %2455 = vmatpush1.msra.mxu0 %v2405
    %2456 = vmatprep.subr.mxu0 0.0
    %2457 = vmatpush1.msra.mxu0 %v2406
    %2458 = vmatprep.subr.mxu0 0.0
    %2459 = vmatpush1.msra.mxu0 %v2407
    %2460 = vmatprep.subr.mxu0 0.0
    %2461 = vmatpush1.msra.mxu0 %v2408
    %2462 = vmatprep.subr.mxu0 0.0
    %2463 = vmatpush1.msra.mxu0 %v2409
    %2464 = vmatprep.subr.mxu0 0.0
    %2465 = vmatpush1.msra.mxu0 %v2410
    %2466 = vmatprep.subr.mxu0 0.0
    %2467 = vmatpush1.msra.mxu0 %v2411
    %2468 = vmatprep.subr.mxu0 0.0
    %2469 = vmatpush1.msra.mxu0 %v2412
    %2470 = vmatprep.subr.mxu0 0.0
    %2471 = vmatpush1.msra.mxu0 %v2413
    %2472 = vmatprep.subr.mxu0 0.0
    %2473 = vmatpush1.msra.mxu0 %v2414
    %2474 = vmatprep.subr.mxu0 0.0
    %2475 = vmatpush1.msra.mxu0 %v2415
    %2476 = vmatprep.subr.mxu0 0.0
    %2477 = vmatpush1.msra.mxu0 %v2416
    %2478 = vmatprep.subr.mxu0 0.0
    %2479 = vmatpush1.msra.mxu0 %v2417
    %2480 = vmatprep.subr.mxu0 0.0
    %2481 = vmatpush1.msra.mxu0 %v2418
    %2482 = vmatprep.subr.mxu0 0.0
    %2483 = vmatpush1.msra.mxu0 %v2419
    %2484 = vmatprep.subr.mxu0 0.0
    %2485 = vmatpush1.msra.mxu0 %v2420
    %2486 = vmatprep.subr.mxu0 0.0
    %2487 = vmatpush1.msra.mxu0 %v2421
    %2488 = vmatprep.subr.mxu0 0.0
    %2489 = vmatpush1.msra.mxu0 %v2422
    %2490 = vmatprep.subr.mxu0 0.0
    %2491 = vmatpush1.msra.mxu0 %v2423
    %2492 = vmatprep.subr.mxu0 0.0
    %2493 = vmatpush1.msra.mxu0 %v2424
    %2494 = vmatprep.subr.mxu0 0.0
    %2495 = vmatpush1.msra.mxu0 %v2425
    %2496 = vmatprep.subr.mxu0 0.0
    %2497 = vmatpush1.msra.mxu0 %v2426
    %2498 = vmatprep.subr.mxu0 0.0
    %2499 = vmatpush1.msra.mxu0 %v2427
    %2500 = vmatprep.mubr.f32.mxu0 %v1887
    %2501 = vmatmul.mubr.f32.gmra.mrb[0].mxu0 %v2317
    %v2502 = vpop.f32.mrb[0].mxu0
    %v2503 = vadd.f32 %v2434, %v2502
    %v2504 = vpop.f32.mrb[0].mxu0
    %2505 = vmatprep.mubr.f32.mxu0 %v1888
    %2506 = vmatmul.mubr.f32.gmra.mrb[0].mxu0 %v2322
    %v2507 = vpop.f32.mrb[0].mxu0
    %v2508 = vadd.f32 %v2434, %v2507
    %v2509 = vpop.f32.mrb[0].mxu0
    %2510 = vmatprep.mubr.f32.mxu0 %v1889
    %2511 = vmatmul.mubr.f32.gmra.mrb[0].mxu0 %v2327
    %v2512 = vpop.f32.mrb[0].mxu0
    %v2513 = vadd.f32 %v2434, %v2512
    %v2514 = vpop.f32.mrb[0].mxu0
    %2515 = vmatprep.mubr.f32.mxu0 %v1890
    %2516 = vmatmul.mubr.f32.gmra.mrb[0].mxu0 %v2332
    %v2517 = vpop.f32.mrb[0].mxu0
    %v2518 = vadd.f32 %v2434, %v2517
    %v2519 = vpop.f32.mrb[0].mxu0
    %2520 = vmatprep.mubr.f32.mxu0 %v1891
    %2521 = vmatmul.mubr.f32.gmra.mrb[0].mxu0 %v2337
    %v2522 = vpop.f32.mrb[0].mxu0
    %v2523 = vadd.f32 %v2434, %v2522
    %v2524 = vpop.f32.mrb[0].mxu0
    %2525 = vmatprep.mubr.f32.mxu0 %v1892
    %2526 = vmatmul.mubr.f32.gmra.mrb[0].mxu0 %v2342
    %v2527 = vpop.f32.mrb[0].mxu0
    %v2528 = vadd.f32 %v2434, %v2527
    %v2529 = vpop.f32.mrb[0].mxu0
    %2530 = vmatprep.mubr.f32.mxu0 %v1893
    %2531 = vmatmul.mubr.f32.gmra.mrb[0].mxu0 %v2347
    %v2532 = vpop.f32.mrb[0].mxu0
    %v2533 = vadd.f32 %v2434, %v2532
    %v2534 = vpop.f32.mrb[0].mxu0
    %2535 = vmatprep.mubr.f32.mxu0 %v1894
    %2536 = vmatmul.mubr.f32.gmra.mrb[0].mxu0 %v2352
    %v2537 = vpop.f32.mrb[0].mxu0
    %v2538 = vadd.f32 %v2434, %v2537
    %v2539 = vpop.f32.mrb[0].mxu0
    %2540 = vmatprep.mubr.f32.mxu0 %v1895
    %2541 = vmatmul.mubr.f32.gmra.mrb[0].mxu0 %v2357
    %v2542 = vpop.f32.mrb[0].mxu0
    %v2543 = vadd.f32 %v2434, %v2542
    %v2544 = vpop.f32.mrb[0].mxu0
    %2545 = vmatprep.mubr.f32.mxu0 %v1896
    %2546 = vmatmul.mubr.f32.gmra.mrb[0].mxu0 %v2362
    %v2547 = vpop.f32.mrb[0].mxu0
    %v2548 = vadd.f32 %v2434, %v2547
    %v2549 = vpop.f32.mrb[0].mxu0
    %2550 = vmatprep.mubr.f32.mxu0 %v1897
    %2551 = vmatmul.mubr.f32.gmra.mrb[0].mxu0 %v2367
    %v2552 = vpop.f32.mrb[0].mxu0
    %v2553 = vadd.f32 %v2434, %v2552
    %v2554 = vpop.f32.mrb[0].mxu0
    %2555 = vmatprep.mubr.f32.mxu0 %v1898
    %2556 = vmatmul.mubr.f32.gmra.mrb[0].mxu0 %v2372
    %v2557 = vpop.f32.mrb[0].mxu0
    %v2558 = vadd.f32 %v2434, %v2557
    %v2559 = vpop.f32.mrb[0].mxu0
    %2560 = vmatprep.mubr.f32.mxu0 %v1899
    %2561 = vmatmul.mubr.f32.gmra.mrb[0].mxu0 %v2377
    %v2562 = vpop.f32.mrb[0].mxu0
    %v2563 = vadd.f32 %v2434, %v2562
    %v2564 = vpop.f32.mrb[0].mxu0
    %2565 = vmatprep.mubr.f32.mxu0 %v1900
    %2566 = vmatmul.mubr.f32.gmra.mrb[0].mxu0 %v2382
    %v2567 = vpop.f32.mrb[0].mxu0
    %v2568 = vadd.f32 %v2434, %v2567
    %v2569 = vpop.f32.mrb[0].mxu0
    %2570 = vmatprep.mubr.f32.mxu0 %v1901
    %2571 = vmatmul.mubr.f32.gmra.mrb[0].mxu0 %v2387
    %v2572 = vpop.f32.mrb[0].mxu0
    %v2573 = vadd.f32 %v2434, %v2572
    %v2574 = vpop.f32.mrb[0].mxu0
    %2575 = vmatprep.mubr.f32.mxu0 %v1902
    %2576 = vmatmul.mubr.f32.gmra.mrb[0].mxu0 %v2392
    %v2577 = vpop.f32.mrb[0].mxu0
    %v2578 = vadd.f32 %v2434, %v2577
    %v2579 = vpop.f32.mrb[0].mxu0
    %2580 = vdwg.mxu0
    %v2581 = vmax.f32 %v2503, 0.0
    %v2582 = vmax.f32 %v2508, 0.0
    %v2583 = vmax.f32 %v2513, 0.0
    %v2584 = vmax.f32 %v2518, 0.0
    %v2585 = vmax.f32 %v2523, 0.0
    %v2586 = vmax.f32 %v2528, 0.0
    %v2587 = vmax.f32 %v2533, 0.0
    %v2588 = vmax.f32 %v2538, 0.0
    %v2589 = vmax.f32 %v2543, 0.0
    %v2590 = vmax.f32 %v2548, 0.0
    %v2591 = vmax.f32 %v2553, 0.0
    %v2592 = vmax.f32 %v2558, 0.0
    %v2593 = vmax.f32 %v2563, 0.0
    %v2594 = vmax.f32 %v2568, 0.0
    %v2595 = vmax.f32 %v2573, 0.0
    %v2596 = vmax.f32 %v2578, 0.0
    %2597 = vmatprep.subr.mxu0 0.0
    %2598 = vmatpush1.msra.mxu0 %v1887
    %2599 = vmatprep.subr.mxu0 0.0
    %2600 = vmatpush1.msra.mxu0 %v1888
    %2601 = vmatprep.subr.mxu0 0.0
    %2602 = vmatpush1.msra.mxu0 %v1889
    %2603 = vmatprep.subr.mxu0 0.0
    %2604 = vmatpush1.msra.mxu0 %v1890
    %2605 = vmatprep.subr.mxu0 0.0
    %2606 = vmatpush1.msra.mxu0 %v1891
    %2607 = vmatprep.subr.mxu0 0.0
    %2608 = vmatpush1.msra.mxu0 %v1892
    %2609 = vmatprep.subr.mxu0 0.0
    %2610 = vmatpush1.msra.mxu0 %v1893
    %2611 = vmatprep.subr.mxu0 0.0
    %2612 = vmatpush1.msra.mxu0 %v1894
    %2613 = vmatprep.subr.mxu0 0.0
    %2614 = vmatpush1.msra.mxu0 %v1895
    %2615 = vmatprep.subr.mxu0 0.0
    %2616 = vmatpush1.msra.mxu0 %v1896
    %2617 = vmatprep.subr.mxu0 0.0
    %2618 = vmatpush1.msra.mxu0 %v1897
    %2619 = vmatprep.subr.mxu0 0.0
    %2620 = vmatpush1.msra.mxu0 %v1898
    %2621 = vmatprep.subr.mxu0 0.0
    %2622 = vmatpush1.msra.mxu0 %v1899
    %2623 = vmatprep.subr.mxu0 0.0
    %2624 = vmatpush1.msra.mxu0 %v1900
    %2625 = vmatprep.subr.mxu0 0.0
    %2626 = vmatpush1.msra.mxu0 %v1901
    %2627 = vmatprep.subr.mxu0 0.0
    %2628 = vmatpush1.msra.mxu0 %v1902
    %2629 = vmatprep.subr.mxu0 0.0
    %2630 = vmatpush1.msra.mxu0 0.0
    %2631 = vmatprep.subr.mxu0 0.0
    %2632 = vmatpush1.msra.mxu0 0.0
    %2633 = vmatprep.subr.mxu0 0.0
    %2634 = vmatpush1.msra.mxu0 0.0
    %2635 = vmatprep.subr.mxu0 0.0
    %2636 = vmatpush1.msra.mxu0 0.0
    %2637 = vmatprep.subr.mxu0 0.0
    %2638 = vmatpush1.msra.mxu0 0.0
    %2639 = vmatprep.subr.mxu0 0.0
    %2640 = vmatpush1.msra.mxu0 0.0
    %2641 = vmatprep.subr.mxu0 0.0
    %2642 = vmatpush1.msra.mxu0 0.0
    %2643 = vmatprep.subr.mxu0 0.0
    %2644 = vmatpush1.msra.mxu0 0.0
    %2645 = vmatprep.subr.mxu0 0.0
    %2646 = vmatpush1.msra.mxu0 0.0
    %2647 = vmatprep.subr.mxu0 0.0
    %2648 = vmatpush1.msra.mxu0 0.0
    %2649 = vmatprep.subr.mxu0 0.0
    %2650 = vmatpush1.msra.mxu0 0.0
    %2651 = vmatprep.subr.mxu0 0.0
    %2652 = vmatpush1.msra.mxu0 0.0
    %2653 = vmatprep.subr.mxu0 0.0
    %2654 = vmatpush1.msra.mxu0 0.0
    %2655 = vmatprep.subr.mxu0 0.0
    %2656 = vmatpush1.msra.mxu0 0.0
    %2657 = vmatprep.subr.mxu0 0.0
    %2658 = vmatpush1.msra.mxu0 0.0
    %2659 = vmatprep.subr.mxu0 0.0
    %2660 = vmatpush1.msra.mxu0 0.0
    %2661 = vmatprep.mubr.f32.mxu0 0.0
    %2662 = vmatmul.mubr.f32.gmra.mrb[0].mxu0 %v154
    %v2663 = vpop.f32.mrb[0].mxu0
    %v2664 = vadd.f32 0.0, %v2663
    %v2665 = vpop.f32.mrb[0].mxu0
    %2666 = vmatprep.mubr.f32.mxu0 0.0
    %2667 = vmatmul.mubr.f32.gmra.mrb[0].mxu0 %v155
    %v2668 = vpop.f32.mrb[0].mxu0
    %v2669 = vadd.f32 0.0, %v2668
    %v2670 = vpop.f32.mrb[0].mxu0
    %2671 = vmatprep.mubr.f32.mxu0 0.0
    %2672 = vmatmul.mubr.f32.gmra.mrb[0].mxu0 %v156
    %v2673 = vpop.f32.mrb[0].mxu0
    %v2674 = vadd.f32 0.0, %v2673
    %v2675 = vpop.f32.mrb[0].mxu0
    %2676 = vmatprep.mubr.f32.mxu0 0.0
    %2677 = vmatmul.mubr.f32.gmra.mrb[0].mxu0 %v157
    %v2678 = vpop.f32.mrb[0].mxu0
    %v2679 = vadd.f32 0.0, %v2678
    %v2680 = vpop.f32.mrb[0].mxu0
    %2681 = vmatprep.mubr.f32.mxu0 0.0
    %2682 = vmatmul.mubr.f32.gmra.mrb[0].mxu0 %v158
    %v2683 = vpop.f32.mrb[0].mxu0
    %v2684 = vadd.f32 0.0, %v2683
    %v2685 = vpop.f32.mrb[0].mxu0
    %2686 = vmatprep.mubr.f32.mxu0 0.0
    %2687 = vmatmul.mubr.f32.gmra.mrb[0].mxu0 %v159
    %v2688 = vpop.f32.mrb[0].mxu0
    %v2689 = vadd.f32 0.0, %v2688
    %v2690 = vpop.f32.mrb[0].mxu0
    %2691 = vmatprep.mubr.f32.mxu0 0.0
    %2692 = vmatmul.mubr.f32.gmra.mrb[0].mxu0 %v160
    %v2693 = vpop.f32.mrb[0].mxu0
    %v2694 = vadd.f32 0.0, %v2693
    %v2695 = vpop.f32.mrb[0].mxu0
    %2696 = vmatprep.mubr.f32.mxu0 0.0
    %2697 = vmatmul.mubr.f32.gmra.mrb[0].mxu0 %v161
    %v2698 = vpop.f32.mrb[0].mxu0
    %v2699 = vadd.f32 0.0, %v2698
    %v2700 = vpop.f32.mrb[0].mxu0
    %2701 = vmatprep.mubr.f32.mxu0 0.0
    %2702 = vmatmul.mubr.f32.gmra.mrb[0].mxu0 %v162
    %v2703 = vpop.f32.mrb[0].mxu0
    %v2704 = vadd.f32 0.0, %v2703
    %v2705 = vpop.f32.mrb[0].mxu0
    %2706 = vmatprep.mubr.f32.mxu0 0.0
    %2707 = vmatmul.mubr.f32.gmra.mrb[0].mxu0 %v163
    %v2708 = vpop.f32.mrb[0].mxu0
    %v2709 = vadd.f32 0.0, %v2708
    %v2710 = vpop.f32.mrb[0].mxu0
    %2711 = vmatprep.mubr.f32.mxu0 0.0
    %2712 = vmatmul.mubr.f32.gmra.mrb[0].mxu0 %v164
    %v2713 = vpop.f32.mrb[0].mxu0
    %v2714 = vadd.f32 0.0, %v2713
    %v2715 = vpop.f32.mrb[0].mxu0
    %2716 = vmatprep.mubr.f32.mxu0 0.0
    %2717 = vmatmul.mubr.f32.gmra.mrb[0].mxu0 %v165
    %v2718 = vpop.f32.mrb[0].mxu0
    %v2719 = vadd.f32 0.0, %v2718
    %v2720 = vpop.f32.mrb[0].mxu0
    %2721 = vmatprep.mubr.f32.mxu0 0.0
    %2722 = vmatmul.mubr.f32.gmra.mrb[0].mxu0 %v166
    %v2723 = vpop.f32.mrb[0].mxu0
    %v2724 = vadd.f32 0.0, %v2723
    %v2725 = vpop.f32.mrb[0].mxu0
    %2726 = vmatprep.mubr.f32.mxu0 0.0
    %2727 = vmatmul.mubr.f32.gmra.mrb[0].mxu0 %v167
    %v2728 = vpop.f32.mrb[0].mxu0
    %v2729 = vadd.f32 0.0, %v2728
    %v2730 = vpop.f32.mrb[0].mxu0
    %2731 = vmatprep.mubr.f32.mxu0 0.0
    %2732 = vmatmul.mubr.f32.gmra.mrb[0].mxu0 %v168
    %v2733 = vpop.f32.mrb[0].mxu0
    %v2734 = vadd.f32 0.0, %v2733
    %v2735 = vpop.f32.mrb[0].mxu0
    %2736 = vmatprep.mubr.f32.mxu0 0.0
    %2737 = vmatmul.mubr.f32.gmra.mrb[0].mxu0 %v169
    %v2738 = vpop.f32.mrb[0].mxu0
    %v2739 = vadd.f32 0.0, %v2738
    %v2740 = vpop.f32.mrb[0].mxu0
    %2741 = vdwg.mxu0
    %s2742 = scalar_lea.vmem [#allocation7], 1792
    %v2743 = vld [vmem:[%s2742] sm:$0xff]
    %v2744 = vld [vmem:[%s2742 + $0x8] sm:$0xff]
    %v2745 = vld [vmem:[%s2742 + $0x10] sm:$0xff]
    %v2746 = vld [vmem:[%s2742 + $0x18] sm:$0xff]
    %v2747 = vld [vmem:[%s2742 + $0x20] sm:$0xff]
    %v2748 = vld [vmem:[%s2742 + $0x28] sm:$0xff]
    %v2749 = vld [vmem:[%s2742 + $0x30] sm:$0xff]
    %v2750 = vld [vmem:[%s2742 + $0x38] sm:$0xff]
    %v2751 = vld [vmem:[%s2742 + $0x40] sm:$0xff]
    %v2752 = vld [vmem:[%s2742 + $0x48] sm:$0xff]
    %v2753 = vld [vmem:[%s2742 + $0x50] sm:$0xff]
    %v2754 = vld [vmem:[%s2742 + $0x58] sm:$0xff]
    %v2755 = vld [vmem:[%s2742 + $0x60] sm:$0xff]
    %v2756 = vld [vmem:[%s2742 + $0x68] sm:$0xff]
    %v2757 = vld [vmem:[%s2742 + $0x70] sm:$0xff]
    %v2758 = vld [vmem:[%s2742 + $0x78] sm:$0xff]
    %v2759 = vld [vmem:[%s2742 + $0x80] sm:$0xff]
    %v2760 = vld [vmem:[%s2742 + $0x88] sm:$0xff]
    %v2761 = vld [vmem:[%s2742 + $0x90] sm:$0xff]
    %v2762 = vld [vmem:[%s2742 + $0x98] sm:$0xff]
    %v2763 = vld [vmem:[%s2742 + $0xa0] sm:$0xff]
    %v2764 = vld [vmem:[%s2742 + $0xa8] sm:$0xff]
    %v2765 = vld [vmem:[%s2742 + $0xb0] sm:$0xff]
    %v2766 = vld [vmem:[%s2742 + $0xb8] sm:$0xff]
    %v2767 = vld [vmem:[%s2742 + $0xc0] sm:$0xff]
    %v2768 = vld [vmem:[%s2742 + $0xc8] sm:$0xff]
    %v2769 = vld [vmem:[%s2742 + $0xd0] sm:$0xff]
    %v2770 = vld [vmem:[%s2742 + $0xd8] sm:$0xff]
    %v2771 = vld [vmem:[%s2742 + $0xe0] sm:$0xff]
    %v2772 = vld [vmem:[%s2742 + $0xe8] sm:$0xff]
    %v2773 = vld [vmem:[%s2742 + $0xf0] sm:$0xff]
    %v2774 = vld [vmem:[%s2742 + $0xf8] sm:$0xff]
    %s2775 = scalar_lea.vmem [#allocation8], 7
    %v2776 = vld [vmem:[%s2775] sm:$0x1]
    %v2778 = vlaneseq
    %v2779 = vshrl.u32 %v2778, 7
    %v2780 = vsub.s32 0, %v2779
    %v2781 = vrot.slane %v2776, %v2780
    %2783 = vmatprep.subr.mxu0 0.0
    %2784 = vmatpush1.msra.mxu0 %v2743
    %2785 = vmatprep.subr.mxu0 0.0
    %2786 = vmatpush1.msra.mxu0 %v2744
    %2787 = vmatprep.subr.mxu0 0.0
    %2788 = vmatpush1.msra.mxu0 %v2745
    %2789 = vmatprep.subr.mxu0 0.0
    %2790 = vmatpush1.msra.mxu0 %v2746
    %2791 = vmatprep.subr.mxu0 0.0
    %2792 = vmatpush1.msra.mxu0 %v2747
    %2793 = vmatprep.subr.mxu0 0.0
    %2794 = vmatpush1.msra.mxu0 %v2748
    %2795 = vmatprep.subr.mxu0 0.0
    %2796 = vmatpush1.msra.mxu0 %v2749
    %2797 = vmatprep.subr.mxu0 0.0
    %2798 = vmatpush1.msra.mxu0 %v2750
    %2799 = vmatprep.subr.mxu0 0.0
    %2800 = vmatpush1.msra.mxu0 %v2751
    %2801 = vmatprep.subr.mxu0 0.0
    %2802 = vmatpush1.msra.mxu0 %v2752
    %2803 = vmatprep.subr.mxu0 0.0
    %2804 = vmatpush1.msra.mxu0 %v2753
    %2805 = vmatprep.subr.mxu0 0.0
    %2806 = vmatpush1.msra.mxu0 %v2754
    %2807 = vmatprep.subr.mxu0 0.0
    %2808 = vmatpush1.msra.mxu0 %v2755
    %2809 = vmatprep.subr.mxu0 0.0
    %2810 = vmatpush1.msra.mxu0 %v2756
    %2811 = vmatprep.subr.mxu0 0.0
    %2812 = vmatpush1.msra.mxu0 %v2757
    %2813 = vmatprep.subr.mxu0 0.0
    %2814 = vmatpush1.msra.mxu0 %v2758
    %2815 = vmatprep.subr.mxu0 0.0
    %2816 = vmatpush1.msra.mxu0 %v2759
    %2817 = vmatprep.subr.mxu0 0.0
    %2818 = vmatpush1.msra.mxu0 %v2760
    %2819 = vmatprep.subr.mxu0 0.0
    %2820 = vmatpush1.msra.mxu0 %v2761
    %2821 = vmatprep.subr.mxu0 0.0
    %2822 = vmatpush1.msra.mxu0 %v2762
    %2823 = vmatprep.subr.mxu0 0.0
    %2824 = vmatpush1.msra.mxu0 %v2763
    %2825 = vmatprep.subr.mxu0 0.0
    %2826 = vmatpush1.msra.mxu0 %v2764
    %2827 = vmatprep.subr.mxu0 0.0
    %2828 = vmatpush1.msra.mxu0 %v2765
    %2829 = vmatprep.subr.mxu0 0.0
    %2830 = vmatpush1.msra.mxu0 %v2766
    %2831 = vmatprep.subr.mxu0 0.0
    %2832 = vmatpush1.msra.mxu0 %v2767
    %2833 = vmatprep.subr.mxu0 0.0
    %2834 = vmatpush1.msra.mxu0 %v2768
    %2835 = vmatprep.subr.mxu0 0.0
    %2836 = vmatpush1.msra.mxu0 %v2769
    %2837 = vmatprep.subr.mxu0 0.0
    %2838 = vmatpush1.msra.mxu0 %v2770
    %2839 = vmatprep.subr.mxu0 0.0
    %2840 = vmatpush1.msra.mxu0 %v2771
    %2841 = vmatprep.subr.mxu0 0.0
    %2842 = vmatpush1.msra.mxu0 %v2772
    %2843 = vmatprep.subr.mxu0 0.0
    %2844 = vmatpush1.msra.mxu0 %v2773
    %2845 = vmatprep.subr.mxu0 0.0
    %2846 = vmatpush1.msra.mxu0 %v2774
    %2847 = vmatprep.mubr.f32.mxu0 %v2234
    %2848 = vmatmul.mubr.f32.gmra.mrb[0].mxu0 %v2664
    %v2849 = vpop.f32.mrb[0].mxu0
    %v2850 = vadd.f32 %v2781, %v2849
    %v2851 = vpop.f32.mrb[0].mxu0
    %2852 = vmatprep.mubr.f32.mxu0 %v2235
    %2853 = vmatmul.mubr.f32.gmra.mrb[0].mxu0 %v2669
    %v2854 = vpop.f32.mrb[0].mxu0
    %v2855 = vadd.f32 %v2781, %v2854
    %v2856 = vpop.f32.mrb[0].mxu0
    %2857 = vmatprep.mubr.f32.mxu0 %v2236
    %2858 = vmatmul.mubr.f32.gmra.mrb[0].mxu0 %v2674
    %v2859 = vpop.f32.mrb[0].mxu0
    %v2860 = vadd.f32 %v2781, %v2859
    %v2861 = vpop.f32.mrb[0].mxu0
    %2862 = vmatprep.mubr.f32.mxu0 %v2237
    %2863 = vmatmul.mubr.f32.gmra.mrb[0].mxu0 %v2679
    %v2864 = vpop.f32.mrb[0].mxu0
    %v2865 = vadd.f32 %v2781, %v2864
    %v2866 = vpop.f32.mrb[0].mxu0
    %2867 = vmatprep.mubr.f32.mxu0 %v2238
    %2868 = vmatmul.mubr.f32.gmra.mrb[0].mxu0 %v2684
    %v2869 = vpop.f32.mrb[0].mxu0
    %v2870 = vadd.f32 %v2781, %v2869
    %v2871 = vpop.f32.mrb[0].mxu0
    %2872 = vmatprep.mubr.f32.mxu0 %v2239
    %2873 = vmatmul.mubr.f32.gmra.mrb[0].mxu0 %v2689
    %v2874 = vpop.f32.mrb[0].mxu0
    %v2875 = vadd.f32 %v2781, %v2874
    %v2876 = vpop.f32.mrb[0].mxu0
    %2877 = vmatprep.mubr.f32.mxu0 %v2240
    %2878 = vmatmul.mubr.f32.gmra.mrb[0].mxu0 %v2694
    %v2879 = vpop.f32.mrb[0].mxu0
    %v2880 = vadd.f32 %v2781, %v2879
    %v2881 = vpop.f32.mrb[0].mxu0
    %2882 = vmatprep.mubr.f32.mxu0 %v2241
    %2883 = vmatmul.mubr.f32.gmra.mrb[0].mxu0 %v2699
    %v2884 = vpop.f32.mrb[0].mxu0
    %v2885 = vadd.f32 %v2781, %v2884
    %v2886 = vpop.f32.mrb[0].mxu0
    %2887 = vmatprep.mubr.f32.mxu0 %v2242
    %2888 = vmatmul.mubr.f32.gmra.mrb[0].mxu0 %v2704
    %v2889 = vpop.f32.mrb[0].mxu0
    %v2890 = vadd.f32 %v2781, %v2889
    %v2891 = vpop.f32.mrb[0].mxu0
    %2892 = vmatprep.mubr.f32.mxu0 %v2243
    %2893 = vmatmul.mubr.f32.gmra.mrb[0].mxu0 %v2709
    %v2894 = vpop.f32.mrb[0].mxu0
    %v2895 = vadd.f32 %v2781, %v2894
    %v2896 = vpop.f32.mrb[0].mxu0
    %2897 = vmatprep.mubr.f32.mxu0 %v2244
    %2898 = vmatmul.mubr.f32.gmra.mrb[0].mxu0 %v2714
    %v2899 = vpop.f32.mrb[0].mxu0
    %v2900 = vadd.f32 %v2781, %v2899
    %v2901 = vpop.f32.mrb[0].mxu0
    %2902 = vmatprep.mubr.f32.mxu0 %v2245
    %2903 = vmatmul.mubr.f32.gmra.mrb[0].mxu0 %v2719
    %v2904 = vpop.f32.mrb[0].mxu0
    %v2905 = vadd.f32 %v2781, %v2904
    %v2906 = vpop.f32.mrb[0].mxu0
    %2907 = vmatprep.mubr.f32.mxu0 %v2246
    %2908 = vmatmul.mubr.f32.gmra.mrb[0].mxu0 %v2724
    %v2909 = vpop.f32.mrb[0].mxu0
    %v2910 = vadd.f32 %v2781, %v2909
    %v2911 = vpop.f32.mrb[0].mxu0
    %2912 = vmatprep.mubr.f32.mxu0 %v2247
    %2913 = vmatmul.mubr.f32.gmra.mrb[0].mxu0 %v2729
    %v2914 = vpop.f32.mrb[0].mxu0
    %v2915 = vadd.f32 %v2781, %v2914
    %v2916 = vpop.f32.mrb[0].mxu0
    %2917 = vmatprep.mubr.f32.mxu0 %v2248
    %2918 = vmatmul.mubr.f32.gmra.mrb[0].mxu0 %v2734
    %v2919 = vpop.f32.mrb[0].mxu0
    %v2920 = vadd.f32 %v2781, %v2919
    %v2921 = vpop.f32.mrb[0].mxu0
    %2922 = vmatprep.mubr.f32.mxu0 %v2249
    %2923 = vmatmul.mubr.f32.gmra.mrb[0].mxu0 %v2739
    %v2924 = vpop.f32.mrb[0].mxu0
    %v2925 = vadd.f32 %v2781, %v2924
    %v2926 = vpop.f32.mrb[0].mxu0
    %2927 = vdwg.mxu0
    %v2928 = vmax.f32 %v2850, 0.0
    %v2929 = vmax.f32 %v2855, 0.0
    %v2930 = vmax.f32 %v2860, 0.0
    %v2931 = vmax.f32 %v2865, 0.0
    %v2932 = vmax.f32 %v2870, 0.0
    %v2933 = vmax.f32 %v2875, 0.0
    %v2934 = vmax.f32 %v2880, 0.0
    %v2935 = vmax.f32 %v2885, 0.0
    %v2936 = vmax.f32 %v2890, 0.0
    %v2937 = vmax.f32 %v2895, 0.0
    %v2938 = vmax.f32 %v2900, 0.0
    %v2939 = vmax.f32 %v2905, 0.0
    %v2940 = vmax.f32 %v2910, 0.0
    %v2941 = vmax.f32 %v2915, 0.0
    %v2942 = vmax.f32 %v2920, 0.0
    %v2943 = vmax.f32 %v2925, 0.0
    %2944 = vmatprep.subr.mxu0 0.0
    %2945 = vmatpush1.msra.mxu0 %v2928
    %2946 = vmatprep.subr.mxu0 0.0
    %2947 = vmatpush1.msra.mxu0 %v2929
    %2948 = vmatprep.subr.mxu0 0.0
    %2949 = vmatpush1.msra.mxu0 %v2930
    %2950 = vmatprep.subr.mxu0 0.0
    %2951 = vmatpush1.msra.mxu0 %v2931
    %2952 = vmatprep.subr.mxu0 0.0
    %2953 = vmatpush1.msra.mxu0 %v2932
    %2954 = vmatprep.subr.mxu0 0.0
    %2955 = vmatpush1.msra.mxu0 %v2933
    %2956 = vmatprep.subr.mxu0 0.0
    %2957 = vmatpush1.msra.mxu0 %v2934
    %2958 = vmatprep.subr.mxu0 0.0
    %2959 = vmatpush1.msra.mxu0 %v2935
    %2960 = vmatprep.subr.mxu0 0.0
    %2961 = vmatpush1.msra.mxu0 %v2936
    %2962 = vmatprep.subr.mxu0 0.0
    %2963 = vmatpush1.msra.mxu0 %v2937
    %2964 = vmatprep.subr.mxu0 0.0
    %2965 = vmatpush1.msra.mxu0 %v2938
    %2966 = vmatprep.subr.mxu0 0.0
    %2967 = vmatpush1.msra.mxu0 %v2939
    %2968 = vmatprep.subr.mxu0 0.0
    %2969 = vmatpush1.msra.mxu0 %v2940
    %2970 = vmatprep.subr.mxu0 0.0
    %2971 = vmatpush1.msra.mxu0 %v2941
    %2972 = vmatprep.subr.mxu0 0.0
    %2973 = vmatpush1.msra.mxu0 %v2942
    %2974 = vmatprep.subr.mxu0 0.0
    %2975 = vmatpush1.msra.mxu0 %v2943
    %2976 = vmatprep.subr.mxu0 0.0
    %2977 = vmatpush1.msra.mxu0 0.0
    %2978 = vmatprep.subr.mxu0 0.0
    %2979 = vmatpush1.msra.mxu0 0.0
    %2980 = vmatprep.subr.mxu0 0.0
    %2981 = vmatpush1.msra.mxu0 0.0
    %2982 = vmatprep.subr.mxu0 0.0
    %2983 = vmatpush1.msra.mxu0 0.0
    %2984 = vmatprep.subr.mxu0 0.0
    %2985 = vmatpush1.msra.mxu0 0.0
    %2986 = vmatprep.subr.mxu0 0.0
    %2987 = vmatpush1.msra.mxu0 0.0
    %2988 = vmatprep.subr.mxu0 0.0
    %2989 = vmatpush1.msra.mxu0 0.0
    %2990 = vmatprep.subr.mxu0 0.0
    %2991 = vmatpush1.msra.mxu0 0.0
    %2992 = vmatprep.subr.mxu0 0.0
    %2993 = vmatpush1.msra.mxu0 0.0
    %2994 = vmatprep.subr.mxu0 0.0
    %2995 = vmatpush1.msra.mxu0 0.0
    %2996 = vmatprep.subr.mxu0 0.0
    %2997 = vmatpush1.msra.mxu0 0.0
    %2998 = vmatprep.subr.mxu0 0.0
    %2999 = vmatpush1.msra.mxu0 0.0
    %3000 = vmatprep.subr.mxu0 0.0
    %3001 = vmatpush1.msra.mxu0 0.0
    %3002 = vmatprep.subr.mxu0 0.0
    %3003 = vmatpush1.msra.mxu0 0.0
    %3004 = vmatprep.subr.mxu0 0.0
    %3005 = vmatpush1.msra.mxu0 0.0
    %3006 = vmatprep.subr.mxu0 0.0
    %3007 = vmatpush1.msra.mxu0 0.0
    %3008 = vmatprep.mubr.f32.mxu0 0.0
    %3009 = vmatmul.mubr.f32.gmra.mrb[0].mxu0 %v137
    %v3010 = vpop.f32.mrb[0].mxu0
    %v3011 = vadd.f32 0.0, %v3010
    %v3012 = vpop.f32.mrb[0].mxu0
    %3013 = vmatprep.mubr.f32.mxu0 0.0
    %3014 = vmatmul.mubr.f32.gmra.mrb[0].mxu0 %v138
    %v3015 = vpop.f32.mrb[0].mxu0
    %v3016 = vadd.f32 0.0, %v3015
    %v3017 = vpop.f32.mrb[0].mxu0
    %3018 = vmatprep.mubr.f32.mxu0 0.0
    %3019 = vmatmul.mubr.f32.gmra.mrb[0].mxu0 %v139
    %v3020 = vpop.f32.mrb[0].mxu0
    %v3021 = vadd.f32 0.0, %v3020
    %v3022 = vpop.f32.mrb[0].mxu0
    %3023 = vmatprep.mubr.f32.mxu0 0.0
    %3024 = vmatmul.mubr.f32.gmra.mrb[0].mxu0 %v140
    %v3025 = vpop.f32.mrb[0].mxu0
    %v3026 = vadd.f32 0.0, %v3025
    %v3027 = vpop.f32.mrb[0].mxu0
    %3028 = vmatprep.mubr.f32.mxu0 0.0
    %3029 = vmatmul.mubr.f32.gmra.mrb[0].mxu0 %v141
    %v3030 = vpop.f32.mrb[0].mxu0
    %v3031 = vadd.f32 0.0, %v3030
    %v3032 = vpop.f32.mrb[0].mxu0
    %3033 = vmatprep.mubr.f32.mxu0 0.0
    %3034 = vmatmul.mubr.f32.gmra.mrb[0].mxu0 %v142
    %v3035 = vpop.f32.mrb[0].mxu0
    %v3036 = vadd.f32 0.0, %v3035
    %v3037 = vpop.f32.mrb[0].mxu0
    %3038 = vmatprep.mubr.f32.mxu0 0.0
    %3039 = vmatmul.mubr.f32.gmra.mrb[0].mxu0 %v143
    %v3040 = vpop.f32.mrb[0].mxu0
    %v3041 = vadd.f32 0.0, %v3040
    %v3042 = vpop.f32.mrb[0].mxu0
    %3043 = vmatprep.mubr.f32.mxu0 0.0
    %3044 = vmatmul.mubr.f32.gmra.mrb[0].mxu0 %v144
    %v3045 = vpop.f32.mrb[0].mxu0
    %v3046 = vadd.f32 0.0, %v3045
    %v3047 = vpop.f32.mrb[0].mxu0
    %3048 = vmatprep.mubr.f32.mxu0 0.0
    %3049 = vmatmul.mubr.f32.gmra.mrb[0].mxu0 %v145
    %v3050 = vpop.f32.mrb[0].mxu0
    %v3051 = vadd.f32 0.0, %v3050
    %v3052 = vpop.f32.mrb[0].mxu0
    %3053 = vmatprep.mubr.f32.mxu0 0.0
    %3054 = vmatmul.mubr.f32.gmra.mrb[0].mxu0 %v146
    %v3055 = vpop.f32.mrb[0].mxu0
    %v3056 = vadd.f32 0.0, %v3055
    %v3057 = vpop.f32.mrb[0].mxu0
    %3058 = vmatprep.mubr.f32.mxu0 0.0
    %3059 = vmatmul.mubr.f32.gmra.mrb[0].mxu0 %v147
    %v3060 = vpop.f32.mrb[0].mxu0
    %v3061 = vadd.f32 0.0, %v3060
    %v3062 = vpop.f32.mrb[0].mxu0
    %3063 = vmatprep.mubr.f32.mxu0 0.0
    %3064 = vmatmul.mubr.f32.gmra.mrb[0].mxu0 %v148
    %v3065 = vpop.f32.mrb[0].mxu0
    %v3066 = vadd.f32 0.0, %v3065
    %v3067 = vpop.f32.mrb[0].mxu0
    %3068 = vmatprep.mubr.f32.mxu0 0.0
    %3069 = vmatmul.mubr.f32.gmra.mrb[0].mxu0 %v149
    %v3070 = vpop.f32.mrb[0].mxu0
    %v3071 = vadd.f32 0.0, %v3070
    %v3072 = vpop.f32.mrb[0].mxu0
    %3073 = vmatprep.mubr.f32.mxu0 0.0
    %3074 = vmatmul.mubr.f32.gmra.mrb[0].mxu0 %v150
    %v3075 = vpop.f32.mrb[0].mxu0
    %v3076 = vadd.f32 0.0, %v3075
    %v3077 = vpop.f32.mrb[0].mxu0
    %3078 = vmatprep.mubr.f32.mxu0 0.0
    %3079 = vmatmul.mubr.f32.gmra.mrb[0].mxu0 %v151
    %v3080 = vpop.f32.mrb[0].mxu0
    %v3081 = vadd.f32 0.0, %v3080
    %v3082 = vpop.f32.mrb[0].mxu0
    %3083 = vmatprep.mubr.f32.mxu0 0.0
    %3084 = vmatmul.mubr.f32.gmra.mrb[0].mxu0 %v152
    %v3085 = vpop.f32.mrb[0].mxu0
    %v3086 = vadd.f32 0.0, %v3085
    %v3087 = vpop.f32.mrb[0].mxu0
    %3088 = vdwg.mxu0
    %s3089 = scalar_lea.vmem [#allocation7], 2048
    %v3090 = vld [vmem:[%s3089] sm:$0xff]
    %v3091 = vld [vmem:[%s3089 + $0x8] sm:$0xff]
    %v3092 = vld [vmem:[%s3089 + $0x10] sm:$0xff]
    %v3093 = vld [vmem:[%s3089 + $0x18] sm:$0xff]
    %v3094 = vld [vmem:[%s3089 + $0x20] sm:$0xff]
    %v3095 = vld [vmem:[%s3089 + $0x28] sm:$0xff]
    %v3096 = vld [vmem:[%s3089 + $0x30] sm:$0xff]
    %v3097 = vld [vmem:[%s3089 + $0x38] sm:$0xff]
    %v3098 = vld [vmem:[%s3089 + $0x40] sm:$0xff]
    %v3099 = vld [vmem:[%s3089 + $0x48] sm:$0xff]
    %v3100 = vld [vmem:[%s3089 + $0x50] sm:$0xff]
    %v3101 = vld [vmem:[%s3089 + $0x58] sm:$0xff]
    %v3102 = vld [vmem:[%s3089 + $0x60] sm:$0xff]
    %v3103 = vld [vmem:[%s3089 + $0x68] sm:$0xff]
    %v3104 = vld [vmem:[%s3089 + $0x70] sm:$0xff]
    %v3105 = vld [vmem:[%s3089 + $0x78] sm:$0xff]
    %v3106 = vld [vmem:[%s3089 + $0x80] sm:$0xff]
    %v3107 = vld [vmem:[%s3089 + $0x88] sm:$0xff]
    %v3108 = vld [vmem:[%s3089 + $0x90] sm:$0xff]
    %v3109 = vld [vmem:[%s3089 + $0x98] sm:$0xff]
    %v3110 = vld [vmem:[%s3089 + $0xa0] sm:$0xff]
    %v3111 = vld [vmem:[%s3089 + $0xa8] sm:$0xff]
    %v3112 = vld [vmem:[%s3089 + $0xb0] sm:$0xff]
    %v3113 = vld [vmem:[%s3089 + $0xb8] sm:$0xff]
    %v3114 = vld [vmem:[%s3089 + $0xc0] sm:$0xff]
    %v3115 = vld [vmem:[%s3089 + $0xc8] sm:$0xff]
    %v3116 = vld [vmem:[%s3089 + $0xd0] sm:$0xff]
    %v3117 = vld [vmem:[%s3089 + $0xd8] sm:$0xff]
    %v3118 = vld [vmem:[%s3089 + $0xe0] sm:$0xff]
    %v3119 = vld [vmem:[%s3089 + $0xe8] sm:$0xff]
    %v3120 = vld [vmem:[%s3089 + $0xf0] sm:$0xff]
    %v3121 = vld [vmem:[%s3089 + $0xf8] sm:$0xff]
    %s3122 = scalar_lea.vmem [#allocation8], 8
    %v3123 = vld [vmem:[%s3122] sm:$0x1]
    %v3125 = vlaneseq
    %v3126 = vshrl.u32 %v3125, 7
    %v3127 = vsub.s32 0, %v3126
    %v3128 = vrot.slane %v3123, %v3127
    %3130 = vmatprep.subr.mxu0 0.0
    %3131 = vmatpush1.msra.mxu0 %v3090
    %3132 = vmatprep.subr.mxu0 0.0
    %3133 = vmatpush1.msra.mxu0 %v3091
    %3134 = vmatprep.subr.mxu0 0.0
    %3135 = vmatpush1.msra.mxu0 %v3092
    %3136 = vmatprep.subr.mxu0 0.0
    %3137 = vmatpush1.msra.mxu0 %v3093
    %3138 = vmatprep.subr.mxu0 0.0
    %3139 = vmatpush1.msra.mxu0 %v3094
    %3140 = vmatprep.subr.mxu0 0.0
    %3141 = vmatpush1.msra.mxu0 %v3095
    %3142 = vmatprep.subr.mxu0 0.0
    %3143 = vmatpush1.msra.mxu0 %v3096
    %3144 = vmatprep.subr.mxu0 0.0
    %3145 = vmatpush1.msra.mxu0 %v3097
    %3146 = vmatprep.subr.mxu0 0.0
    %3147 = vmatpush1.msra.mxu0 %v3098
    %3148 = vmatprep.subr.mxu0 0.0
    %3149 = vmatpush1.msra.mxu0 %v3099
    %3150 = vmatprep.subr.mxu0 0.0
    %3151 = vmatpush1.msra.mxu0 %v3100
    %3152 = vmatprep.subr.mxu0 0.0
    %3153 = vmatpush1.msra.mxu0 %v3101
    %3154 = vmatprep.subr.mxu0 0.0
    %3155 = vmatpush1.msra.mxu0 %v3102
    %3156 = vmatprep.subr.mxu0 0.0
    %3157 = vmatpush1.msra.mxu0 %v3103
    %3158 = vmatprep.subr.mxu0 0.0
    %3159 = vmatpush1.msra.mxu0 %v3104
    %3160 = vmatprep.subr.mxu0 0.0
    %3161 = vmatpush1.msra.mxu0 %v3105
    %3162 = vmatprep.subr.mxu0 0.0
    %3163 = vmatpush1.msra.mxu0 %v3106
    %3164 = vmatprep.subr.mxu0 0.0
    %3165 = vmatpush1.msra.mxu0 %v3107
    %3166 = vmatprep.subr.mxu0 0.0
    %3167 = vmatpush1.msra.mxu0 %v3108
    %3168 = vmatprep.subr.mxu0 0.0
    %3169 = vmatpush1.msra.mxu0 %v3109
    %3170 = vmatprep.subr.mxu0 0.0
    %3171 = vmatpush1.msra.mxu0 %v3110
    %3172 = vmatprep.subr.mxu0 0.0
    %3173 = vmatpush1.msra.mxu0 %v3111
    %3174 = vmatprep.subr.mxu0 0.0
    %3175 = vmatpush1.msra.mxu0 %v3112
    %3176 = vmatprep.subr.mxu0 0.0
    %3177 = vmatpush1.msra.mxu0 %v3113
    %3178 = vmatprep.subr.mxu0 0.0
    %3179 = vmatpush1.msra.mxu0 %v3114
    %3180 = vmatprep.subr.mxu0 0.0
    %3181 = vmatpush1.msra.mxu0 %v3115
    %3182 = vmatprep.subr.mxu0 0.0
    %3183 = vmatpush1.msra.mxu0 %v3116
    %3184 = vmatprep.subr.mxu0 0.0
    %3185 = vmatpush1.msra.mxu0 %v3117
    %3186 = vmatprep.subr.mxu0 0.0
    %3187 = vmatpush1.msra.mxu0 %v3118
    %3188 = vmatprep.subr.mxu0 0.0
    %3189 = vmatpush1.msra.mxu0 %v3119
    %3190 = vmatprep.subr.mxu0 0.0
    %3191 = vmatpush1.msra.mxu0 %v3120
    %3192 = vmatprep.subr.mxu0 0.0
    %3193 = vmatpush1.msra.mxu0 %v3121
    %3194 = vmatprep.mubr.f32.mxu0 %v2581
    %3195 = vmatmul.mubr.f32.gmra.mrb[0].mxu0 %v3011
    %v3196 = vpop.f32.mrb[0].mxu0
    %v3197 = vadd.f32 %v3128, %v3196
    %v3198 = vpop.f32.mrb[0].mxu0
    %3199 = vmatprep.mubr.f32.mxu0 %v2582
    %3200 = vmatmul.mubr.f32.gmra.mrb[0].mxu0 %v3016
    %v3201 = vpop.f32.mrb[0].mxu0
    %v3202 = vadd.f32 %v3128, %v3201
    %v3203 = vpop.f32.mrb[0].mxu0
    %3204 = vmatprep.mubr.f32.mxu0 %v2583
    %3205 = vmatmul.mubr.f32.gmra.mrb[0].mxu0 %v3021
    %v3206 = vpop.f32.mrb[0].mxu0
    %v3207 = vadd.f32 %v3128, %v3206
    %v3208 = vpop.f32.mrb[0].mxu0
    %3209 = vmatprep.mubr.f32.mxu0 %v2584
    %3210 = vmatmul.mubr.f32.gmra.mrb[0].mxu0 %v3026
    %v3211 = vpop.f32.mrb[0].mxu0
    %v3212 = vadd.f32 %v3128, %v3211
    %v3213 = vpop.f32.mrb[0].mxu0
    %3214 = vmatprep.mubr.f32.mxu0 %v2585
    %3215 = vmatmul.mubr.f32.gmra.mrb[0].mxu0 %v3031
    %v3216 = vpop.f32.mrb[0].mxu0
    %v3217 = vadd.f32 %v3128, %v3216
    %v3218 = vpop.f32.mrb[0].mxu0
    %3219 = vmatprep.mubr.f32.mxu0 %v2586
    %3220 = vmatmul.mubr.f32.gmra.mrb[0].mxu0 %v3036
    %v3221 = vpop.f32.mrb[0].mxu0
    %v3222 = vadd.f32 %v3128, %v3221
    %v3223 = vpop.f32.mrb[0].mxu0
    %3224 = vmatprep.mubr.f32.mxu0 %v2587
    %3225 = vmatmul.mubr.f32.gmra.mrb[0].mxu0 %v3041
    %v3226 = vpop.f32.mrb[0].mxu0
    %v3227 = vadd.f32 %v3128, %v3226
    %v3228 = vpop.f32.mrb[0].mxu0
    %3229 = vmatprep.mubr.f32.mxu0 %v2588
    %3230 = vmatmul.mubr.f32.gmra.mrb[0].mxu0 %v3046
    %v3231 = vpop.f32.mrb[0].mxu0
    %v3232 = vadd.f32 %v3128, %v3231
    %v3233 = vpop.f32.mrb[0].mxu0
    %3234 = vmatprep.mubr.f32.mxu0 %v2589
    %3235 = vmatmul.mubr.f32.gmra.mrb[0].mxu0 %v3051
    %v3236 = vpop.f32.mrb[0].mxu0
    %v3237 = vadd.f32 %v3128, %v3236
    %v3238 = vpop.f32.mrb[0].mxu0
    %3239 = vmatprep.mubr.f32.mxu0 %v2590
    %3240 = vmatmul.mubr.f32.gmra.mrb[0].mxu0 %v3056
    %v3241 = vpop.f32.mrb[0].mxu0
    %v3242 = vadd.f32 %v3128, %v3241
    %v3243 = vpop.f32.mrb[0].mxu0
    %3244 = vmatprep.mubr.f32.mxu0 %v2591
    %3245 = vmatmul.mubr.f32.gmra.mrb[0].mxu0 %v3061
    %v3246 = vpop.f32.mrb[0].mxu0
    %v3247 = vadd.f32 %v3128, %v3246
    %v3248 = vpop.f32.mrb[0].mxu0
    %3249 = vmatprep.mubr.f32.mxu0 %v2592
    %3250 = vmatmul.mubr.f32.gmra.mrb[0].mxu0 %v3066
    %v3251 = vpop.f32.mrb[0].mxu0
    %v3252 = vadd.f32 %v3128, %v3251
    %v3253 = vpop.f32.mrb[0].mxu0
    %3254 = vmatprep.mubr.f32.mxu0 %v2593
    %3255 = vmatmul.mubr.f32.gmra.mrb[0].mxu0 %v3071
    %v3256 = vpop.f32.mrb[0].mxu0
    %v3257 = vadd.f32 %v3128, %v3256
    %v3258 = vpop.f32.mrb[0].mxu0
    %3259 = vmatprep.mubr.f32.mxu0 %v2594
    %3260 = vmatmul.mubr.f32.gmra.mrb[0].mxu0 %v3076
    %v3261 = vpop.f32.mrb[0].mxu0
    %v3262 = vadd.f32 %v3128, %v3261
    %v3263 = vpop.f32.mrb[0].mxu0
    %3264 = vmatprep.mubr.f32.mxu0 %v2595
    %3265 = vmatmul.mubr.f32.gmra.mrb[0].mxu0 %v3081
    %v3266 = vpop.f32.mrb[0].mxu0
    %v3267 = vadd.f32 %v3128, %v3266
    %v3268 = vpop.f32.mrb[0].mxu0
    %3269 = vmatprep.mubr.f32.mxu0 %v2596
    %3270 = vmatmul.mubr.f32.gmra.mrb[0].mxu0 %v3086
    %v3271 = vpop.f32.mrb[0].mxu0
    %v3272 = vadd.f32 %v3128, %v3271
    %v3273 = vpop.f32.mrb[0].mxu0
    %3274 = vdwg.mxu0
    %v3275 = vld [vmem:[#allocation10] sm:$0xff]
    %v3276 = vld [vmem:[#allocation10 + $0x8] sm:$0xff]
    %v3277 = vld [vmem:[#allocation10 + $0x10] sm:$0xff]
    %v3278 = vld [vmem:[#allocation10 + $0x18] sm:$0xff]
    %v3279 = vld [vmem:[#allocation10 + $0x20] sm:$0xff]
    %v3280 = vld [vmem:[#allocation10 + $0x28] sm:$0xff]
    %v3281 = vld [vmem:[#allocation10 + $0x30] sm:$0xff]
    %v3282 = vld [vmem:[#allocation10 + $0x38] sm:$0xff]
    %v3283 = vld [vmem:[#allocation10 + $0x40] sm:$0xff]
    %v3284 = vld [vmem:[#allocation10 + $0x48] sm:$0xff]
    %v3285 = vld [vmem:[#allocation10 + $0x50] sm:$0xff]
    %v3286 = vld [vmem:[#allocation10 + $0x58] sm:$0xff]
    %v3287 = vld [vmem:[#allocation10 + $0x60] sm:$0xff]
    %v3288 = vld [vmem:[#allocation10 + $0x68] sm:$0xff]
    %v3289 = vld [vmem:[#allocation10 + $0x70] sm:$0xff]
    %v3290 = vld [vmem:[#allocation10 + $0x78] sm:$0xff]
    %v3291 = vld [vmem:[#allocation11] sm:$0x1]
    %v3293 = vlaneseq
    %v3294 = vshrl.u32 %v3293, 7
    %v3295 = vsub.s32 0, %v3294
    %v3296 = vrot.slane %v3291, %v3295
    %3298 = vmatprep.subr.mxu0 0.0
    %3299 = vmatpush1.msra.mxu0 %v3275
    %3300 = vmatprep.subr.mxu0 0.0
    %3301 = vmatpush1.msra.mxu0 %v3276
    %3302 = vmatprep.subr.mxu0 0.0
    %3303 = vmatpush1.msra.mxu0 %v3277
    %3304 = vmatprep.subr.mxu0 0.0
    %3305 = vmatpush1.msra.mxu0 %v3278
    %3306 = vmatprep.subr.mxu0 0.0
    %3307 = vmatpush1.msra.mxu0 %v3279
    %3308 = vmatprep.subr.mxu0 0.0
    %3309 = vmatpush1.msra.mxu0 %v3280
    %3310 = vmatprep.subr.mxu0 0.0
    %3311 = vmatpush1.msra.mxu0 %v3281
    %3312 = vmatprep.subr.mxu0 0.0
    %3313 = vmatpush1.msra.mxu0 %v3282
    %3314 = vmatprep.subr.mxu0 0.0
    %3315 = vmatpush1.msra.mxu0 %v3283
    %3316 = vmatprep.subr.mxu0 0.0
    %3317 = vmatpush1.msra.mxu0 %v3284
    %3318 = vmatprep.subr.mxu0 0.0
    %3319 = vmatpush1.msra.mxu0 %v3285
    %3320 = vmatprep.subr.mxu0 0.0
    %3321 = vmatpush1.msra.mxu0 %v3286
    %3322 = vmatprep.subr.mxu0 0.0
    %3323 = vmatpush1.msra.mxu0 %v3287
    %3324 = vmatprep.subr.mxu0 0.0
    %3325 = vmatpush1.msra.mxu0 %v3288
    %3326 = vmatprep.subr.mxu0 0.0
    %3327 = vmatpush1.msra.mxu0 %v3289
    %3328 = vmatprep.subr.mxu0 0.0
    %3329 = vmatpush1.msra.mxu0 %v3290
    %3330 = vmatprep.subr.mxu0 0.0
    %3331 = vmatpush1.msra.mxu0 0.0
    %3332 = vmatprep.subr.mxu0 0.0
    %3333 = vmatpush1.msra.mxu0 0.0
    %3334 = vmatprep.subr.mxu0 0.0
    %3335 = vmatpush1.msra.mxu0 0.0
    %3336 = vmatprep.subr.mxu0 0.0
    %3337 = vmatpush1.msra.mxu0 0.0
    %3338 = vmatprep.subr.mxu0 0.0
    %3339 = vmatpush1.msra.mxu0 0.0
    %3340 = vmatprep.subr.mxu0 0.0
    %3341 = vmatpush1.msra.mxu0 0.0
    %3342 = vmatprep.subr.mxu0 0.0
    %3343 = vmatpush1.msra.mxu0 0.0
    %3344 = vmatprep.subr.mxu0 0.0
    %3345 = vmatpush1.msra.mxu0 0.0
    %3346 = vmatprep.subr.mxu0 0.0
    %3347 = vmatpush1.msra.mxu0 0.0
    %3348 = vmatprep.subr.mxu0 0.0
    %3349 = vmatpush1.msra.mxu0 0.0
    %3350 = vmatprep.subr.mxu0 0.0
    %3351 = vmatpush1.msra.mxu0 0.0
    %3352 = vmatprep.subr.mxu0 0.0
    %3353 = vmatpush1.msra.mxu0 0.0
    %3354 = vmatprep.subr.mxu0 0.0
    %3355 = vmatpush1.msra.mxu0 0.0
    %3356 = vmatprep.subr.mxu0 0.0
    %3357 = vmatpush1.msra.mxu0 0.0
    %3358 = vmatprep.subr.mxu0 0.0
    %3359 = vmatpush1.msra.mxu0 0.0
    %3360 = vmatprep.subr.mxu0 0.0
    %3361 = vmatpush1.msra.mxu0 0.0
    %3362 = vmatprep.mubr.f32.mxu0 0.0
    %3363 = vmatmul.mubr.f32.gmra.mrb[0].mxu0 %v3197
    %v3364 = vpop.f32.mrb[0].mxu0
    %v3365 = vadd.f32 %v3296, %v3364
    %v3366 = vpop.f32.mrb[0].mxu0
    %3367 = vmatprep.mubr.f32.mxu0 0.0
    %3368 = vmatmul.mubr.f32.gmra.mrb[0].mxu0 %v3202
    %v3369 = vpop.f32.mrb[0].mxu0
    %v3370 = vadd.f32 %v3296, %v3369
    %v3371 = vpop.f32.mrb[0].mxu0
    %3372 = vmatprep.mubr.f32.mxu0 0.0
    %3373 = vmatmul.mubr.f32.gmra.mrb[0].mxu0 %v3207
    %v3374 = vpop.f32.mrb[0].mxu0
    %v3375 = vadd.f32 %v3296, %v3374
    %v3376 = vpop.f32.mrb[0].mxu0
    %3377 = vmatprep.mubr.f32.mxu0 0.0
    %3378 = vmatmul.mubr.f32.gmra.mrb[0].mxu0 %v3212
    %v3379 = vpop.f32.mrb[0].mxu0
    %v3380 = vadd.f32 %v3296, %v3379
    %v3381 = vpop.f32.mrb[0].mxu0
    %3382 = vmatprep.mubr.f32.mxu0 0.0
    %3383 = vmatmul.mubr.f32.gmra.mrb[0].mxu0 %v3217
    %v3384 = vpop.f32.mrb[0].mxu0
    %v3385 = vadd.f32 %v3296, %v3384
    %v3386 = vpop.f32.mrb[0].mxu0
    %3387 = vmatprep.mubr.f32.mxu0 0.0
    %3388 = vmatmul.mubr.f32.gmra.mrb[0].mxu0 %v3222
    %v3389 = vpop.f32.mrb[0].mxu0
    %v3390 = vadd.f32 %v3296, %v3389
    %v3391 = vpop.f32.mrb[0].mxu0
    %3392 = vmatprep.mubr.f32.mxu0 0.0
    %3393 = vmatmul.mubr.f32.gmra.mrb[0].mxu0 %v3227
    %v3394 = vpop.f32.mrb[0].mxu0
    %v3395 = vadd.f32 %v3296, %v3394
    %v3396 = vpop.f32.mrb[0].mxu0
    %3397 = vmatprep.mubr.f32.mxu0 0.0
    %3398 = vmatmul.mubr.f32.gmra.mrb[0].mxu0 %v3232
    %v3399 = vpop.f32.mrb[0].mxu0
    %v3400 = vadd.f32 %v3296, %v3399
    %v3401 = vpop.f32.mrb[0].mxu0
    %3402 = vmatprep.mubr.f32.mxu0 0.0
    %3403 = vmatmul.mubr.f32.gmra.mrb[0].mxu0 %v3237
    %v3404 = vpop.f32.mrb[0].mxu0
    %v3405 = vadd.f32 %v3296, %v3404
    %v3406 = vpop.f32.mrb[0].mxu0
    %3407 = vmatprep.mubr.f32.mxu0 0.0
    %3408 = vmatmul.mubr.f32.gmra.mrb[0].mxu0 %v3242
    %v3409 = vpop.f32.mrb[0].mxu0
    %v3410 = vadd.f32 %v3296, %v3409
    %v3411 = vpop.f32.mrb[0].mxu0
    %3412 = vmatprep.mubr.f32.mxu0 0.0
    %3413 = vmatmul.mubr.f32.gmra.mrb[0].mxu0 %v3247
    %v3414 = vpop.f32.mrb[0].mxu0
    %v3415 = vadd.f32 %v3296, %v3414
    %v3416 = vpop.f32.mrb[0].mxu0
    %3417 = vmatprep.mubr.f32.mxu0 0.0
    %3418 = vmatmul.mubr.f32.gmra.mrb[0].mxu0 %v3252
    %v3419 = vpop.f32.mrb[0].mxu0
    %v3420 = vadd.f32 %v3296, %v3419
    %v3421 = vpop.f32.mrb[0].mxu0
    %3422 = vmatprep.mubr.f32.mxu0 0.0
    %3423 = vmatmul.mubr.f32.gmra.mrb[0].mxu0 %v3257
    %v3424 = vpop.f32.mrb[0].mxu0
    %v3425 = vadd.f32 %v3296, %v3424
    %v3426 = vpop.f32.mrb[0].mxu0
    %3427 = vmatprep.mubr.f32.mxu0 0.0
    %3428 = vmatmul.mubr.f32.gmra.mrb[0].mxu0 %v3262
    %v3429 = vpop.f32.mrb[0].mxu0
    %v3430 = vadd.f32 %v3296, %v3429
    %v3431 = vpop.f32.mrb[0].mxu0
    %3432 = vmatprep.mubr.f32.mxu0 0.0
    %3433 = vmatmul.mubr.f32.gmra.mrb[0].mxu0 %v3267
    %v3434 = vpop.f32.mrb[0].mxu0
    %v3435 = vadd.f32 %v3296, %v3434
    %v3436 = vpop.f32.mrb[0].mxu0
    %3437 = vmatprep.mubr.f32.mxu0 0.0
    %3438 = vmatmul.mubr.f32.gmra.mrb[0].mxu0 %v3272
    %v3439 = vpop.f32.mrb[0].mxu0
    %v3440 = vadd.f32 %v3296, %v3439
    %v3441 = vpop.f32.mrb[0].mxu0
    %3442 = vdwg.mxu0
    %3443 = vst [vmem:[#allocation13] sm:$0xff] %v3365
    %3444 = vst [vmem:[#allocation13 + $0x8] sm:$0xff] %v3370
    %3445 = vst [vmem:[#allocation13 + $0x10] sm:$0xff] %v3375
    %3446 = vst [vmem:[#allocation13 + $0x18] sm:$0xff] %v3380
    %3447 = vst [vmem:[#allocation13 + $0x20] sm:$0xff] %v3385
    %3448 = vst [vmem:[#allocation13 + $0x28] sm:$0xff] %v3390
    %3449 = vst [vmem:[#allocation13 + $0x30] sm:$0xff] %v3395
    %3450 = vst [vmem:[#allocation13 + $0x38] sm:$0xff] %v3400
    %3451 = vst [vmem:[#allocation13 + $0x40] sm:$0xff] %v3405
    %3452 = vst [vmem:[#allocation13 + $0x48] sm:$0xff] %v3410
    %3453 = vst [vmem:[#allocation13 + $0x50] sm:$0xff] %v3415
    %3454 = vst [vmem:[#allocation13 + $0x58] sm:$0xff] %v3420
    %3455 = vst [vmem:[#allocation13 + $0x60] sm:$0xff] %v3425
    %3456 = vst [vmem:[#allocation13 + $0x68] sm:$0xff] %v3430
    %3457 = vst [vmem:[#allocation13 + $0x70] sm:$0xff] %v3435
    %3458 = vst [vmem:[#allocation13 + $0x78] sm:$0xff] %v3440
    // Predicated region
    $region50: #{tpu_custom_call.1} parent=1 // pred_check
      _
    $region51: #{tpu_custom_call.1} parent=1 // pred_check_branch
      %3460 = sbr.rel (0) target = $region53
    $region52: #{tpu_custom_call.1} parent=1 // pred_region
      %s3462 = ssub.s32 2048, 2048
      %3463 = vsyncadd [#allocation4], %s3462
      %s3464 = sshll.u32 [#allocation13], 4
      %s3465 = int_to_ptr.vmem [resolvable:$true] %s3464
      %3470 = dma.vmem_to_hbm [thread:$0]  %s3465, 2048, %s6, [#allocation4], 128, 128, 8
    $region53: #{tpu_custom_call.1} parent=1 // pred_fallthru
      _
    // Predicated region
    $region54: #{tpu_custom_call.1} parent=1 // pred_check
      _
    $region55: #{tpu_custom_call.1} parent=1 // pred_check_branch
      %3472 = sbr.rel (0) target = $region57
    $region56: #{tpu_custom_call.1} parent=1 // pred_region
      %3473 = dma.done [#allocation4], 2048
    $region57: #{tpu_custom_call.1} parent=1 // pred_fallthru
      _
    %3474 = vsyncpa [#allocation3], 1
    %3475 = vsyncpa [#allocation6], 1
    %3476 = vsyncpa [#allocation9], 1
    %3477 = vsyncpa [#allocation12], 1
    %3478 = vsyncpa [#allocation4], 1

</llo_original>
